<compile_context>
chip_gen: v5e
topology: v5e:2x2
jax: 0.10.0
libtpu: 0.0.40
codegen_flags: <defaults>
</compile_context>

<pallas_src>
import functools
import math

import numpy as np
import jax
import jax.numpy as jnp
from jax import lax
from jax.experimental import pallas as pl
from jax.experimental.pallas import tpu as pltpu


# ----------------------------- Pallas kernel --------------------------------

def _tokenizer_kernel(embc_ref, feats_ref, embs_ref,
                      wih0_ref, wih1_ref, wih2_ref,
                      whh0_ref, whh1_ref, whh2_ref,
                      b0_ref, b1_ref, b2_ref,
                      wc_ref, bc_ref, wh_ref, bh_ref,
                      out_ref, y_ref, *, batch):
    """Fused Tokenizer forward.

    embc_ref: (T*B, E)   char embeddings, time-major rows (row = t*B + b)
    feats_ref:(B, T*F)   per-char features, batch-major (relayout in-kernel)
    embs_ref: (T*B, E)   syllable embeddings, time-major rows
    wihL:     (DinL, 256) bf16 fused input weights; gate-major columns, each gate
                          split into blocks [char_f | syb_f | char_b | syb_b]
    whhL:     (64, 256)  bf16 block-diagonal fused recurrent weights
    bL:       (1, 256)   f32 fused bias (b_ih + b_hh)
    wc:       (576, 192) bf16 fused conv weights (k=9 im2col rows; columns are
                          [k3 | k5 | k9] blocks of [char(32)|syb(32)] outputs)
    bc:       (1, 192)   f32 conv bias (nonzero only on the k=3 block)
    wh:       (64, 2)    bf16 tok/sent classifier weights
    bh:       (1, 2)     f32 [tok_b, sent_b]
    out_ref:  (T*B, 3)   logsigmoid predictions, time-major rows
    y_ref:    (T*B, 64)  VMEM scratch, inter-layer biLSTM output
                          (cols [char_f | syb_f | char_b | syb_b])
    """
    TB = embc_ref.shape[0]
    B = batch
    T = TB // B
    SH = y_ref.shape[1]            # fused state width (2 streams x 2 dirs x Hd = 64)
    G = 4 * SH                     # fused gate width (256)
    half = SH // 2
    F = feats_ref.shape[1] // T

    # Lane mask over the fused gate width: within each gate, the first SH/2
    # columns belong to the forward blocks (char_f, syb_f).  Hoisted once.
    lane = lax.broadcasted_iota(jnp.int32, (B, G), 1)
    is_fwd = (lane % SH) < half

    # ---- in-kernel relayout of feats to time-major rows + layer-0 input ----
    fv = feats_ref[...]                                             # (B, T*F)
    featst = jnp.concatenate(
        [fv[:, t * F:(t + 1) * F] for t in range(T)], axis=0)       # (T*B, F)
    x0 = jnp.concatenate([embc_ref[...], featst, embs_ref[...]], axis=1)  # (T*B, 2E+F)

    def run_layer(x2d, wih_ref, whh_ref, b_ref):
        # Hoisted input projection (+ folded bias) for ALL timesteps: one matmul.
        xp = jnp.dot(x2d.astype(jnp.bfloat16), wih_ref[...],
                     preferred_element_type=jnp.float32) + b_ref[...]   # (TB, G)
        whh = whh_ref[...]
        h = jnp.zeros((B, SH), jnp.float32)     # [char_f | syb_f | char_b | syb_b]
        c = jnp.zeros((B, SH), jnp.float32)
        for t in range(T):                      # fully unrolled (T static)
            gf = xp[t * B:(t + 1) * B]            # x-projection at time t       (fwd)
            gb = xp[(T - 1 - t) * B:(T - t) * B]  # x-projection at time T-1-t   (bwd)
            gates = jnp.where(is_fwd, gf, gb) + jnp.dot(
                h.astype(jnp.bfloat16), whh, preferred_element_type=jnp.float32)
            sig = 0.5 * jnp.tanh(0.5 * gates) + 0.5   # full-width tanh-form sigmoid
            th = jnp.tanh(gates)
            i = sig[:, 0:SH]
            f = sig[:, SH:2 * SH]
            g = th[:, 2 * SH:3 * SH]
            o = sig[:, 3 * SH:4 * SH]
            c = f * c + i * g
            h = o * jnp.tanh(c)
            # Direct time-aligned stores: fwd halves belong to position t, bwd
            # halves (computed at step t) belong to position T-1-t.
            y_ref[t * B:(t + 1) * B, 0:half] = h[:, 0:half]
            y_ref[(T - 1 - t) * B:(T - t) * B, half:SH] = h[:, half:SH]

    run_layer(x0, wih0_ref, whh0_ref, b0_ref)
    run_layer(y_ref[...], wih1_ref, whh1_ref, b1_ref)   # read before overwrite
    run_layer(y_ref[...], wih2_ref, whh2_ref, b2_ref)

    # ---- fused conv_res(3,5,9) + max (both streams) + heads + logsigmoid ----
    y = y_ref[...]                                                   # (TB, 64)
    zpad = jnp.zeros((4 * B, SH), jnp.float32)
    ypad = jnp.concatenate([zpad, y, zpad], axis=0)                  # time pad of 4
    win = jnp.concatenate(
        [ypad[j * B:j * B + TB] for j in range(9)], axis=1)          # (TB, 9*SH)
    co = jnp.dot(win.astype(jnp.bfloat16), wc_ref[...],
                 preferred_element_type=jnp.float32) + bc_ref[...]   # (TB, 3*SH)
    conv_out = jnp.maximum(jnp.maximum(co[:, 0:SH], co[:, SH:2 * SH]),
                           co[:, 2 * SH:3 * SH])                     # (TB, SH)
    z = jnp.dot(conv_out.astype(jnp.bfloat16), wh_ref[...],
                preferred_element_type=jnp.float32) + bh_ref[...]    # (TB, 2)
    tok0 = z[:, 0:1]
    sent0 = z[:, 1:2]

    def logsig(v):  # numerically stable log(sigmoid(v))
        return jnp.minimum(v, 0.0) - jnp.log1p(jnp.exp(-jnp.abs(v)))

    out_ref[...] = jnp.concatenate(
        [logsig(-tok0), logsig(tok0) + logsig(-sent0), logsig(tok0) + logsig(sent0)],
        axis=1)


# ----------------------------- JAX wrapper -----------------------------------

_VMEM = pl.BlockSpec(memory_space=pltpu.MemorySpace.VMEM)


def tokenizer_fused_call(params, embc, feats2d, embs, batch):
    TB = embc.shape[0]
    SH = params['whh0'].shape[0]
    args = (embc, feats2d, embs,
            params['wih0'], params['wih1'], params['wih2'],
            params['whh0'], params['whh1'], params['whh2'],
            params['b0'], params['b1'], params['b2'],
            params['wc'], params['bc'], params['wh'], params['bh'])
    return pl.pallas_call(
        functools.partial(_tokenizer_kernel, batch=batch),
        out_shape=jax.ShapeDtypeStruct((TB, 3), jnp.float32),
        in_specs=[_VMEM] * len(args),
        out_specs=_VMEM,
        scratch_shapes=[pltpu.VMEM((TB, SH), jnp.float32)],
    )(*args)


def tokenizer_forward(params, x, x2, feats):
    B, T = x.shape
    F = feats.shape[2]
    # Embedding gathers emit time-major (T*B, E) rows directly (indices
    # transposed), so no separate relayout fusion is needed.  Dropout = identity.
    embc = jnp.take(params['emb1'], x.T.reshape(-1), axis=0)        # (T*B, E)
    embs = jnp.take(params['emb2'], x2.T.reshape(-1), axis=0)       # (T*B, E)
    feats2d = feats.reshape(B, T * F)                               # free reshape
    pred2d = tokenizer_fused_call(params, embc, feats2d, embs, B)   # (T*B, 3)
    return jnp.transpose(pred2d.reshape(T, B, 3), (1, 0, 2))        # (B, T, 3)
    # TODO(synk): hierarchical / use_mwt / hier_conv_res branches omitted
    # (config sets all of them False).


# ----------------------------- Parameter setup --------------------------------

def init_params(key, nchars, nchars2, emb_dim, feat_dim, hidden_dim):
    Hd = hidden_dim // 2          # per-direction LSTM hidden size (16)
    SH = 4 * Hd                   # fused state width: [char_f, syb_f, char_b, syb_b]
    G = 4 * SH                    # fused gate width (4 gates x SH)
    D0 = 2 * emb_dim + feat_dim   # fused layer-0 input width (emb|feats|emb2)
    keys = iter(jax.random.split(key, 128))
    p = {}

    def U(shape, scale):
        return np.array(jax.random.uniform(next(keys), shape, jnp.float32, -scale, scale))

    # Embeddings (padding_idx=0 -> zero row)
    emb1 = np.array(jax.random.normal(next(keys), (nchars, emb_dim), jnp.float32))
    emb1[0] = 0.0
    emb2 = np.array(jax.random.normal(next(keys), (nchars2, emb_dim), jnp.float32))
    emb2[0] = 0.0
    p['emb1'] = jnp.asarray(emb1)
    p['emb2'] = jnp.asarray(emb2)

    sL = 1.0 / math.sqrt(Hd)

    def lstm_dir(din):            # torch layout: w_ih (4H,din), w_hh (4H,H), b_ih, b_hh
        return (U((4 * Hd, din), sL), U((4 * Hd, Hd), sL),
                U((4 * Hd,), sL), U((4 * Hd,), sL))

    # 3 fused layers; block order per gate: 0=char_f, 1=syb_f, 2=char_b, 3=syb_b
    for l in range(3):
        din_f = D0 if l == 0 else SH
        wih = np.zeros((din_f, G), np.float32)
        whh = np.zeros((SH, G), np.float32)
        b = np.zeros((G,), np.float32)
        for blk in range(4):
            stream = blk % 2                      # 0=char, 1=syllable
            if l == 0:
                din = (emb_dim + feat_dim) if stream == 0 else emb_dim
            else:
                din = 2 * Hd
            w_ih, w_hh, b_ih, b_hh = lstm_dir(din)
            wiT, whT, bb = w_ih.T, w_hh.T, b_ih + b_hh
            # (fused input rows, torch input cols) for this block
            if l == 0:
                if stream == 0:     # char: [emb | feats] rows 0 : emb+feat
                    row_src = [(slice(0, emb_dim + feat_dim), slice(0, emb_dim + feat_dim))]
                else:               # syllable: emb2 rows emb+feat : D0
                    row_src = [(slice(emb_dim + feat_dim, D0), slice(0, emb_dim))]
            else:                   # prev-layer output layout [cf | sf | cb | sb]
                if stream == 0:
                    row_src = [(slice(0, Hd), slice(0, Hd)),
                               (slice(2 * Hd, 3 * Hd), slice(Hd, 2 * Hd))]
                else:
                    row_src = [(slice(Hd, 2 * Hd), slice(0, Hd)),
                               (slice(3 * Hd, 4 * Hd), slice(Hd, 2 * Hd))]
            for gi in range(4):                   # torch gate order i, f, g, o
                col = slice(gi * SH + blk * Hd, gi * SH + (blk + 1) * Hd)
                for fr, sr in row_src:
                    wih[fr, col] = wiT[sr, gi * Hd:(gi + 1) * Hd]
                whh[blk * Hd:(blk + 1) * Hd, col] = whT[:, gi * Hd:(gi + 1) * Hd]
                b[col] = bb[gi * Hd:(gi + 1) * Hd]
        p[f'wih{l}'] = jnp.asarray(wih, jnp.bfloat16)
        p[f'whh{l}'] = jnp.asarray(whh, jnp.bfloat16)
        p[f'b{l}'] = jnp.asarray(b.reshape(1, G))

    # Fused conv_res(3,5,9) for both streams: one (9*SH, 3*SH) weight on the k=9
    # im2col window; k=3/5 occupy the centered tap row-blocks, rest zero.
    conv = {}
    for s in range(2):                            # 0 = conv_res (char), 1 = syllable
        ws = []
        for K in (3, 5, 9):
            sc = 1.0 / math.sqrt(hidden_dim * K)
            ws.append(U((hidden_dim, hidden_dim, K), sc))  # torch (Cout, Cin, k)
        b3 = U((hidden_dim,), 1.0 / math.sqrt(hidden_dim * 3))  # bias only on k=3
        conv[s] = (ws, b3)

    Wc = np.zeros((9 * SH, 3 * SH), np.float32)
    bc = np.zeros((3 * SH,), np.float32)
    for kb, K in enumerate((3, 5, 9)):
        pad = K // 2
        for s in range(2):
            wk = conv[s][0][kb]
            fwd0 = 0 if s == 0 else Hd            # stream's fwd rows in the SH layout
            bwd0 = 2 * Hd if s == 0 else 3 * Hd   # stream's bwd rows
            col = slice(kb * SH + s * hidden_dim, kb * SH + (s + 1) * hidden_dim)
            for tp in range(K):
                j = tp + (4 - pad)                # position within the k=9 window
                wt = wk[:, :, tp].T               # (Cin, Cout)
                Wc[j * SH + fwd0:j * SH + fwd0 + Hd, col] = wt[0:Hd]
                Wc[j * SH + bwd0:j * SH + bwd0 + Hd, col] = wt[Hd:2 * Hd]
    bc[0:hidden_dim] = conv[0][1]
    bc[hidden_dim:2 * hidden_dim] = conv[1][1]
    p['wc'] = jnp.asarray(Wc, jnp.bfloat16)
    p['bc'] = jnp.asarray(bc.reshape(1, 3 * SH))

    # tok / sent heads (input = cat([char_conv, syb_conv]) = 2*hidden_dim wide)
    sH = 1.0 / math.sqrt(2.0 * hidden_dim)
    tok_w, tok_b = U((2 * hidden_dim,), sH), U((1,), sH)
    sent_w, sent_b = U((2 * hidden_dim,), sH), U((1,), sH)
    p['wh'] = jnp.asarray(np.stack([tok_w, sent_w], axis=1), jnp.bfloat16)  # (2H, 2)
    p['bh'] = jnp.asarray(np.concatenate([tok_b, sent_b]).reshape(1, 2))
    return p


# ----------------------------- Main --------------------------------------------

if __name__ == "__main__":
    B, T = 2, 8
    nchars, nchars2 = 50, 16264
    emb_dim, hidden_dim, feat_dim = 32, 32, 4

    key = jax.random.PRNGKey(0)
    kp, kx, kx2, kf = jax.random.split(key, 4)

    params = init_params(kp, nchars, nchars2, emb_dim, feat_dim, hidden_dim)

    x = jax.random.randint(kx, (B, T), 0, nchars, dtype=jnp.int32)
    x2 = jax.random.randint(kx2, (B, T), 0, nchars2, dtype=jnp.int32)
    feats = jax.random.normal(kf, (B, T, feat_dim), jnp.float32)

    fwd = jax.jit(tokenizer_forward)
    pred = jax.block_until_ready(fwd(params, x, x2, feats))
    assert pred.shape == (B, T, 3), pred.shape
    assert bool(jnp.all(jnp.isfinite(pred)))
    print("KERNEL_OK")
</pallas_src>

<mosaic_0001>
module attributes {stable_mosaic.version = 11 : i64} {
  func.func @_tokenizer_kernel(%arg0: memref<16x32xf32, #tpu.memory_space<vmem>>, %arg1: memref<2x32xf32, #tpu.memory_space<vmem>>, %arg2: memref<16x32xf32, #tpu.memory_space<vmem>>, %arg3: memref<68x256xbf16, #tpu.memory_space<vmem>>, %arg4: memref<64x256xbf16, #tpu.memory_space<vmem>>, %arg5: memref<64x256xbf16, #tpu.memory_space<vmem>>, %arg6: memref<64x256xbf16, #tpu.memory_space<vmem>>, %arg7: memref<64x256xbf16, #tpu.memory_space<vmem>>, %arg8: memref<64x256xbf16, #tpu.memory_space<vmem>>, %arg9: memref<1x256xf32, #tpu.memory_space<vmem>>, %arg10: memref<1x256xf32, #tpu.memory_space<vmem>>, %arg11: memref<1x256xf32, #tpu.memory_space<vmem>>, %arg12: memref<576x192xbf16, #tpu.memory_space<vmem>>, %arg13: memref<1x192xf32, #tpu.memory_space<vmem>>, %arg14: memref<64x2xbf16, #tpu.memory_space<vmem>>, %arg15: memref<1x2xf32, #tpu.memory_space<vmem>>, %arg16: memref<16x3xf32, #tpu.memory_space<vmem>>, %arg17: memref<16x64xf32, #tpu.memory_space<vmem>>) attributes {dimension_semantics = [], scalar_prefetch = 0 : i64, scratch_operands = 1 : i64, tpu.core_type = #tpu.core_type<tc>} {
    %0 = tpu.iota {dimensions = array<i32: 1>} : vector<2x256xi32>
    %c64_i32 = arith.constant 64 : i32
    %c0_i32 = arith.constant 0 : i32
    %1 = arith.cmpi eq, %c64_i32, %c0_i32 : i32
    %c1_i32 = arith.constant 1 : i32
    %2 = arith.select %1, %c1_i32, %c64_i32 : i32
    %3 = vector.broadcast %2 : i32 to vector<2x256xi32>
    %4 = arith.remsi %0, %3 : vector<2x256xi32>
    %c0_i32_0 = arith.constant 0 : i32
    %5 = vector.broadcast %c0_i32_0 : i32 to vector<2x256xi32>
    %6 = arith.cmpi ne, %4, %5 : vector<2x256xi32>
    %c0_i32_1 = arith.constant 0 : i32
    %7 = vector.broadcast %c0_i32_1 : i32 to vector<2x256xi32>
    %8 = arith.cmpi slt, %4, %7 : vector<2x256xi32>
    %c0_i32_2 = arith.constant 0 : i32
    %9 = arith.cmpi slt, %2, %c0_i32_2 : i32
    %10 = vector.broadcast %9 : i1 to vector<2x256xi1>
    %11 = vector.broadcast %10 : vector<2x256xi1> to vector<2x256xi1>
    %12 = arith.xori %8, %11 : vector<2x256xi1>
    %13 = arith.andi %12, %6 : vector<2x256xi1>
    %14 = vector.broadcast %2 : i32 to vector<2x256xi32>
    %15 = arith.addi %4, %14 : vector<2x256xi32>
    %16 = arith.select %13, %15, %4 : vector<2x256xi1>, vector<2x256xi32>
    %c32_i32 = arith.constant 32 : i32
    %17 = vector.broadcast %c32_i32 : i32 to vector<2x256xi32>
    %18 = arith.cmpi slt, %16, %17 : vector<2x256xi32>
    %c0 = arith.constant 0 : index
    %c0_3 = arith.constant 0 : index
    %19 = vector.load %arg1[%c0, %c0_3] : memref<2x32xf32, #tpu.memory_space<vmem>>, vector<2x32xf32>
    %20 = vector.extract_strided_slice %19 {offsets = [0, 0], sizes = [2, 4], strides = [1, 1]} : vector<2x32xf32> to vector<2x4xf32>
    %21 = vector.extract_strided_slice %19 {offsets = [0, 4], sizes = [2, 4], strides = [1, 1]} : vector<2x32xf32> to vector<2x4xf32>
    %22 = vector.extract_strided_slice %19 {offsets = [0, 8], sizes = [2, 4], strides = [1, 1]} : vector<2x32xf32> to vector<2x4xf32>
    %23 = vector.extract_strided_slice %19 {offsets = [0, 12], sizes = [2, 4], strides = [1, 1]} : vector<2x32xf32> to vector<2x4xf32>
    %24 = vector.extract_strided_slice %19 {offsets = [0, 16], sizes = [2, 4], strides = [1, 1]} : vector<2x32xf32> to vector<2x4xf32>
    %25 = vector.extract_strided_slice %19 {offsets = [0, 20], sizes = [2, 4], strides = [1, 1]} : vector<2x32xf32> to vector<2x4xf32>
    %26 = vector.extract_strided_slice %19 {offsets = [0, 24], sizes = [2, 4], strides = [1, 1]} : vector<2x32xf32> to vector<2x4xf32>
    %27 = vector.extract_strided_slice %19 {offsets = [0, 28], sizes = [2, 4], strides = [1, 1]} : vector<2x32xf32> to vector<2x4xf32>
    %28 = tpu.concatenate %20, %21, %22, %23, %24, %25, %26, %27 in 0 : vector<2x4xf32>, vector<2x4xf32>, vector<2x4xf32>, vector<2x4xf32>, vector<2x4xf32>, vector<2x4xf32>, vector<2x4xf32>, vector<2x4xf32> -> vector<16x4xf32>
    %c0_4 = arith.constant 0 : index
    %c0_5 = arith.constant 0 : index
    %29 = vector.load %arg0[%c0_4, %c0_5] : memref<16x32xf32, #tpu.memory_space<vmem>>, vector<16x32xf32>
    %c0_6 = arith.constant 0 : index
    %c0_7 = arith.constant 0 : index
    %30 = vector.load %arg2[%c0_6, %c0_7] : memref<16x32xf32, #tpu.memory_space<vmem>>, vector<16x32xf32>
    %31 = tpu.concatenate %29, %28, %30 in 1 : vector<16x32xf32>, vector<16x4xf32>, vector<16x32xf32> -> vector<16x68xf32>
    %32 = arith.truncf %31 : vector<16x68xf32> to vector<16x68xbf16>
    %c0_8 = arith.constant 0 : index
    %c0_9 = arith.constant 0 : index
    %33 = vector.load %arg3[%c0_8, %c0_9] : memref<68x256xbf16, #tpu.memory_space<vmem>>, vector<68x256xbf16>
    %cst = arith.constant dense<0.000000e+00> : vector<16x256xf32>
    %34 = tpu.matmul %32, %33, %cst {dimension_numbers = #tpu.dot_dimension_numbers<[1], [0], [0], [1], [0, 0, 1, 1], [], []>} : vector<16x68xbf16>, vector<68x256xbf16>, vector<16x256xf32> -> vector<16x256xf32>
    %c0_10 = arith.constant 0 : index
    %c0_11 = arith.constant 0 : index
    %35 = vector.load %arg9[%c0_10, %c0_11] : memref<1x256xf32, #tpu.memory_space<vmem>>, vector<1x256xf32>
    %36 = vector.broadcast %35 : vector<1x256xf32> to vector<16x256xf32>
    %37 = arith.addf %34, %36 : vector<16x256xf32>
    %c0_12 = arith.constant 0 : index
    %c0_13 = arith.constant 0 : index
    %38 = vector.load %arg6[%c0_12, %c0_13] : memref<64x256xbf16, #tpu.memory_space<vmem>>, vector<64x256xbf16>
    %cst_14 = arith.constant 0.000000e+00 : f32
    %39 = vector.broadcast %cst_14 : f32 to vector<2x64xf32>
    %cst_15 = arith.constant 0.000000e+00 : f32
    %40 = vector.broadcast %cst_15 : f32 to vector<2x64xf32>
    %41 = vector.extract_strided_slice %37 {offsets = [0, 0], sizes = [2, 256], strides = [1, 1]} : vector<16x256xf32> to vector<2x256xf32>
    %42 = vector.extract_strided_slice %37 {offsets = [14, 0], sizes = [2, 256], strides = [1, 1]} : vector<16x256xf32> to vector<2x256xf32>
    %43 = arith.select %18, %41, %42 : vector<2x256xi1>, vector<2x256xf32>
    %44 = arith.truncf %39 : vector<2x64xf32> to vector<2x64xbf16>
    %cst_16 = arith.constant dense<0.000000e+00> : vector<2x256xf32>
    %45 = tpu.matmul %44, %38, %cst_16 {dimension_numbers = #tpu.dot_dimension_numbers<[1], [0], [0], [1], [0, 0, 1, 1], [], []>} : vector<2x64xbf16>, vector<64x256xbf16>, vector<2x256xf32> -> vector<2x256xf32>
    %46 = arith.addf %43, %45 : vector<2x256xf32>
    %cst_17 = arith.constant 5.000000e-01 : f32
    %47 = vector.broadcast %cst_17 : f32 to vector<2x256xf32>
    %48 = arith.mulf %47, %46 : vector<2x256xf32>
    %49 = math.tanh %48 : vector<2x256xf32>
    %cst_18 = arith.constant 5.000000e-01 : f32
    %50 = vector.broadcast %cst_18 : f32 to vector<2x256xf32>
    %51 = arith.mulf %50, %49 : vector<2x256xf32>
    %cst_19 = arith.constant 5.000000e-01 : f32
    %52 = vector.broadcast %cst_19 : f32 to vector<2x256xf32>
    %53 = arith.addf %51, %52 : vector<2x256xf32>
    %54 = math.tanh %46 : vector<2x256xf32>
    %55 = vector.extract_strided_slice %53 {offsets = [0, 0], sizes = [2, 64], strides = [1, 1]} : vector<2x256xf32> to vector<2x64xf32>
    %56 = vector.extract_strided_slice %53 {offsets = [0, 64], sizes = [2, 64], strides = [1, 1]} : vector<2x256xf32> to vector<2x64xf32>
    %57 = vector.extract_strided_slice %54 {offsets = [0, 128], sizes = [2, 64], strides = [1, 1]} : vector<2x256xf32> to vector<2x64xf32>
    %58 = vector.extract_strided_slice %53 {offsets = [0, 192], sizes = [2, 64], strides = [1, 1]} : vector<2x256xf32> to vector<2x64xf32>
    %59 = arith.mulf %56, %40 : vector<2x64xf32>
    %60 = arith.mulf %55, %57 : vector<2x64xf32>
    %61 = arith.addf %59, %60 : vector<2x64xf32>
    %62 = math.tanh %61 : vector<2x64xf32>
    %63 = arith.mulf %58, %62 : vector<2x64xf32>
    %64 = vector.extract_strided_slice %63 {offsets = [0, 0], sizes = [2, 32], strides = [1, 1]} : vector<2x64xf32> to vector<2x32xf32>
    %c0_20 = arith.constant 0 : index
    %c0_21 = arith.constant 0 : index
    %65 = vector.load %arg17[%c0_20, %c0_21] : memref<16x64xf32, #tpu.memory_space<vmem>>, vector<2x32xf32>
    tpu.vector_store %arg17[%c0_20, %c0_21], %64 {strides = array<i32>} : memref<16x64xf32, #tpu.memory_space<vmem>>, vector<2x32xf32>,
    %66 = vector.extract_strided_slice %63 {offsets = [0, 32], sizes = [2, 32], strides = [1, 1]} : vector<2x64xf32> to vector<2x32xf32>
    %c14 = arith.constant 14 : index
    %c32 = arith.constant 32 : index
    %67 = vector.load %arg17[%c14, %c32] : memref<16x64xf32, #tpu.memory_space<vmem>>, vector<2x32xf32>
    tpu.vector_store %arg17[%c14, %c32], %66 {strides = array<i32>} : memref<16x64xf32, #tpu.memory_space<vmem>>, vector<2x32xf32>,
    %68 = vector.extract_strided_slice %37 {offsets = [2, 0], sizes = [2, 256], strides = [1, 1]} : vector<16x256xf32> to vector<2x256xf32>
    %69 = vector.extract_strided_slice %37 {offsets = [12, 0], sizes = [2, 256], strides = [1, 1]} : vector<16x256xf32> to vector<2x256xf32>
    %70 = arith.select %18, %68, %69 : vector<2x256xi1>, vector<2x256xf32>
    %71 = arith.truncf %63 : vector<2x64xf32> to vector<2x64xbf16>
    %cst_22 = arith.constant dense<0.000000e+00> : vector<2x256xf32>
    %72 = tpu.matmul %71, %38, %cst_22 {dimension_numbers = #tpu.dot_dimension_numbers<[1], [0], [0], [1], [0, 0, 1, 1], [], []>} : vector<2x64xbf16>, vector<64x256xbf16>, vector<2x256xf32> -> vector<2x256xf32>
    %73 = arith.addf %70, %72 : vector<2x256xf32>
    %cst_23 = arith.constant 5.000000e-01 : f32
    %74 = vector.broadcast %cst_23 : f32 to vector<2x256xf32>
    %75 = arith.mulf %74, %73 : vector<2x256xf32>
    %76 = math.tanh %75 : vector<2x256xf32>
    %cst_24 = arith.constant 5.000000e-01 : f32
    %77 = vector.broadcast %cst_24 : f32 to vector<2x256xf32>
    %78 = arith.mulf %77, %76 : vector<2x256xf32>
    %cst_25 = arith.constant 5.000000e-01 : f32
    %79 = vector.broadcast %cst_25 : f32 to vector<2x256xf32>
    %80 = arith.addf %78, %79 : vector<2x256xf32>
    %81 = math.tanh %73 : vector<2x256xf32>
    %82 = vector.extract_strided_slice %80 {offsets = [0, 0], sizes = [2, 64], strides = [1, 1]} : vector<2x256xf32> to vector<2x64xf32>
    %83 = vector.extract_strided_slice %80 {offsets = [0, 64], sizes = [2, 64], strides = [1, 1]} : vector<2x256xf32> to vector<2x64xf32>
    %84 = vector.extract_strided_slice %81 {offsets = [0, 128], sizes = [2, 64], strides = [1, 1]} : vector<2x256xf32> to vector<2x64xf32>
    %85 = vector.extract_strided_slice %80 {offsets = [0, 192], sizes = [2, 64], strides = [1, 1]} : vector<2x256xf32> to vector<2x64xf32>
    %86 = arith.mulf %83, %61 : vector<2x64xf32>
    %87 = arith.mulf %82, %84 : vector<2x64xf32>
    %88 = arith.addf %86, %87 : vector<2x64xf32>
    %89 = math.tanh %88 : vector<2x64xf32>
    %90 = arith.mulf %85, %89 : vector<2x64xf32>
    %91 = vector.extract_strided_slice %90 {offsets = [0, 0], sizes = [2, 32], strides = [1, 1]} : vector<2x64xf32> to vector<2x32xf32>
    %c2 = arith.constant 2 : index
    %c0_26 = arith.constant 0 : index
    %92 = vector.load %arg17[%c2, %c0_26] : memref<16x64xf32, #tpu.memory_space<vmem>>, vector<2x32xf32>
    tpu.vector_store %arg17[%c2, %c0_26], %91 {strides = array<i32>} : memref<16x64xf32, #tpu.memory_space<vmem>>, vector<2x32xf32>,
    %93 = vector.extract_strided_slice %90 {offsets = [0, 32], sizes = [2, 32], strides = [1, 1]} : vector<2x64xf32> to vector<2x32xf32>
    %c12 = arith.constant 12 : index
    %c32_27 = arith.constant 32 : index
    %94 = vector.load %arg17[%c12, %c32_27] : memref<16x64xf32, #tpu.memory_space<vmem>>, vector<2x32xf32>
    tpu.vector_store %arg17[%c12, %c32_27], %93 {strides = array<i32>} : memref<16x64xf32, #tpu.memory_space<vmem>>, vector<2x32xf32>,
    %95 = vector.extract_strided_slice %37 {offsets = [4, 0], sizes = [2, 256], strides = [1, 1]} : vector<16x256xf32> to vector<2x256xf32>
    %96 = vector.extract_strided_slice %37 {offsets = [10, 0], sizes = [2, 256], strides = [1, 1]} : vector<16x256xf32> to vector<2x256xf32>
    %97 = arith.select %18, %95, %96 : vector<2x256xi1>, vector<2x256xf32>
    %98 = arith.truncf %90 : vector<2x64xf32> to vector<2x64xbf16>
    %cst_28 = arith.constant dense<0.000000e+00> : vector<2x256xf32>
    %99 = tpu.matmul %98, %38, %cst_28 {dimension_numbers = #tpu.dot_dimension_numbers<[1], [0], [0], [1], [0, 0, 1, 1], [], []>} : vector<2x64xbf16>, vector<64x256xbf16>, vector<2x256xf32> -> vector<2x256xf32>
    %100 = arith.addf %97, %99 : vector<2x256xf32>
    %cst_29 = arith.constant 5.000000e-01 : f32
    %101 = vector.broadcast %cst_29 : f32 to vector<2x256xf32>
    %102 = arith.mulf %101, %100 : vector<2x256xf32>
    %103 = math.tanh %102 : vector<2x256xf32>
    %cst_30 = arith.constant 5.000000e-01 : f32
    %104 = vector.broadcast %cst_30 : f32 to vector<2x256xf32>
    %105 = arith.mulf %104, %103 : vector<2x256xf32>
    %cst_31 = arith.constant 5.000000e-01 : f32
    %106 = vector.broadcast %cst_31 : f32 to vector<2x256xf32>
    %107 = arith.addf %105, %106 : vector<2x256xf32>
    %108 = math.tanh %100 : vector<2x256xf32>
    %109 = vector.extract_strided_slice %107 {offsets = [0, 0], sizes = [2, 64], strides = [1, 1]} : vector<2x256xf32> to vector<2x64xf32>
    %110 = vector.extract_strided_slice %107 {offsets = [0, 64], sizes = [2, 64], strides = [1, 1]} : vector<2x256xf32> to vector<2x64xf32>
    %111 = vector.extract_strided_slice %108 {offsets = [0, 128], sizes = [2, 64], strides = [1, 1]} : vector<2x256xf32> to vector<2x64xf32>
    %112 = vector.extract_strided_slice %107 {offsets = [0, 192], sizes = [2, 64], strides = [1, 1]} : vector<2x256xf32> to vector<2x64xf32>
    %113 = arith.mulf %110, %88 : vector<2x64xf32>
    %114 = arith.mulf %109, %111 : vector<2x64xf32>
    %115 = arith.addf %113, %114 : vector<2x64xf32>
    %116 = math.tanh %115 : vector<2x64xf32>
    %117 = arith.mulf %112, %116 : vector<2x64xf32>
    %118 = vector.extract_strided_slice %117 {offsets = [0, 0], sizes = [2, 32], strides = [1, 1]} : vector<2x64xf32> to vector<2x32xf32>
    %c4 = arith.constant 4 : index
    %c0_32 = arith.constant 0 : index
    %119 = vector.load %arg17[%c4, %c0_32] : memref<16x64xf32, #tpu.memory_space<vmem>>, vector<2x32xf32>
    tpu.vector_store %arg17[%c4, %c0_32], %118 {strides = array<i32>} : memref<16x64xf32, #tpu.memory_space<vmem>>, vector<2x32xf32>,
    %120 = vector.extract_strided_slice %117 {offsets = [0, 32], sizes = [2, 32], strides = [1, 1]} : vector<2x64xf32> to vector<2x32xf32>
    %c10 = arith.constant 10 : index
    %c32_33 = arith.constant 32 : index
    %121 = vector.load %arg17[%c10, %c32_33] : memref<16x64xf32, #tpu.memory_space<vmem>>, vector<2x32xf32>
    tpu.vector_store %arg17[%c10, %c32_33], %120 {strides = array<i32>} : memref<16x64xf32, #tpu.memory_space<vmem>>, vector<2x32xf32>,
    %122 = vector.extract_strided_slice %37 {offsets = [6, 0], sizes = [2, 256], strides = [1, 1]} : vector<16x256xf32> to vector<2x256xf32>
    %123 = vector.extract_strided_slice %37 {offsets = [8, 0], sizes = [2, 256], strides = [1, 1]} : vector<16x256xf32> to vector<2x256xf32>
    %124 = arith.select %18, %122, %123 : vector<2x256xi1>, vector<2x256xf32>
    %125 = arith.truncf %117 : vector<2x64xf32> to vector<2x64xbf16>
    %cst_34 = arith.constant dense<0.000000e+00> : vector<2x256xf32>
    %126 = tpu.matmul %125, %38, %cst_34 {dimension_numbers = #tpu.dot_dimension_numbers<[1], [0], [0], [1], [0, 0, 1, 1], [], []>} : vector<2x64xbf16>, vector<64x256xbf16>, vector<2x256xf32> -> vector<2x256xf32>
    %127 = arith.addf %124, %126 : vector<2x256xf32>
    %cst_35 = arith.constant 5.000000e-01 : f32
    %128 = vector.broadcast %cst_35 : f32 to vector<2x256xf32>
    %129 = arith.mulf %128, %127 : vector<2x256xf32>
    %130 = math.tanh %129 : vector<2x256xf32>
    %cst_36 = arith.constant 5.000000e-01 : f32
    %131 = vector.broadcast %cst_36 : f32 to vector<2x256xf32>
    %132 = arith.mulf %131, %130 : vector<2x256xf32>
    %cst_37 = arith.constant 5.000000e-01 : f32
    %133 = vector.broadcast %cst_37 : f32 to vector<2x256xf32>
    %134 = arith.addf %132, %133 : vector<2x256xf32>
    %135 = math.tanh %127 : vector<2x256xf32>
    %136 = vector.extract_strided_slice %134 {offsets = [0, 0], sizes = [2, 64], strides = [1, 1]} : vector<2x256xf32> to vector<2x64xf32>
    %137 = vector.extract_strided_slice %134 {offsets = [0, 64], sizes = [2, 64], strides = [1, 1]} : vector<2x256xf32> to vector<2x64xf32>
    %138 = vector.extract_strided_slice %135 {offsets = [0, 128], sizes = [2, 64], strides = [1, 1]} : vector<2x256xf32> to vector<2x64xf32>
    %139 = vector.extract_strided_slice %134 {offsets = [0, 192], sizes = [2, 64], strides = [1, 1]} : vector<2x256xf32> to vector<2x64xf32>
    %140 = arith.mulf %137, %115 : vector<2x64xf32>
    %141 = arith.mulf %136, %138 : vector<2x64xf32>
    %142 = arith.addf %140, %141 : vector<2x64xf32>
    %143 = math.tanh %142 : vector<2x64xf32>
    %144 = arith.mulf %139, %143 : vector<2x64xf32>
    %145 = vector.extract_strided_slice %144 {offsets = [0, 0], sizes = [2, 32], strides = [1, 1]} : vector<2x64xf32> to vector<2x32xf32>
    %c6 = arith.constant 6 : index
    %c0_38 = arith.constant 0 : index
    %146 = vector.load %arg17[%c6, %c0_38] : memref<16x64xf32, #tpu.memory_space<vmem>>, vector<2x32xf32>
    tpu.vector_store %arg17[%c6, %c0_38], %145 {strides = array<i32>} : memref<16x64xf32, #tpu.memory_space<vmem>>, vector<2x32xf32>,
    %147 = vector.extract_strided_slice %144 {offsets = [0, 32], sizes = [2, 32], strides = [1, 1]} : vector<2x64xf32> to vector<2x32xf32>
    %c8 = arith.constant 8 : index
    %c32_39 = arith.constant 32 : index
    %148 = vector.load %arg17[%c8, %c32_39] : memref<16x64xf32, #tpu.memory_space<vmem>>, vector<2x32xf32>
    tpu.vector_store %arg17[%c8, %c32_39], %147 {strides = array<i32>} : memref<16x64xf32, #tpu.memory_space<vmem>>, vector<2x32xf32>,
    %149 = vector.extract_strided_slice %37 {offsets = [8, 0], sizes = [2, 256], strides = [1, 1]} : vector<16x256xf32> to vector<2x256xf32>
    %150 = vector.extract_strided_slice %37 {offsets = [6, 0], sizes = [2, 256], strides = [1, 1]} : vector<16x256xf32> to vector<2x256xf32>
    %151 = arith.select %18, %149, %150 : vector<2x256xi1>, vector<2x256xf32>
    %152 = arith.truncf %144 : vector<2x64xf32> to vector<2x64xbf16>
    %cst_40 = arith.constant dense<0.000000e+00> : vector<2x256xf32>
    %153 = tpu.matmul %152, %38, %cst_40 {dimension_numbers = #tpu.dot_dimension_numbers<[1], [0], [0], [1], [0, 0, 1, 1], [], []>} : vector<2x64xbf16>, vector<64x256xbf16>, vector<2x256xf32> -> vector<2x256xf32>
    %154 = arith.addf %151, %153 : vector<2x256xf32>
    %cst_41 = arith.constant 5.000000e-01 : f32
    %155 = vector.broadcast %cst_41 : f32 to vector<2x256xf32>
    %156 = arith.mulf %155, %154 : vector<2x256xf32>
    %157 = math.tanh %156 : vector<2x256xf32>
    %cst_42 = arith.constant 5.000000e-01 : f32
    %158 = vector.broadcast %cst_42 : f32 to vector<2x256xf32>
    %159 = arith.mulf %158, %157 : vector<2x256xf32>
    %cst_43 = arith.constant 5.000000e-01 : f32
    %160 = vector.broadcast %cst_43 : f32 to vector<2x256xf32>
    %161 = arith.addf %159, %160 : vector<2x256xf32>
    %162 = math.tanh %154 : vector<2x256xf32>
    %163 = vector.extract_strided_slice %161 {offsets = [0, 0], sizes = [2, 64], strides = [1, 1]} : vector<2x256xf32> to vector<2x64xf32>
    %164 = vector.extract_strided_slice %161 {offsets = [0, 64], sizes = [2, 64], strides = [1, 1]} : vector<2x256xf32> to vector<2x64xf32>
    %165 = vector.extract_strided_slice %162 {offsets = [0, 128], sizes = [2, 64], strides = [1, 1]} : vector<2x256xf32> to vector<2x64xf32>
    %166 = vector.extract_strided_slice %161 {offsets = [0, 192], sizes = [2, 64], strides = [1, 1]} : vector<2x256xf32> to vector<2x64xf32>
    %167 = arith.mulf %164, %142 : vector<2x64xf32>
    %168 = arith.mulf %163, %165 : vector<2x64xf32>
    %169 = arith.addf %167, %168 : vector<2x64xf32>
    %170 = math.tanh %169 : vector<2x64xf32>
    %171 = arith.mulf %166, %170 : vector<2x64xf32>
    %172 = vector.extract_strided_slice %171 {offsets = [0, 0], sizes = [2, 32], strides = [1, 1]} : vector<2x64xf32> to vector<2x32xf32>
    %c8_44 = arith.constant 8 : index
    %c0_45 = arith.constant 0 : index
    %173 = vector.load %arg17[%c8_44, %c0_45] : memref<16x64xf32, #tpu.memory_space<vmem>>, vector<2x32xf32>
    tpu.vector_store %arg17[%c8_44, %c0_45], %172 {strides = array<i32>} : memref<16x64xf32, #tpu.memory_space<vmem>>, vector<2x32xf32>,
    %174 = vector.extract_strided_slice %171 {offsets = [0, 32], sizes = [2, 32], strides = [1, 1]} : vector<2x64xf32> to vector<2x32xf32>
    %c6_46 = arith.constant 6 : index
    %c32_47 = arith.constant 32 : index
    %175 = vector.load %arg17[%c6_46, %c32_47] : memref<16x64xf32, #tpu.memory_space<vmem>>, vector<2x32xf32>
    tpu.vector_store %arg17[%c6_46, %c32_47], %174 {strides = array<i32>} : memref<16x64xf32, #tpu.memory_space<vmem>>, vector<2x32xf32>,
    %176 = vector.extract_strided_slice %37 {offsets = [10, 0], sizes = [2, 256], strides = [1, 1]} : vector<16x256xf32> to vector<2x256xf32>
    %177 = vector.extract_strided_slice %37 {offsets = [4, 0], sizes = [2, 256], strides = [1, 1]} : vector<16x256xf32> to vector<2x256xf32>
    %178 = arith.select %18, %176, %177 : vector<2x256xi1>, vector<2x256xf32>
    %179 = arith.truncf %171 : vector<2x64xf32> to vector<2x64xbf16>
    %cst_48 = arith.constant dense<0.000000e+00> : vector<2x256xf32>
    %180 = tpu.matmul %179, %38, %cst_48 {dimension_numbers = #tpu.dot_dimension_numbers<[1], [0], [0], [1], [0, 0, 1, 1], [], []>} : vector<2x64xbf16>, vector<64x256xbf16>, vector<2x256xf32> -> vector<2x256xf32>
    %181 = arith.addf %178, %180 : vector<2x256xf32>
    %cst_49 = arith.constant 5.000000e-01 : f32
    %182 = vector.broadcast %cst_49 : f32 to vector<2x256xf32>
    %183 = arith.mulf %182, %181 : vector<2x256xf32>
    %184 = math.tanh %183 : vector<2x256xf32>
    %cst_50 = arith.constant 5.000000e-01 : f32
    %185 = vector.broadcast %cst_50 : f32 to vector<2x256xf32>
    %186 = arith.mulf %185, %184 : vector<2x256xf32>
    %cst_51 = arith.constant 5.000000e-01 : f32
    %187 = vector.broadcast %cst_51 : f32 to vector<2x256xf32>
    %188 = arith.addf %186, %187 : vector<2x256xf32>
    %189 = math.tanh %181 : vector<2x256xf32>
    %190 = vector.extract_strided_slice %188 {offsets = [0, 0], sizes = [2, 64], strides = [1, 1]} : vector<2x256xf32> to vector<2x64xf32>
    %191 = vector.extract_strided_slice %188 {offsets = [0, 64], sizes = [2, 64], strides = [1, 1]} : vector<2x256xf32> to vector<2x64xf32>
    %192 = vector.extract_strided_slice %189 {offsets = [0, 128], sizes = [2, 64], strides = [1, 1]} : vector<2x256xf32> to vector<2x64xf32>
    %193 = vector.extract_strided_slice %188 {offsets = [0, 192], sizes = [2, 64], strides = [1, 1]} : vector<2x256xf32> to vector<2x64xf32>
    %194 = arith.mulf %191, %169 : vector<2x64xf32>
    %195 = arith.mulf %190, %192 : vector<2x64xf32>
    %196 = arith.addf %194, %195 : vector<2x64xf32>
    %197 = math.tanh %196 : vector<2x64xf32>
    %198 = arith.mulf %193, %197 : vector<2x64xf32>
    %199 = vector.extract_strided_slice %198 {offsets = [0, 0], sizes = [2, 32], strides = [1, 1]} : vector<2x64xf32> to vector<2x32xf32>
    %c10_52 = arith.constant 10 : index
    %c0_53 = arith.constant 0 : index
    %200 = vector.load %arg17[%c10_52, %c0_53] : memref<16x64xf32, #tpu.memory_space<vmem>>, vector<2x32xf32>
    tpu.vector_store %arg17[%c10_52, %c0_53], %199 {strides = array<i32>} : memref<16x64xf32, #tpu.memory_space<vmem>>, vector<2x32xf32>,
    %201 = vector.extract_strided_slice %198 {offsets = [0, 32], sizes = [2, 32], strides = [1, 1]} : vector<2x64xf32> to vector<2x32xf32>
    %c4_54 = arith.constant 4 : index
    %c32_55 = arith.constant 32 : index
    %202 = vector.load %arg17[%c4_54, %c32_55] : memref<16x64xf32, #tpu.memory_space<vmem>>, vector<2x32xf32>
    tpu.vector_store %arg17[%c4_54, %c32_55], %201 {strides = array<i32>} : memref<16x64xf32, #tpu.memory_space<vmem>>, vector<2x32xf32>,
    %203 = vector.extract_strided_slice %37 {offsets = [12, 0], sizes = [2, 256], strides = [1, 1]} : vector<16x256xf32> to vector<2x256xf32>
    %204 = vector.extract_strided_slice %37 {offsets = [2, 0], sizes = [2, 256], strides = [1, 1]} : vector<16x256xf32> to vector<2x256xf32>
    %205 = arith.select %18, %203, %204 : vector<2x256xi1>, vector<2x256xf32>
    %206 = arith.truncf %198 : vector<2x64xf32> to vector<2x64xbf16>
    %cst_56 = arith.constant dense<0.000000e+00> : vector<2x256xf32>
    %207 = tpu.matmul %206, %38, %cst_56 {dimension_numbers = #tpu.dot_dimension_numbers<[1], [0], [0], [1], [0, 0, 1, 1], [], []>} : vector<2x64xbf16>, vector<64x256xbf16>, vector<2x256xf32> -> vector<2x256xf32>
    %208 = arith.addf %205, %207 : vector<2x256xf32>
    %cst_57 = arith.constant 5.000000e-01 : f32
    %209 = vector.broadcast %cst_57 : f32 to vector<2x256xf32>
    %210 = arith.mulf %209, %208 : vector<2x256xf32>
    %211 = math.tanh %210 : vector<2x256xf32>
    %cst_58 = arith.constant 5.000000e-01 : f32
    %212 = vector.broadcast %cst_58 : f32 to vector<2x256xf32>
    %213 = arith.mulf %212, %211 : vector<2x256xf32>
    %cst_59 = arith.constant 5.000000e-01 : f32
    %214 = vector.broadcast %cst_59 : f32 to vector<2x256xf32>
    %215 = arith.addf %213, %214 : vector<2x256xf32>
    %216 = math.tanh %208 : vector<2x256xf32>
    %217 = vector.extract_strided_slice %215 {offsets = [0, 0], sizes = [2, 64], strides = [1, 1]} : vector<2x256xf32> to vector<2x64xf32>
    %218 = vector.extract_strided_slice %215 {offsets = [0, 64], sizes = [2, 64], strides = [1, 1]} : vector<2x256xf32> to vector<2x64xf32>
    %219 = vector.extract_strided_slice %216 {offsets = [0, 128], sizes = [2, 64], strides = [1, 1]} : vector<2x256xf32> to vector<2x64xf32>
    %220 = vector.extract_strided_slice %215 {offsets = [0, 192], sizes = [2, 64], strides = [1, 1]} : vector<2x256xf32> to vector<2x64xf32>
    %221 = arith.mulf %218, %196 : vector<2x64xf32>
    %222 = arith.mulf %217, %219 : vector<2x64xf32>
    %223 = arith.addf %221, %222 : vector<2x64xf32>
    %224 = math.tanh %223 : vector<2x64xf32>
    %225 = arith.mulf %220, %224 : vector<2x64xf32>
    %226 = vector.extract_strided_slice %225 {offsets = [0, 0], sizes = [2, 32], strides = [1, 1]} : vector<2x64xf32> to vector<2x32xf32>
    %c12_60 = arith.constant 12 : index
    %c0_61 = arith.constant 0 : index
    %227 = vector.load %arg17[%c12_60, %c0_61] : memref<16x64xf32, #tpu.memory_space<vmem>>, vector<2x32xf32>
    tpu.vector_store %arg17[%c12_60, %c0_61], %226 {strides = array<i32>} : memref<16x64xf32, #tpu.memory_space<vmem>>, vector<2x32xf32>,
    %228 = vector.extract_strided_slice %225 {offsets = [0, 32], sizes = [2, 32], strides = [1, 1]} : vector<2x64xf32> to vector<2x32xf32>
    %c2_62 = arith.constant 2 : index
    %c32_63 = arith.constant 32 : index
    %229 = vector.load %arg17[%c2_62, %c32_63] : memref<16x64xf32, #tpu.memory_space<vmem>>, vector<2x32xf32>
    tpu.vector_store %arg17[%c2_62, %c32_63], %228 {strides = array<i32>} : memref<16x64xf32, #tpu.memory_space<vmem>>, vector<2x32xf32>,
    %230 = vector.extract_strided_slice %37 {offsets = [14, 0], sizes = [2, 256], strides = [1, 1]} : vector<16x256xf32> to vector<2x256xf32>
    %231 = vector.extract_strided_slice %37 {offsets = [0, 0], sizes = [2, 256], strides = [1, 1]} : vector<16x256xf32> to vector<2x256xf32>
    %232 = arith.select %18, %230, %231 : vector<2x256xi1>, vector<2x256xf32>
    %233 = arith.truncf %225 : vector<2x64xf32> to vector<2x64xbf16>
    %cst_64 = arith.constant dense<0.000000e+00> : vector<2x256xf32>
    %234 = tpu.matmul %233, %38, %cst_64 {dimension_numbers = #tpu.dot_dimension_numbers<[1], [0], [0], [1], [0, 0, 1, 1], [], []>} : vector<2x64xbf16>, vector<64x256xbf16>, vector<2x256xf32> -> vector<2x256xf32>
    %235 = arith.addf %232, %234 : vector<2x256xf32>
    %cst_65 = arith.constant 5.000000e-01 : f32
    %236 = vector.broadcast %cst_65 : f32 to vector<2x256xf32>
    %237 = arith.mulf %236, %235 : vector<2x256xf32>
    %238 = math.tanh %237 : vector<2x256xf32>
    %cst_66 = arith.constant 5.000000e-01 : f32
    %239 = vector.broadcast %cst_66 : f32 to vector<2x256xf32>
    %240 = arith.mulf %239, %238 : vector<2x256xf32>
    %cst_67 = arith.constant 5.000000e-01 : f32
    %241 = vector.broadcast %cst_67 : f32 to vector<2x256xf32>
    %242 = arith.addf %240, %241 : vector<2x256xf32>
    %243 = math.tanh %235 : vector<2x256xf32>
    %244 = vector.extract_strided_slice %242 {offsets = [0, 0], sizes = [2, 64], strides = [1, 1]} : vector<2x256xf32> to vector<2x64xf32>
    %245 = vector.extract_strided_slice %242 {offsets = [0, 64], sizes = [2, 64], strides = [1, 1]} : vector<2x256xf32> to vector<2x64xf32>
    %246 = vector.extract_strided_slice %243 {offsets = [0, 128], sizes = [2, 64], strides = [1, 1]} : vector<2x256xf32> to vector<2x64xf32>
    %247 = vector.extract_strided_slice %242 {offsets = [0, 192], sizes = [2, 64], strides = [1, 1]} : vector<2x256xf32> to vector<2x64xf32>
    %248 = arith.mulf %245, %223 : vector<2x64xf32>
    %249 = arith.mulf %244, %246 : vector<2x64xf32>
    %250 = arith.addf %248, %249 : vector<2x64xf32>
    %251 = math.tanh %250 : vector<2x64xf32>
    %252 = arith.mulf %247, %251 : vector<2x64xf32>
    %253 = vector.extract_strided_slice %252 {offsets = [0, 0], sizes = [2, 32], strides = [1, 1]} : vector<2x64xf32> to vector<2x32xf32>
    %c14_68 = arith.constant 14 : index
    %c0_69 = arith.constant 0 : index
    %254 = vector.load %arg17[%c14_68, %c0_69] : memref<16x64xf32, #tpu.memory_space<vmem>>, vector<2x32xf32>
    tpu.vector_store %arg17[%c14_68, %c0_69], %253 {strides = array<i32>} : memref<16x64xf32, #tpu.memory_space<vmem>>, vector<2x32xf32>,
    %255 = vector.extract_strided_slice %252 {offsets = [0, 32], sizes = [2, 32], strides = [1, 1]} : vector<2x64xf32> to vector<2x32xf32>
    %c0_70 = arith.constant 0 : index
    %c32_71 = arith.constant 32 : index
    %256 = vector.load %arg17[%c0_70, %c32_71] : memref<16x64xf32, #tpu.memory_space<vmem>>, vector<2x32xf32>
    tpu.vector_store %arg17[%c0_70, %c32_71], %255 {strides = array<i32>} : memref<16x64xf32, #tpu.memory_space<vmem>>, vector<2x32xf32>,
    %c0_72 = arith.constant 0 : index
    %c0_73 = arith.constant 0 : index
    %257 = vector.load %arg17[%c0_72, %c0_73] : memref<16x64xf32, #tpu.memory_space<vmem>>, vector<16x64xf32>
    %258 = arith.truncf %257 : vector<16x64xf32> to vector<16x64xbf16>
    %c0_74 = arith.constant 0 : index
    %c0_75 = arith.constant 0 : index
    %259 = vector.load %arg4[%c0_74, %c0_75] : memref<64x256xbf16, #tpu.memory_space<vmem>>, vector<64x256xbf16>
    %cst_76 = arith.constant dense<0.000000e+00> : vector<16x256xf32>
    %260 = tpu.matmul %258, %259, %cst_76 {dimension_numbers = #tpu.dot_dimension_numbers<[1], [0], [0], [1], [0, 0, 1, 1], [], []>} : vector<16x64xbf16>, vector<64x256xbf16>, vector<16x256xf32> -> vector<16x256xf32>
    %c0_77 = arith.constant 0 : index
    %c0_78 = arith.constant 0 : index
    %261 = vector.load %arg10[%c0_77, %c0_78] : memref<1x256xf32, #tpu.memory_space<vmem>>, vector<1x256xf32>
    %262 = vector.broadcast %261 : vector<1x256xf32> to vector<16x256xf32>
    %263 = arith.addf %260, %262 : vector<16x256xf32>
    %c0_79 = arith.constant 0 : index
    %c0_80 = arith.constant 0 : index
    %264 = vector.load %arg7[%c0_79, %c0_80] : memref<64x256xbf16, #tpu.memory_space<vmem>>, vector<64x256xbf16>
    %cst_81 = arith.constant 0.000000e+00 : f32
    %265 = vector.broadcast %cst_81 : f32 to vector<2x64xf32>
    %cst_82 = arith.constant 0.000000e+00 : f32
    %266 = vector.broadcast %cst_82 : f32 to vector<2x64xf32>
    %267 = vector.extract_strided_slice %263 {offsets = [0, 0], sizes = [2, 256], strides = [1, 1]} : vector<16x256xf32> to vector<2x256xf32>
    %268 = vector.extract_strided_slice %263 {offsets = [14, 0], sizes = [2, 256], strides = [1, 1]} : vector<16x256xf32> to vector<2x256xf32>
    %269 = arith.select %18, %267, %268 : vector<2x256xi1>, vector<2x256xf32>
    %270 = arith.truncf %265 : vector<2x64xf32> to vector<2x64xbf16>
    %cst_83 = arith.constant dense<0.000000e+00> : vector<2x256xf32>
    %271 = tpu.matmul %270, %264, %cst_83 {dimension_numbers = #tpu.dot_dimension_numbers<[1], [0], [0], [1], [0, 0, 1, 1], [], []>} : vector<2x64xbf16>, vector<64x256xbf16>, vector<2x256xf32> -> vector<2x256xf32>
    %272 = arith.addf %269, %271 : vector<2x256xf32>
    %cst_84 = arith.constant 5.000000e-01 : f32
    %273 = vector.broadcast %cst_84 : f32 to vector<2x256xf32>
    %274 = arith.mulf %273, %272 : vector<2x256xf32>
    %275 = math.tanh %274 : vector<2x256xf32>
    %cst_85 = arith.constant 5.000000e-01 : f32
    %276 = vector.broadcast %cst_85 : f32 to vector<2x256xf32>
    %277 = arith.mulf %276, %275 : vector<2x256xf32>
    %cst_86 = arith.constant 5.000000e-01 : f32
    %278 = vector.broadcast %cst_86 : f32 to vector<2x256xf32>
    %279 = arith.addf %277, %278 : vector<2x256xf32>
    %280 = math.tanh %272 : vector<2x256xf32>
    %281 = vector.extract_strided_slice %279 {offsets = [0, 0], sizes = [2, 64], strides = [1, 1]} : vector<2x256xf32> to vector<2x64xf32>
    %282 = vector.extract_strided_slice %279 {offsets = [0, 64], sizes = [2, 64], strides = [1, 1]} : vector<2x256xf32> to vector<2x64xf32>
    %283 = vector.extract_strided_slice %280 {offsets = [0, 128], sizes = [2, 64], strides = [1, 1]} : vector<2x256xf32> to vector<2x64xf32>
    %284 = vector.extract_strided_slice %279 {offsets = [0, 192], sizes = [2, 64], strides = [1, 1]} : vector<2x256xf32> to vector<2x64xf32>
    %285 = arith.mulf %282, %266 : vector<2x64xf32>
    %286 = arith.mulf %281, %283 : vector<2x64xf32>
    %287 = arith.addf %285, %286 : vector<2x64xf32>
    %288 = math.tanh %287 : vector<2x64xf32>
    %289 = arith.mulf %284, %288 : vector<2x64xf32>
    %290 = vector.extract_strided_slice %289 {offsets = [0, 0], sizes = [2, 32], strides = [1, 1]} : vector<2x64xf32> to vector<2x32xf32>
    %c0_87 = arith.constant 0 : index
    %c0_88 = arith.constant 0 : index
    %291 = vector.load %arg17[%c0_87, %c0_88] : memref<16x64xf32, #tpu.memory_space<vmem>>, vector<2x32xf32>
    tpu.vector_store %arg17[%c0_87, %c0_88], %290 {strides = array<i32>} : memref<16x64xf32, #tpu.memory_space<vmem>>, vector<2x32xf32>,
    %292 = vector.extract_strided_slice %289 {offsets = [0, 32], sizes = [2, 32], strides = [1, 1]} : vector<2x64xf32> to vector<2x32xf32>
    %c14_89 = arith.constant 14 : index
    %c32_90 = arith.constant 32 : index
    %293 = vector.load %arg17[%c14_89, %c32_90] : memref<16x64xf32, #tpu.memory_space<vmem>>, vector<2x32xf32>
    tpu.vector_store %arg17[%c14_89, %c32_90], %292 {strides = array<i32>} : memref<16x64xf32, #tpu.memory_space<vmem>>, vector<2x32xf32>,
    %294 = vector.extract_strided_slice %263 {offsets = [2, 0], sizes = [2, 256], strides = [1, 1]} : vector<16x256xf32> to vector<2x256xf32>
    %295 = vector.extract_strided_slice %263 {offsets = [12, 0], sizes = [2, 256], strides = [1, 1]} : vector<16x256xf32> to vector<2x256xf32>
    %296 = arith.select %18, %294, %295 : vector<2x256xi1>, vector<2x256xf32>
    %297 = arith.truncf %289 : vector<2x64xf32> to vector<2x64xbf16>
    %cst_91 = arith.constant dense<0.000000e+00> : vector<2x256xf32>
    %298 = tpu.matmul %297, %264, %cst_91 {dimension_numbers = #tpu.dot_dimension_numbers<[1], [0], [0], [1], [0, 0, 1, 1], [], []>} : vector<2x64xbf16>, vector<64x256xbf16>, vector<2x256xf32> -> vector<2x256xf32>
    %299 = arith.addf %296, %298 : vector<2x256xf32>
    %cst_92 = arith.constant 5.000000e-01 : f32
    %300 = vector.broadcast %cst_92 : f32 to vector<2x256xf32>
    %301 = arith.mulf %300, %299 : vector<2x256xf32>
    %302 = math.tanh %301 : vector<2x256xf32>
    %cst_93 = arith.constant 5.000000e-01 : f32
    %303 = vector.broadcast %cst_93 : f32 to vector<2x256xf32>
    %304 = arith.mulf %303, %302 : vector<2x256xf32>
    %cst_94 = arith.constant 5.000000e-01 : f32
    %305 = vector.broadcast %cst_94 : f32 to vector<2x256xf32>
    %306 = arith.addf %304, %305 : vector<2x256xf32>
    %307 = math.tanh %299 : vector<2x256xf32>
    %308 = vector.extract_strided_slice %306 {offsets = [0, 0], sizes = [2, 64], strides = [1, 1]} : vector<2x256xf32> to vector<2x64xf32>
    %309 = vector.extract_strided_slice %306 {offsets = [0, 64], sizes = [2, 64], strides = [1, 1]} : vector<2x256xf32> to vector<2x64xf32>
    %310 = vector.extract_strided_slice %307 {offsets = [0, 128], sizes = [2, 64], strides = [1, 1]} : vector<2x256xf32> to vector<2x64xf32>
    %311 = vector.extract_strided_slice %306 {offsets = [0, 192], sizes = [2, 64], strides = [1, 1]} : vector<2x256xf32> to vector<2x64xf32>
    %312 = arith.mulf %309, %287 : vector<2x64xf32>
    %313 = arith.mulf %308, %310 : vector<2x64xf32>
    %314 = arith.addf %312, %313 : vector<2x64xf32>
    %315 = math.tanh %314 : vector<2x64xf32>
    %316 = arith.mulf %311, %315 : vector<2x64xf32>
    %317 = vector.extract_strided_slice %316 {offsets = [0, 0], sizes = [2, 32], strides = [1, 1]} : vector<2x64xf32> to vector<2x32xf32>
    %c2_95 = arith.constant 2 : index
    %c0_96 = arith.constant 0 : index
    %318 = vector.load %arg17[%c2_95, %c0_96] : memref<16x64xf32, #tpu.memory_space<vmem>>, vector<2x32xf32>
    tpu.vector_store %arg17[%c2_95, %c0_96], %317 {strides = array<i32>} : memref<16x64xf32, #tpu.memory_space<vmem>>, vector<2x32xf32>,
    %319 = vector.extract_strided_slice %316 {offsets = [0, 32], sizes = [2, 32], strides = [1, 1]} : vector<2x64xf32> to vector<2x32xf32>
    %c12_97 = arith.constant 12 : index
    %c32_98 = arith.constant 32 : index
    %320 = vector.load %arg17[%c12_97, %c32_98] : memref<16x64xf32, #tpu.memory_space<vmem>>, vector<2x32xf32>
    tpu.vector_store %arg17[%c12_97, %c32_98], %319 {strides = array<i32>} : memref<16x64xf32, #tpu.memory_space<vmem>>, vector<2x32xf32>,
    %321 = vector.extract_strided_slice %263 {offsets = [4, 0], sizes = [2, 256], strides = [1, 1]} : vector<16x256xf32> to vector<2x256xf32>
    %322 = vector.extract_strided_slice %263 {offsets = [10, 0], sizes = [2, 256], strides = [1, 1]} : vector<16x256xf32> to vector<2x256xf32>
    %323 = arith.select %18, %321, %322 : vector<2x256xi1>, vector<2x256xf32>
    %324 = arith.truncf %316 : vector<2x64xf32> to vector<2x64xbf16>
    %cst_99 = arith.constant dense<0.000000e+00> : vector<2x256xf32>
    %325 = tpu.matmul %324, %264, %cst_99 {dimension_numbers = #tpu.dot_dimension_numbers<[1], [0], [0], [1], [0, 0, 1, 1], [], []>} : vector<2x64xbf16>, vector<64x256xbf16>, vector<2x256xf32> -> vector<2x256xf32>
    %326 = arith.addf %323, %325 : vector<2x256xf32>
    %cst_100 = arith.constant 5.000000e-01 : f32
    %327 = vector.broadcast %cst_100 : f32 to vector<2x256xf32>
    %328 = arith.mulf %327, %326 : vector<2x256xf32>
    %329 = math.tanh %328 : vector<2x256xf32>
    %cst_101 = arith.constant 5.000000e-01 : f32
    %330 = vector.broadcast %cst_101 : f32 to vector<2x256xf32>
    %331 = arith.mulf %330, %329 : vector<2x256xf32>
    %cst_102 = arith.constant 5.000000e-01 : f32
    %332 = vector.broadcast %cst_102 : f32 to vector<2x256xf32>
    %333 = arith.addf %331, %332 : vector<2x256xf32>
    %334 = math.tanh %326 : vector<2x256xf32>
    %335 = vector.extract_strided_slice %333 {offsets = [0, 0], sizes = [2, 64], strides = [1, 1]} : vector<2x256xf32> to vector<2x64xf32>
    %336 = vector.extract_strided_slice %333 {offsets = [0, 64], sizes = [2, 64], strides = [1, 1]} : vector<2x256xf32> to vector<2x64xf32>
    %337 = vector.extract_strided_slice %334 {offsets = [0, 128], sizes = [2, 64], strides = [1, 1]} : vector<2x256xf32> to vector<2x64xf32>
    %338 = vector.extract_strided_slice %333 {offsets = [0, 192], sizes = [2, 64], strides = [1, 1]} : vector<2x256xf32> to vector<2x64xf32>
    %339 = arith.mulf %336, %314 : vector<2x64xf32>
    %340 = arith.mulf %335, %337 : vector<2x64xf32>
    %341 = arith.addf %339, %340 : vector<2x64xf32>
    %342 = math.tanh %341 : vector<2x64xf32>
    %343 = arith.mulf %338, %342 : vector<2x64xf32>
    %344 = vector.extract_strided_slice %343 {offsets = [0, 0], sizes = [2, 32], strides = [1, 1]} : vector<2x64xf32> to vector<2x32xf32>
    %c4_103 = arith.constant 4 : index
    %c0_104 = arith.constant 0 : index
    %345 = vector.load %arg17[%c4_103, %c0_104] : memref<16x64xf32, #tpu.memory_space<vmem>>, vector<2x32xf32>
    tpu.vector_store %arg17[%c4_103, %c0_104], %344 {strides = array<i32>} : memref<16x64xf32, #tpu.memory_space<vmem>>, vector<2x32xf32>,
    %346 = vector.extract_strided_slice %343 {offsets = [0, 32], sizes = [2, 32], strides = [1, 1]} : vector<2x64xf32> to vector<2x32xf32>
    %c10_105 = arith.constant 10 : index
    %c32_106 = arith.constant 32 : index
    %347 = vector.load %arg17[%c10_105, %c32_106] : memref<16x64xf32, #tpu.memory_space<vmem>>, vector<2x32xf32>
    tpu.vector_store %arg17[%c10_105, %c32_106], %346 {strides = array<i32>} : memref<16x64xf32, #tpu.memory_space<vmem>>, vector<2x32xf32>,
    %348 = vector.extract_strided_slice %263 {offsets = [6, 0], sizes = [2, 256], strides = [1, 1]} : vector<16x256xf32> to vector<2x256xf32>
    %349 = vector.extract_strided_slice %263 {offsets = [8, 0], sizes = [2, 256], strides = [1, 1]} : vector<16x256xf32> to vector<2x256xf32>
    %350 = arith.select %18, %348, %349 : vector<2x256xi1>, vector<2x256xf32>
    %351 = arith.truncf %343 : vector<2x64xf32> to vector<2x64xbf16>
    %cst_107 = arith.constant dense<0.000000e+00> : vector<2x256xf32>
    %352 = tpu.matmul %351, %264, %cst_107 {dimension_numbers = #tpu.dot_dimension_numbers<[1], [0], [0], [1], [0, 0, 1, 1], [], []>} : vector<2x64xbf16>, vector<64x256xbf16>, vector<2x256xf32> -> vector<2x256xf32>
    %353 = arith.addf %350, %352 : vector<2x256xf32>
    %cst_108 = arith.constant 5.000000e-01 : f32
    %354 = vector.broadcast %cst_108 : f32 to vector<2x256xf32>
    %355 = arith.mulf %354, %353 : vector<2x256xf32>
    %356 = math.tanh %355 : vector<2x256xf32>
    %cst_109 = arith.constant 5.000000e-01 : f32
    %357 = vector.broadcast %cst_109 : f32 to vector<2x256xf32>
    %358 = arith.mulf %357, %356 : vector<2x256xf32>
    %cst_110 = arith.constant 5.000000e-01 : f32
    %359 = vector.broadcast %cst_110 : f32 to vector<2x256xf32>
    %360 = arith.addf %358, %359 : vector<2x256xf32>
    %361 = math.tanh %353 : vector<2x256xf32>
    %362 = vector.extract_strided_slice %360 {offsets = [0, 0], sizes = [2, 64], strides = [1, 1]} : vector<2x256xf32> to vector<2x64xf32>
    %363 = vector.extract_strided_slice %360 {offsets = [0, 64], sizes = [2, 64], strides = [1, 1]} : vector<2x256xf32> to vector<2x64xf32>
    %364 = vector.extract_strided_slice %361 {offsets = [0, 128], sizes = [2, 64], strides = [1, 1]} : vector<2x256xf32> to vector<2x64xf32>
    %365 = vector.extract_strided_slice %360 {offsets = [0, 192], sizes = [2, 64], strides = [1, 1]} : vector<2x256xf32> to vector<2x64xf32>
    %366 = arith.mulf %363, %341 : vector<2x64xf32>
    %367 = arith.mulf %362, %364 : vector<2x64xf32>
    %368 = arith.addf %366, %367 : vector<2x64xf32>
    %369 = math.tanh %368 : vector<2x64xf32>
    %370 = arith.mulf %365, %369 : vector<2x64xf32>
    %371 = vector.extract_strided_slice %370 {offsets = [0, 0], sizes = [2, 32], strides = [1, 1]} : vector<2x64xf32> to vector<2x32xf32>
    %c6_111 = arith.constant 6 : index
    %c0_112 = arith.constant 0 : index
    %372 = vector.load %arg17[%c6_111, %c0_112] : memref<16x64xf32, #tpu.memory_space<vmem>>, vector<2x32xf32>
    tpu.vector_store %arg17[%c6_111, %c0_112], %371 {strides = array<i32>} : memref<16x64xf32, #tpu.memory_space<vmem>>, vector<2x32xf32>,
    %373 = vector.extract_strided_slice %370 {offsets = [0, 32], sizes = [2, 32], strides = [1, 1]} : vector<2x64xf32> to vector<2x32xf32>
    %c8_113 = arith.constant 8 : index
    %c32_114 = arith.constant 32 : index
    %374 = vector.load %arg17[%c8_113, %c32_114] : memref<16x64xf32, #tpu.memory_space<vmem>>, vector<2x32xf32>
    tpu.vector_store %arg17[%c8_113, %c32_114], %373 {strides = array<i32>} : memref<16x64xf32, #tpu.memory_space<vmem>>, vector<2x32xf32>,
    %375 = vector.extract_strided_slice %263 {offsets = [8, 0], sizes = [2, 256], strides = [1, 1]} : vector<16x256xf32> to vector<2x256xf32>
    %376 = vector.extract_strided_slice %263 {offsets = [6, 0], sizes = [2, 256], strides = [1, 1]} : vector<16x256xf32> to vector<2x256xf32>
    %377 = arith.select %18, %375, %376 : vector<2x256xi1>, vector<2x256xf32>
    %378 = arith.truncf %370 : vector<2x64xf32> to vector<2x64xbf16>
    %cst_115 = arith.constant dense<0.000000e+00> : vector<2x256xf32>
    %379 = tpu.matmul %378, %264, %cst_115 {dimension_numbers = #tpu.dot_dimension_numbers<[1], [0], [0], [1], [0, 0, 1, 1], [], []>} : vector<2x64xbf16>, vector<64x256xbf16>, vector<2x256xf32> -> vector<2x256xf32>
    %380 = arith.addf %377, %379 : vector<2x256xf32>
    %cst_116 = arith.constant 5.000000e-01 : f32
    %381 = vector.broadcast %cst_116 : f32 to vector<2x256xf32>
    %382 = arith.mulf %381, %380 : vector<2x256xf32>
    %383 = math.tanh %382 : vector<2x256xf32>
    %cst_117 = arith.constant 5.000000e-01 : f32
    %384 = vector.broadcast %cst_117 : f32 to vector<2x256xf32>
    %385 = arith.mulf %384, %383 : vector<2x256xf32>
    %cst_118 = arith.constant 5.000000e-01 : f32
    %386 = vector.broadcast %cst_118 : f32 to vector<2x256xf32>
    %387 = arith.addf %385, %386 : vector<2x256xf32>
    %388 = math.tanh %380 : vector<2x256xf32>
    %389 = vector.extract_strided_slice %387 {offsets = [0, 0], sizes = [2, 64], strides = [1, 1]} : vector<2x256xf32> to vector<2x64xf32>
    %390 = vector.extract_strided_slice %387 {offsets = [0, 64], sizes = [2, 64], strides = [1, 1]} : vector<2x256xf32> to vector<2x64xf32>
    %391 = vector.extract_strided_slice %388 {offsets = [0, 128], sizes = [2, 64], strides = [1, 1]} : vector<2x256xf32> to vector<2x64xf32>
    %392 = vector.extract_strided_slice %387 {offsets = [0, 192], sizes = [2, 64], strides = [1, 1]} : vector<2x256xf32> to vector<2x64xf32>
    %393 = arith.mulf %390, %368 : vector<2x64xf32>
    %394 = arith.mulf %389, %391 : vector<2x64xf32>
    %395 = arith.addf %393, %394 : vector<2x64xf32>
    %396 = math.tanh %395 : vector<2x64xf32>
    %397 = arith.mulf %392, %396 : vector<2x64xf32>
    %398 = vector.extract_strided_slice %397 {offsets = [0, 0], sizes = [2, 32], strides = [1, 1]} : vector<2x64xf32> to vector<2x32xf32>
    %c8_119 = arith.constant 8 : index
    %c0_120 = arith.constant 0 : index
    %399 = vector.load %arg17[%c8_119, %c0_120] : memref<16x64xf32, #tpu.memory_space<vmem>>, vector<2x32xf32>
    tpu.vector_store %arg17[%c8_119, %c0_120], %398 {strides = array<i32>} : memref<16x64xf32, #tpu.memory_space<vmem>>, vector<2x32xf32>,
    %400 = vector.extract_strided_slice %397 {offsets = [0, 32], sizes = [2, 32], strides = [1, 1]} : vector<2x64xf32> to vector<2x32xf32>
    %c6_121 = arith.constant 6 : index
    %c32_122 = arith.constant 32 : index
    %401 = vector.load %arg17[%c6_121, %c32_122] : memref<16x64xf32, #tpu.memory_space<vmem>>, vector<2x32xf32>
    tpu.vector_store %arg17[%c6_121, %c32_122], %400 {strides = array<i32>} : memref<16x64xf32, #tpu.memory_space<vmem>>, vector<2x32xf32>,
    %402 = vector.extract_strided_slice %263 {offsets = [10, 0], sizes = [2, 256], strides = [1, 1]} : vector<16x256xf32> to vector<2x256xf32>
    %403 = vector.extract_strided_slice %263 {offsets = [4, 0], sizes = [2, 256], strides = [1, 1]} : vector<16x256xf32> to vector<2x256xf32>
    %404 = arith.select %18, %402, %403 : vector<2x256xi1>, vector<2x256xf32>
    %405 = arith.truncf %397 : vector<2x64xf32> to vector<2x64xbf16>
    %cst_123 = arith.constant dense<0.000000e+00> : vector<2x256xf32>
    %406 = tpu.matmul %405, %264, %cst_123 {dimension_numbers = #tpu.dot_dimension_numbers<[1], [0], [0], [1], [0, 0, 1, 1], [], []>} : vector<2x64xbf16>, vector<64x256xbf16>, vector<2x256xf32> -> vector<2x256xf32>
    %407 = arith.addf %404, %406 : vector<2x256xf32>
    %cst_124 = arith.constant 5.000000e-01 : f32
    %408 = vector.broadcast %cst_124 : f32 to vector<2x256xf32>
    %409 = arith.mulf %408, %407 : vector<2x256xf32>
    %410 = math.tanh %409 : vector<2x256xf32>
    %cst_125 = arith.constant 5.000000e-01 : f32
    %411 = vector.broadcast %cst_125 : f32 to vector<2x256xf32>
    %412 = arith.mulf %411, %410 : vector<2x256xf32>
    %cst_126 = arith.constant 5.000000e-01 : f32
    %413 = vector.broadcast %cst_126 : f32 to vector<2x256xf32>
    %414 = arith.addf %412, %413 : vector<2x256xf32>
    %415 = math.tanh %407 : vector<2x256xf32>
    %416 = vector.extract_strided_slice %414 {offsets = [0, 0], sizes = [2, 64], strides = [1, 1]} : vector<2x256xf32> to vector<2x64xf32>
    %417 = vector.extract_strided_slice %414 {offsets = [0, 64], sizes = [2, 64], strides = [1, 1]} : vector<2x256xf32> to vector<2x64xf32>
    %418 = vector.extract_strided_slice %415 {offsets = [0, 128], sizes = [2, 64], strides = [1, 1]} : vector<2x256xf32> to vector<2x64xf32>
    %419 = vector.extract_strided_slice %414 {offsets = [0, 192], sizes = [2, 64], strides = [1, 1]} : vector<2x256xf32> to vector<2x64xf32>
    %420 = arith.mulf %417, %395 : vector<2x64xf32>
    %421 = arith.mulf %416, %418 : vector<2x64xf32>
    %422 = arith.addf %420, %421 : vector<2x64xf32>
    %423 = math.tanh %422 : vector<2x64xf32>
    %424 = arith.mulf %419, %423 : vector<2x64xf32>
    %425 = vector.extract_strided_slice %424 {offsets = [0, 0], sizes = [2, 32], strides = [1, 1]} : vector<2x64xf32> to vector<2x32xf32>
    %c10_127 = arith.constant 10 : index
    %c0_128 = arith.constant 0 : index
    %426 = vector.load %arg17[%c10_127, %c0_128] : memref<16x64xf32, #tpu.memory_space<vmem>>, vector<2x32xf32>
    tpu.vector_store %arg17[%c10_127, %c0_128], %425 {strides = array<i32>} : memref<16x64xf32, #tpu.memory_space<vmem>>, vector<2x32xf32>,
    %427 = vector.extract_strided_slice %424 {offsets = [0, 32], sizes = [2, 32], strides = [1, 1]} : vector<2x64xf32> to vector<2x32xf32>
    %c4_129 = arith.constant 4 : index
    %c32_130 = arith.constant 32 : index
    %428 = vector.load %arg17[%c4_129, %c32_130] : memref<16x64xf32, #tpu.memory_space<vmem>>, vector<2x32xf32>
    tpu.vector_store %arg17[%c4_129, %c32_130], %427 {strides = array<i32>} : memref<16x64xf32, #tpu.memory_space<vmem>>, vector<2x32xf32>,
    %429 = vector.extract_strided_slice %263 {offsets = [12, 0], sizes = [2, 256], strides = [1, 1]} : vector<16x256xf32> to vector<2x256xf32>
    %430 = vector.extract_strided_slice %263 {offsets = [2, 0], sizes = [2, 256], strides = [1, 1]} : vector<16x256xf32> to vector<2x256xf32>
    %431 = arith.select %18, %429, %430 : vector<2x256xi1>, vector<2x256xf32>
    %432 = arith.truncf %424 : vector<2x64xf32> to vector<2x64xbf16>
    %cst_131 = arith.constant dense<0.000000e+00> : vector<2x256xf32>
    %433 = tpu.matmul %432, %264, %cst_131 {dimension_numbers = #tpu.dot_dimension_numbers<[1], [0], [0], [1], [0, 0, 1, 1], [], []>} : vector<2x64xbf16>, vector<64x256xbf16>, vector<2x256xf32> -> vector<2x256xf32>
    %434 = arith.addf %431, %433 : vector<2x256xf32>
    %cst_132 = arith.constant 5.000000e-01 : f32
    %435 = vector.broadcast %cst_132 : f32 to vector<2x256xf32>
    %436 = arith.mulf %435, %434 : vector<2x256xf32>
    %437 = math.tanh %436 : vector<2x256xf32>
    %cst_133 = arith.constant 5.000000e-01 : f32
    %438 = vector.broadcast %cst_133 : f32 to vector<2x256xf32>
    %439 = arith.mulf %438, %437 : vector<2x256xf32>
    %cst_134 = arith.constant 5.000000e-01 : f32
    %440 = vector.broadcast %cst_134 : f32 to vector<2x256xf32>
    %441 = arith.addf %439, %440 : vector<2x256xf32>
    %442 = math.tanh %434 : vector<2x256xf32>
    %443 = vector.extract_strided_slice %441 {offsets = [0, 0], sizes = [2, 64], strides = [1, 1]} : vector<2x256xf32> to vector<2x64xf32>
    %444 = vector.extract_strided_slice %441 {offsets = [0, 64], sizes = [2, 64], strides = [1, 1]} : vector<2x256xf32> to vector<2x64xf32>
    %445 = vector.extract_strided_slice %442 {offsets = [0, 128], sizes = [2, 64], strides = [1, 1]} : vector<2x256xf32> to vector<2x64xf32>
    %446 = vector.extract_strided_slice %441 {offsets = [0, 192], sizes = [2, 64], strides = [1, 1]} : vector<2x256xf32> to vector<2x64xf32>
    %447 = arith.mulf %444, %422 : vector<2x64xf32>
    %448 = arith.mulf %443, %445 : vector<2x64xf32>
    %449 = arith.addf %447, %448 : vector<2x64xf32>
    %450 = math.tanh %449 : vector<2x64xf32>
    %451 = arith.mulf %446, %450 : vector<2x64xf32>
    %452 = vector.extract_strided_slice %451 {offsets = [0, 0], sizes = [2, 32], strides = [1, 1]} : vector<2x64xf32> to vector<2x32xf32>
    %c12_135 = arith.constant 12 : index
    %c0_136 = arith.constant 0 : index
    %453 = vector.load %arg17[%c12_135, %c0_136] : memref<16x64xf32, #tpu.memory_space<vmem>>, vector<2x32xf32>
    tpu.vector_store %arg17[%c12_135, %c0_136], %452 {strides = array<i32>} : memref<16x64xf32, #tpu.memory_space<vmem>>, vector<2x32xf32>,
    %454 = vector.extract_strided_slice %451 {offsets = [0, 32], sizes = [2, 32], strides = [1, 1]} : vector<2x64xf32> to vector<2x32xf32>
    %c2_137 = arith.constant 2 : index
    %c32_138 = arith.constant 32 : index
    %455 = vector.load %arg17[%c2_137, %c32_138] : memref<16x64xf32, #tpu.memory_space<vmem>>, vector<2x32xf32>
    tpu.vector_store %arg17[%c2_137, %c32_138], %454 {strides = array<i32>} : memref<16x64xf32, #tpu.memory_space<vmem>>, vector<2x32xf32>,
    %456 = vector.extract_strided_slice %263 {offsets = [14, 0], sizes = [2, 256], strides = [1, 1]} : vector<16x256xf32> to vector<2x256xf32>
    %457 = vector.extract_strided_slice %263 {offsets = [0, 0], sizes = [2, 256], strides = [1, 1]} : vector<16x256xf32> to vector<2x256xf32>
    %458 = arith.select %18, %456, %457 : vector<2x256xi1>, vector<2x256xf32>
    %459 = arith.truncf %451 : vector<2x64xf32> to vector<2x64xbf16>
    %cst_139 = arith.constant dense<0.000000e+00> : vector<2x256xf32>
    %460 = tpu.matmul %459, %264, %cst_139 {dimension_numbers = #tpu.dot_dimension_numbers<[1], [0], [0], [1], [0, 0, 1, 1], [], []>} : vector<2x64xbf16>, vector<64x256xbf16>, vector<2x256xf32> -> vector<2x256xf32>
    %461 = arith.addf %458, %460 : vector<2x256xf32>
    %cst_140 = arith.constant 5.000000e-01 : f32
    %462 = vector.broadcast %cst_140 : f32 to vector<2x256xf32>
    %463 = arith.mulf %462, %461 : vector<2x256xf32>
    %464 = math.tanh %463 : vector<2x256xf32>
    %cst_141 = arith.constant 5.000000e-01 : f32
    %465 = vector.broadcast %cst_141 : f32 to vector<2x256xf32>
    %466 = arith.mulf %465, %464 : vector<2x256xf32>
    %cst_142 = arith.constant 5.000000e-01 : f32
    %467 = vector.broadcast %cst_142 : f32 to vector<2x256xf32>
    %468 = arith.addf %466, %467 : vector<2x256xf32>
    %469 = math.tanh %461 : vector<2x256xf32>
    %470 = vector.extract_strided_slice %468 {offsets = [0, 0], sizes = [2, 64], strides = [1, 1]} : vector<2x256xf32> to vector<2x64xf32>
    %471 = vector.extract_strided_slice %468 {offsets = [0, 64], sizes = [2, 64], strides = [1, 1]} : vector<2x256xf32> to vector<2x64xf32>
    %472 = vector.extract_strided_slice %469 {offsets = [0, 128], sizes = [2, 64], strides = [1, 1]} : vector<2x256xf32> to vector<2x64xf32>
    %473 = vector.extract_strided_slice %468 {offsets = [0, 192], sizes = [2, 64], strides = [1, 1]} : vector<2x256xf32> to vector<2x64xf32>
    %474 = arith.mulf %471, %449 : vector<2x64xf32>
    %475 = arith.mulf %470, %472 : vector<2x64xf32>
    %476 = arith.addf %474, %475 : vector<2x64xf32>
    %477 = math.tanh %476 : vector<2x64xf32>
    %478 = arith.mulf %473, %477 : vector<2x64xf32>
    %479 = vector.extract_strided_slice %478 {offsets = [0, 0], sizes = [2, 32], strides = [1, 1]} : vector<2x64xf32> to vector<2x32xf32>
    %c14_143 = arith.constant 14 : index
    %c0_144 = arith.constant 0 : index
    %480 = vector.load %arg17[%c14_143, %c0_144] : memref<16x64xf32, #tpu.memory_space<vmem>>, vector<2x32xf32>
    tpu.vector_store %arg17[%c14_143, %c0_144], %479 {strides = array<i32>} : memref<16x64xf32, #tpu.memory_space<vmem>>, vector<2x32xf32>,
    %481 = vector.extract_strided_slice %478 {offsets = [0, 32], sizes = [2, 32], strides = [1, 1]} : vector<2x64xf32> to vector<2x32xf32>
    %c0_145 = arith.constant 0 : index
    %c32_146 = arith.constant 32 : index
    %482 = vector.load %arg17[%c0_145, %c32_146] : memref<16x64xf32, #tpu.memory_space<vmem>>, vector<2x32xf32>
    tpu.vector_store %arg17[%c0_145, %c32_146], %481 {strides = array<i32>} : memref<16x64xf32, #tpu.memory_space<vmem>>, vector<2x32xf32>,
    %c0_147 = arith.constant 0 : index
    %c0_148 = arith.constant 0 : index
    %483 = vector.load %arg17[%c0_147, %c0_148] : memref<16x64xf32, #tpu.memory_space<vmem>>, vector<16x64xf32>
    %484 = arith.truncf %483 : vector<16x64xf32> to vector<16x64xbf16>
    %c0_149 = arith.constant 0 : index
    %c0_150 = arith.constant 0 : index
    %485 = vector.load %arg5[%c0_149, %c0_150] : memref<64x256xbf16, #tpu.memory_space<vmem>>, vector<64x256xbf16>
    %cst_151 = arith.constant dense<0.000000e+00> : vector<16x256xf32>
    %486 = tpu.matmul %484, %485, %cst_151 {dimension_numbers = #tpu.dot_dimension_numbers<[1], [0], [0], [1], [0, 0, 1, 1], [], []>} : vector<16x64xbf16>, vector<64x256xbf16>, vector<16x256xf32> -> vector<16x256xf32>
    %c0_152 = arith.constant 0 : index
    %c0_153 = arith.constant 0 : index
    %487 = vector.load %arg11[%c0_152, %c0_153] : memref<1x256xf32, #tpu.memory_space<vmem>>, vector<1x256xf32>
    %488 = vector.broadcast %487 : vector<1x256xf32> to vector<16x256xf32>
    %489 = arith.addf %486, %488 : vector<16x256xf32>
    %c0_154 = arith.constant 0 : index
    %c0_155 = arith.constant 0 : index
    %490 = vector.load %arg8[%c0_154, %c0_155] : memref<64x256xbf16, #tpu.memory_space<vmem>>, vector<64x256xbf16>
    %cst_156 = arith.constant 0.000000e+00 : f32
    %491 = vector.broadcast %cst_156 : f32 to vector<2x64xf32>
    %cst_157 = arith.constant 0.000000e+00 : f32
    %492 = vector.broadcast %cst_157 : f32 to vector<2x64xf32>
    %493 = vector.extract_strided_slice %489 {offsets = [0, 0], sizes = [2, 256], strides = [1, 1]} : vector<16x256xf32> to vector<2x256xf32>
    %494 = vector.extract_strided_slice %489 {offsets = [14, 0], sizes = [2, 256], strides = [1, 1]} : vector<16x256xf32> to vector<2x256xf32>
    %495 = arith.select %18, %493, %494 : vector<2x256xi1>, vector<2x256xf32>
    %496 = arith.truncf %491 : vector<2x64xf32> to vector<2x64xbf16>
    %cst_158 = arith.constant dense<0.000000e+00> : vector<2x256xf32>
    %497 = tpu.matmul %496, %490, %cst_158 {dimension_numbers = #tpu.dot_dimension_numbers<[1], [0], [0], [1], [0, 0, 1, 1], [], []>} : vector<2x64xbf16>, vector<64x256xbf16>, vector<2x256xf32> -> vector<2x256xf32>
    %498 = arith.addf %495, %497 : vector<2x256xf32>
    %cst_159 = arith.constant 5.000000e-01 : f32
    %499 = vector.broadcast %cst_159 : f32 to vector<2x256xf32>
    %500 = arith.mulf %499, %498 : vector<2x256xf32>
    %501 = math.tanh %500 : vector<2x256xf32>
    %cst_160 = arith.constant 5.000000e-01 : f32
    %502 = vector.broadcast %cst_160 : f32 to vector<2x256xf32>
    %503 = arith.mulf %502, %501 : vector<2x256xf32>
    %cst_161 = arith.constant 5.000000e-01 : f32
    %504 = vector.broadcast %cst_161 : f32 to vector<2x256xf32>
    %505 = arith.addf %503, %504 : vector<2x256xf32>
    %506 = math.tanh %498 : vector<2x256xf32>
    %507 = vector.extract_strided_slice %505 {offsets = [0, 0], sizes = [2, 64], strides = [1, 1]} : vector<2x256xf32> to vector<2x64xf32>
    %508 = vector.extract_strided_slice %505 {offsets = [0, 64], sizes = [2, 64], strides = [1, 1]} : vector<2x256xf32> to vector<2x64xf32>
    %509 = vector.extract_strided_slice %506 {offsets = [0, 128], sizes = [2, 64], strides = [1, 1]} : vector<2x256xf32> to vector<2x64xf32>
    %510 = vector.extract_strided_slice %505 {offsets = [0, 192], sizes = [2, 64], strides = [1, 1]} : vector<2x256xf32> to vector<2x64xf32>
    %511 = arith.mulf %508, %492 : vector<2x64xf32>
    %512 = arith.mulf %507, %509 : vector<2x64xf32>
    %513 = arith.addf %511, %512 : vector<2x64xf32>
    %514 = math.tanh %513 : vector<2x64xf32>
    %515 = arith.mulf %510, %514 : vector<2x64xf32>
    %516 = vector.extract_strided_slice %515 {offsets = [0, 0], sizes = [2, 32], strides = [1, 1]} : vector<2x64xf32> to vector<2x32xf32>
    %c0_162 = arith.constant 0 : index
    %c0_163 = arith.constant 0 : index
    %517 = vector.load %arg17[%c0_162, %c0_163] : memref<16x64xf32, #tpu.memory_space<vmem>>, vector<2x32xf32>
    tpu.vector_store %arg17[%c0_162, %c0_163], %516 {strides = array<i32>} : memref<16x64xf32, #tpu.memory_space<vmem>>, vector<2x32xf32>,
    %518 = vector.extract_strided_slice %515 {offsets = [0, 32], sizes = [2, 32], strides = [1, 1]} : vector<2x64xf32> to vector<2x32xf32>
    %c14_164 = arith.constant 14 : index
    %c32_165 = arith.constant 32 : index
    %519 = vector.load %arg17[%c14_164, %c32_165] : memref<16x64xf32, #tpu.memory_space<vmem>>, vector<2x32xf32>
    tpu.vector_store %arg17[%c14_164, %c32_165], %518 {strides = array<i32>} : memref<16x64xf32, #tpu.memory_space<vmem>>, vector<2x32xf32>,
    %520 = vector.extract_strided_slice %489 {offsets = [2, 0], sizes = [2, 256], strides = [1, 1]} : vector<16x256xf32> to vector<2x256xf32>
    %521 = vector.extract_strided_slice %489 {offsets = [12, 0], sizes = [2, 256], strides = [1, 1]} : vector<16x256xf32> to vector<2x256xf32>
    %522 = arith.select %18, %520, %521 : vector<2x256xi1>, vector<2x256xf32>
    %523 = arith.truncf %515 : vector<2x64xf32> to vector<2x64xbf16>
    %cst_166 = arith.constant dense<0.000000e+00> : vector<2x256xf32>
    %524 = tpu.matmul %523, %490, %cst_166 {dimension_numbers = #tpu.dot_dimension_numbers<[1], [0], [0], [1], [0, 0, 1, 1], [], []>} : vector<2x64xbf16>, vector<64x256xbf16>, vector<2x256xf32> -> vector<2x256xf32>
    %525 = arith.addf %522, %524 : vector<2x256xf32>
    %cst_167 = arith.constant 5.000000e-01 : f32
    %526 = vector.broadcast %cst_167 : f32 to vector<2x256xf32>
    %527 = arith.mulf %526, %525 : vector<2x256xf32>
    %528 = math.tanh %527 : vector<2x256xf32>
    %cst_168 = arith.constant 5.000000e-01 : f32
    %529 = vector.broadcast %cst_168 : f32 to vector<2x256xf32>
    %530 = arith.mulf %529, %528 : vector<2x256xf32>
    %cst_169 = arith.constant 5.000000e-01 : f32
    %531 = vector.broadcast %cst_169 : f32 to vector<2x256xf32>
    %532 = arith.addf %530, %531 : vector<2x256xf32>
    %533 = math.tanh %525 : vector<2x256xf32>
    %534 = vector.extract_strided_slice %532 {offsets = [0, 0], sizes = [2, 64], strides = [1, 1]} : vector<2x256xf32> to vector<2x64xf32>
    %535 = vector.extract_strided_slice %532 {offsets = [0, 64], sizes = [2, 64], strides = [1, 1]} : vector<2x256xf32> to vector<2x64xf32>
    %536 = vector.extract_strided_slice %533 {offsets = [0, 128], sizes = [2, 64], strides = [1, 1]} : vector<2x256xf32> to vector<2x64xf32>
    %537 = vector.extract_strided_slice %532 {offsets = [0, 192], sizes = [2, 64], strides = [1, 1]} : vector<2x256xf32> to vector<2x64xf32>
    %538 = arith.mulf %535, %513 : vector<2x64xf32>
    %539 = arith.mulf %534, %536 : vector<2x64xf32>
    %540 = arith.addf %538, %539 : vector<2x64xf32>
    %541 = math.tanh %540 : vector<2x64xf32>
    %542 = arith.mulf %537, %541 : vector<2x64xf32>
    %543 = vector.extract_strided_slice %542 {offsets = [0, 0], sizes = [2, 32], strides = [1, 1]} : vector<2x64xf32> to vector<2x32xf32>
    %c2_170 = arith.constant 2 : index
    %c0_171 = arith.constant 0 : index
    %544 = vector.load %arg17[%c2_170, %c0_171] : memref<16x64xf32, #tpu.memory_space<vmem>>, vector<2x32xf32>
    tpu.vector_store %arg17[%c2_170, %c0_171], %543 {strides = array<i32>} : memref<16x64xf32, #tpu.memory_space<vmem>>, vector<2x32xf32>,
    %545 = vector.extract_strided_slice %542 {offsets = [0, 32], sizes = [2, 32], strides = [1, 1]} : vector<2x64xf32> to vector<2x32xf32>
    %c12_172 = arith.constant 12 : index
    %c32_173 = arith.constant 32 : index
    %546 = vector.load %arg17[%c12_172, %c32_173] : memref<16x64xf32, #tpu.memory_space<vmem>>, vector<2x32xf32>
    tpu.vector_store %arg17[%c12_172, %c32_173], %545 {strides = array<i32>} : memref<16x64xf32, #tpu.memory_space<vmem>>, vector<2x32xf32>,
    %547 = vector.extract_strided_slice %489 {offsets = [4, 0], sizes = [2, 256], strides = [1, 1]} : vector<16x256xf32> to vector<2x256xf32>
    %548 = vector.extract_strided_slice %489 {offsets = [10, 0], sizes = [2, 256], strides = [1, 1]} : vector<16x256xf32> to vector<2x256xf32>
    %549 = arith.select %18, %547, %548 : vector<2x256xi1>, vector<2x256xf32>
    %550 = arith.truncf %542 : vector<2x64xf32> to vector<2x64xbf16>
    %cst_174 = arith.constant dense<0.000000e+00> : vector<2x256xf32>
    %551 = tpu.matmul %550, %490, %cst_174 {dimension_numbers = #tpu.dot_dimension_numbers<[1], [0], [0], [1], [0, 0, 1, 1], [], []>} : vector<2x64xbf16>, vector<64x256xbf16>, vector<2x256xf32> -> vector<2x256xf32>
    %552 = arith.addf %549, %551 : vector<2x256xf32>
    %cst_175 = arith.constant 5.000000e-01 : f32
    %553 = vector.broadcast %cst_175 : f32 to vector<2x256xf32>
    %554 = arith.mulf %553, %552 : vector<2x256xf32>
    %555 = math.tanh %554 : vector<2x256xf32>
    %cst_176 = arith.constant 5.000000e-01 : f32
    %556 = vector.broadcast %cst_176 : f32 to vector<2x256xf32>
    %557 = arith.mulf %556, %555 : vector<2x256xf32>
    %cst_177 = arith.constant 5.000000e-01 : f32
    %558 = vector.broadcast %cst_177 : f32 to vector<2x256xf32>
    %559 = arith.addf %557, %558 : vector<2x256xf32>
    %560 = math.tanh %552 : vector<2x256xf32>
    %561 = vector.extract_strided_slice %559 {offsets = [0, 0], sizes = [2, 64], strides = [1, 1]} : vector<2x256xf32> to vector<2x64xf32>
    %562 = vector.extract_strided_slice %559 {offsets = [0, 64], sizes = [2, 64], strides = [1, 1]} : vector<2x256xf32> to vector<2x64xf32>
    %563 = vector.extract_strided_slice %560 {offsets = [0, 128], sizes = [2, 64], strides = [1, 1]} : vector<2x256xf32> to vector<2x64xf32>
    %564 = vector.extract_strided_slice %559 {offsets = [0, 192], sizes = [2, 64], strides = [1, 1]} : vector<2x256xf32> to vector<2x64xf32>
    %565 = arith.mulf %562, %540 : vector<2x64xf32>
    %566 = arith.mulf %561, %563 : vector<2x64xf32>
    %567 = arith.addf %565, %566 : vector<2x64xf32>
    %568 = math.tanh %567 : vector<2x64xf32>
    %569 = arith.mulf %564, %568 : vector<2x64xf32>
    %570 = vector.extract_strided_slice %569 {offsets = [0, 0], sizes = [2, 32], strides = [1, 1]} : vector<2x64xf32> to vector<2x32xf32>
    %c4_178 = arith.constant 4 : index
    %c0_179 = arith.constant 0 : index
    %571 = vector.load %arg17[%c4_178, %c0_179] : memref<16x64xf32, #tpu.memory_space<vmem>>, vector<2x32xf32>
    tpu.vector_store %arg17[%c4_178, %c0_179], %570 {strides = array<i32>} : memref<16x64xf32, #tpu.memory_space<vmem>>, vector<2x32xf32>,
    %572 = vector.extract_strided_slice %569 {offsets = [0, 32], sizes = [2, 32], strides = [1, 1]} : vector<2x64xf32> to vector<2x32xf32>
    %c10_180 = arith.constant 10 : index
    %c32_181 = arith.constant 32 : index
    %573 = vector.load %arg17[%c10_180, %c32_181] : memref<16x64xf32, #tpu.memory_space<vmem>>, vector<2x32xf32>
    tpu.vector_store %arg17[%c10_180, %c32_181], %572 {strides = array<i32>} : memref<16x64xf32, #tpu.memory_space<vmem>>, vector<2x32xf32>,
    %574 = vector.extract_strided_slice %489 {offsets = [6, 0], sizes = [2, 256], strides = [1, 1]} : vector<16x256xf32> to vector<2x256xf32>
    %575 = vector.extract_strided_slice %489 {offsets = [8, 0], sizes = [2, 256], strides = [1, 1]} : vector<16x256xf32> to vector<2x256xf32>
    %576 = arith.select %18, %574, %575 : vector<2x256xi1>, vector<2x256xf32>
    %577 = arith.truncf %569 : vector<2x64xf32> to vector<2x64xbf16>
    %cst_182 = arith.constant dense<0.000000e+00> : vector<2x256xf32>
    %578 = tpu.matmul %577, %490, %cst_182 {dimension_numbers = #tpu.dot_dimension_numbers<[1], [0], [0], [1], [0, 0, 1, 1], [], []>} : vector<2x64xbf16>, vector<64x256xbf16>, vector<2x256xf32> -> vector<2x256xf32>
    %579 = arith.addf %576, %578 : vector<2x256xf32>
    %cst_183 = arith.constant 5.000000e-01 : f32
    %580 = vector.broadcast %cst_183 : f32 to vector<2x256xf32>
    %581 = arith.mulf %580, %579 : vector<2x256xf32>
    %582 = math.tanh %581 : vector<2x256xf32>
    %cst_184 = arith.constant 5.000000e-01 : f32
    %583 = vector.broadcast %cst_184 : f32 to vector<2x256xf32>
    %584 = arith.mulf %583, %582 : vector<2x256xf32>
    %cst_185 = arith.constant 5.000000e-01 : f32
    %585 = vector.broadcast %cst_185 : f32 to vector<2x256xf32>
    %586 = arith.addf %584, %585 : vector<2x256xf32>
    %587 = math.tanh %579 : vector<2x256xf32>
    %588 = vector.extract_strided_slice %586 {offsets = [0, 0], sizes = [2, 64], strides = [1, 1]} : vector<2x256xf32> to vector<2x64xf32>
    %589 = vector.extract_strided_slice %586 {offsets = [0, 64], sizes = [2, 64], strides = [1, 1]} : vector<2x256xf32> to vector<2x64xf32>
    %590 = vector.extract_strided_slice %587 {offsets = [0, 128], sizes = [2, 64], strides = [1, 1]} : vector<2x256xf32> to vector<2x64xf32>
    %591 = vector.extract_strided_slice %586 {offsets = [0, 192], sizes = [2, 64], strides = [1, 1]} : vector<2x256xf32> to vector<2x64xf32>
    %592 = arith.mulf %589, %567 : vector<2x64xf32>
    %593 = arith.mulf %588, %590 : vector<2x64xf32>
    %594 = arith.addf %592, %593 : vector<2x64xf32>
    %595 = math.tanh %594 : vector<2x64xf32>
    %596 = arith.mulf %591, %595 : vector<2x64xf32>
    %597 = vector.extract_strided_slice %596 {offsets = [0, 0], sizes = [2, 32], strides = [1, 1]} : vector<2x64xf32> to vector<2x32xf32>
    %c6_186 = arith.constant 6 : index
    %c0_187 = arith.constant 0 : index
    %598 = vector.load %arg17[%c6_186, %c0_187] : memref<16x64xf32, #tpu.memory_space<vmem>>, vector<2x32xf32>
    tpu.vector_store %arg17[%c6_186, %c0_187], %597 {strides = array<i32>} : memref<16x64xf32, #tpu.memory_space<vmem>>, vector<2x32xf32>,
    %599 = vector.extract_strided_slice %596 {offsets = [0, 32], sizes = [2, 32], strides = [1, 1]} : vector<2x64xf32> to vector<2x32xf32>
    %c8_188 = arith.constant 8 : index
    %c32_189 = arith.constant 32 : index
    %600 = vector.load %arg17[%c8_188, %c32_189] : memref<16x64xf32, #tpu.memory_space<vmem>>, vector<2x32xf32>
    tpu.vector_store %arg17[%c8_188, %c32_189], %599 {strides = array<i32>} : memref<16x64xf32, #tpu.memory_space<vmem>>, vector<2x32xf32>,
    %601 = vector.extract_strided_slice %489 {offsets = [8, 0], sizes = [2, 256], strides = [1, 1]} : vector<16x256xf32> to vector<2x256xf32>
    %602 = vector.extract_strided_slice %489 {offsets = [6, 0], sizes = [2, 256], strides = [1, 1]} : vector<16x256xf32> to vector<2x256xf32>
    %603 = arith.select %18, %601, %602 : vector<2x256xi1>, vector<2x256xf32>
    %604 = arith.truncf %596 : vector<2x64xf32> to vector<2x64xbf16>
    %cst_190 = arith.constant dense<0.000000e+00> : vector<2x256xf32>
    %605 = tpu.matmul %604, %490, %cst_190 {dimension_numbers = #tpu.dot_dimension_numbers<[1], [0], [0], [1], [0, 0, 1, 1], [], []>} : vector<2x64xbf16>, vector<64x256xbf16>, vector<2x256xf32> -> vector<2x256xf32>
    %606 = arith.addf %603, %605 : vector<2x256xf32>
    %cst_191 = arith.constant 5.000000e-01 : f32
    %607 = vector.broadcast %cst_191 : f32 to vector<2x256xf32>
    %608 = arith.mulf %607, %606 : vector<2x256xf32>
    %609 = math.tanh %608 : vector<2x256xf32>
    %cst_192 = arith.constant 5.000000e-01 : f32
    %610 = vector.broadcast %cst_192 : f32 to vector<2x256xf32>
    %611 = arith.mulf %610, %609 : vector<2x256xf32>
    %cst_193 = arith.constant 5.000000e-01 : f32
    %612 = vector.broadcast %cst_193 : f32 to vector<2x256xf32>
    %613 = arith.addf %611, %612 : vector<2x256xf32>
    %614 = math.tanh %606 : vector<2x256xf32>
    %615 = vector.extract_strided_slice %613 {offsets = [0, 0], sizes = [2, 64], strides = [1, 1]} : vector<2x256xf32> to vector<2x64xf32>
    %616 = vector.extract_strided_slice %613 {offsets = [0, 64], sizes = [2, 64], strides = [1, 1]} : vector<2x256xf32> to vector<2x64xf32>
    %617 = vector.extract_strided_slice %614 {offsets = [0, 128], sizes = [2, 64], strides = [1, 1]} : vector<2x256xf32> to vector<2x64xf32>
    %618 = vector.extract_strided_slice %613 {offsets = [0, 192], sizes = [2, 64], strides = [1, 1]} : vector<2x256xf32> to vector<2x64xf32>
    %619 = arith.mulf %616, %594 : vector<2x64xf32>
    %620 = arith.mulf %615, %617 : vector<2x64xf32>
    %621 = arith.addf %619, %620 : vector<2x64xf32>
    %622 = math.tanh %621 : vector<2x64xf32>
    %623 = arith.mulf %618, %622 : vector<2x64xf32>
    %624 = vector.extract_strided_slice %623 {offsets = [0, 0], sizes = [2, 32], strides = [1, 1]} : vector<2x64xf32> to vector<2x32xf32>
    %c8_194 = arith.constant 8 : index
    %c0_195 = arith.constant 0 : index
    %625 = vector.load %arg17[%c8_194, %c0_195] : memref<16x64xf32, #tpu.memory_space<vmem>>, vector<2x32xf32>
    tpu.vector_store %arg17[%c8_194, %c0_195], %624 {strides = array<i32>} : memref<16x64xf32, #tpu.memory_space<vmem>>, vector<2x32xf32>,
    %626 = vector.extract_strided_slice %623 {offsets = [0, 32], sizes = [2, 32], strides = [1, 1]} : vector<2x64xf32> to vector<2x32xf32>
    %c6_196 = arith.constant 6 : index
    %c32_197 = arith.constant 32 : index
    %627 = vector.load %arg17[%c6_196, %c32_197] : memref<16x64xf32, #tpu.memory_space<vmem>>, vector<2x32xf32>
    tpu.vector_store %arg17[%c6_196, %c32_197], %626 {strides = array<i32>} : memref<16x64xf32, #tpu.memory_space<vmem>>, vector<2x32xf32>,
    %628 = vector.extract_strided_slice %489 {offsets = [10, 0], sizes = [2, 256], strides = [1, 1]} : vector<16x256xf32> to vector<2x256xf32>
    %629 = vector.extract_strided_slice %489 {offsets = [4, 0], sizes = [2, 256], strides = [1, 1]} : vector<16x256xf32> to vector<2x256xf32>
    %630 = arith.select %18, %628, %629 : vector<2x256xi1>, vector<2x256xf32>
    %631 = arith.truncf %623 : vector<2x64xf32> to vector<2x64xbf16>
    %cst_198 = arith.constant dense<0.000000e+00> : vector<2x256xf32>
    %632 = tpu.matmul %631, %490, %cst_198 {dimension_numbers = #tpu.dot_dimension_numbers<[1], [0], [0], [1], [0, 0, 1, 1], [], []>} : vector<2x64xbf16>, vector<64x256xbf16>, vector<2x256xf32> -> vector<2x256xf32>
    %633 = arith.addf %630, %632 : vector<2x256xf32>
    %cst_199 = arith.constant 5.000000e-01 : f32
    %634 = vector.broadcast %cst_199 : f32 to vector<2x256xf32>
    %635 = arith.mulf %634, %633 : vector<2x256xf32>
    %636 = math.tanh %635 : vector<2x256xf32>
    %cst_200 = arith.constant 5.000000e-01 : f32
    %637 = vector.broadcast %cst_200 : f32 to vector<2x256xf32>
    %638 = arith.mulf %637, %636 : vector<2x256xf32>
    %cst_201 = arith.constant 5.000000e-01 : f32
    %639 = vector.broadcast %cst_201 : f32 to vector<2x256xf32>
    %640 = arith.addf %638, %639 : vector<2x256xf32>
    %641 = math.tanh %633 : vector<2x256xf32>
    %642 = vector.extract_strided_slice %640 {offsets = [0, 0], sizes = [2, 64], strides = [1, 1]} : vector<2x256xf32> to vector<2x64xf32>
    %643 = vector.extract_strided_slice %640 {offsets = [0, 64], sizes = [2, 64], strides = [1, 1]} : vector<2x256xf32> to vector<2x64xf32>
    %644 = vector.extract_strided_slice %641 {offsets = [0, 128], sizes = [2, 64], strides = [1, 1]} : vector<2x256xf32> to vector<2x64xf32>
    %645 = vector.extract_strided_slice %640 {offsets = [0, 192], sizes = [2, 64], strides = [1, 1]} : vector<2x256xf32> to vector<2x64xf32>
    %646 = arith.mulf %643, %621 : vector<2x64xf32>
    %647 = arith.mulf %642, %644 : vector<2x64xf32>
    %648 = arith.addf %646, %647 : vector<2x64xf32>
    %649 = math.tanh %648 : vector<2x64xf32>
    %650 = arith.mulf %645, %649 : vector<2x64xf32>
    %651 = vector.extract_strided_slice %650 {offsets = [0, 0], sizes = [2, 32], strides = [1, 1]} : vector<2x64xf32> to vector<2x32xf32>
    %c10_202 = arith.constant 10 : index
    %c0_203 = arith.constant 0 : index
    %652 = vector.load %arg17[%c10_202, %c0_203] : memref<16x64xf32, #tpu.memory_space<vmem>>, vector<2x32xf32>
    tpu.vector_store %arg17[%c10_202, %c0_203], %651 {strides = array<i32>} : memref<16x64xf32, #tpu.memory_space<vmem>>, vector<2x32xf32>,
    %653 = vector.extract_strided_slice %650 {offsets = [0, 32], sizes = [2, 32], strides = [1, 1]} : vector<2x64xf32> to vector<2x32xf32>
    %c4_204 = arith.constant 4 : index
    %c32_205 = arith.constant 32 : index
    %654 = vector.load %arg17[%c4_204, %c32_205] : memref<16x64xf32, #tpu.memory_space<vmem>>, vector<2x32xf32>
    tpu.vector_store %arg17[%c4_204, %c32_205], %653 {strides = array<i32>} : memref<16x64xf32, #tpu.memory_space<vmem>>, vector<2x32xf32>,
    %655 = vector.extract_strided_slice %489 {offsets = [12, 0], sizes = [2, 256], strides = [1, 1]} : vector<16x256xf32> to vector<2x256xf32>
    %656 = vector.extract_strided_slice %489 {offsets = [2, 0], sizes = [2, 256], strides = [1, 1]} : vector<16x256xf32> to vector<2x256xf32>
    %657 = arith.select %18, %655, %656 : vector<2x256xi1>, vector<2x256xf32>
    %658 = arith.truncf %650 : vector<2x64xf32> to vector<2x64xbf16>
    %cst_206 = arith.constant dense<0.000000e+00> : vector<2x256xf32>
    %659 = tpu.matmul %658, %490, %cst_206 {dimension_numbers = #tpu.dot_dimension_numbers<[1], [0], [0], [1], [0, 0, 1, 1], [], []>} : vector<2x64xbf16>, vector<64x256xbf16>, vector<2x256xf32> -> vector<2x256xf32>
    %660 = arith.addf %657, %659 : vector<2x256xf32>
    %cst_207 = arith.constant 5.000000e-01 : f32
    %661 = vector.broadcast %cst_207 : f32 to vector<2x256xf32>
    %662 = arith.mulf %661, %660 : vector<2x256xf32>
    %663 = math.tanh %662 : vector<2x256xf32>
    %cst_208 = arith.constant 5.000000e-01 : f32
    %664 = vector.broadcast %cst_208 : f32 to vector<2x256xf32>
    %665 = arith.mulf %664, %663 : vector<2x256xf32>
    %cst_209 = arith.constant 5.000000e-01 : f32
    %666 = vector.broadcast %cst_209 : f32 to vector<2x256xf32>
    %667 = arith.addf %665, %666 : vector<2x256xf32>
    %668 = math.tanh %660 : vector<2x256xf32>
    %669 = vector.extract_strided_slice %667 {offsets = [0, 0], sizes = [2, 64], strides = [1, 1]} : vector<2x256xf32> to vector<2x64xf32>
    %670 = vector.extract_strided_slice %667 {offsets = [0, 64], sizes = [2, 64], strides = [1, 1]} : vector<2x256xf32> to vector<2x64xf32>
    %671 = vector.extract_strided_slice %668 {offsets = [0, 128], sizes = [2, 64], strides = [1, 1]} : vector<2x256xf32> to vector<2x64xf32>
    %672 = vector.extract_strided_slice %667 {offsets = [0, 192], sizes = [2, 64], strides = [1, 1]} : vector<2x256xf32> to vector<2x64xf32>
    %673 = arith.mulf %670, %648 : vector<2x64xf32>
    %674 = arith.mulf %669, %671 : vector<2x64xf32>
    %675 = arith.addf %673, %674 : vector<2x64xf32>
    %676 = math.tanh %675 : vector<2x64xf32>
    %677 = arith.mulf %672, %676 : vector<2x64xf32>
    %678 = vector.extract_strided_slice %677 {offsets = [0, 0], sizes = [2, 32], strides = [1, 1]} : vector<2x64xf32> to vector<2x32xf32>
    %c12_210 = arith.constant 12 : index
    %c0_211 = arith.constant 0 : index
    %679 = vector.load %arg17[%c12_210, %c0_211] : memref<16x64xf32, #tpu.memory_space<vmem>>, vector<2x32xf32>
    tpu.vector_store %arg17[%c12_210, %c0_211], %678 {strides = array<i32>} : memref<16x64xf32, #tpu.memory_space<vmem>>, vector<2x32xf32>,
    %680 = vector.extract_strided_slice %677 {offsets = [0, 32], sizes = [2, 32], strides = [1, 1]} : vector<2x64xf32> to vector<2x32xf32>
    %c2_212 = arith.constant 2 : index
    %c32_213 = arith.constant 32 : index
    %681 = vector.load %arg17[%c2_212, %c32_213] : memref<16x64xf32, #tpu.memory_space<vmem>>, vector<2x32xf32>
    tpu.vector_store %arg17[%c2_212, %c32_213], %680 {strides = array<i32>} : memref<16x64xf32, #tpu.memory_space<vmem>>, vector<2x32xf32>,
    %682 = vector.extract_strided_slice %489 {offsets = [14, 0], sizes = [2, 256], strides = [1, 1]} : vector<16x256xf32> to vector<2x256xf32>
    %683 = vector.extract_strided_slice %489 {offsets = [0, 0], sizes = [2, 256], strides = [1, 1]} : vector<16x256xf32> to vector<2x256xf32>
    %684 = arith.select %18, %682, %683 : vector<2x256xi1>, vector<2x256xf32>
    %685 = arith.truncf %677 : vector<2x64xf32> to vector<2x64xbf16>
    %cst_214 = arith.constant dense<0.000000e+00> : vector<2x256xf32>
    %686 = tpu.matmul %685, %490, %cst_214 {dimension_numbers = #tpu.dot_dimension_numbers<[1], [0], [0], [1], [0, 0, 1, 1], [], []>} : vector<2x64xbf16>, vector<64x256xbf16>, vector<2x256xf32> -> vector<2x256xf32>
    %687 = arith.addf %684, %686 : vector<2x256xf32>
    %cst_215 = arith.constant 5.000000e-01 : f32
    %688 = vector.broadcast %cst_215 : f32 to vector<2x256xf32>
    %689 = arith.mulf %688, %687 : vector<2x256xf32>
    %690 = math.tanh %689 : vector<2x256xf32>
    %cst_216 = arith.constant 5.000000e-01 : f32
    %691 = vector.broadcast %cst_216 : f32 to vector<2x256xf32>
    %692 = arith.mulf %691, %690 : vector<2x256xf32>
    %cst_217 = arith.constant 5.000000e-01 : f32
    %693 = vector.broadcast %cst_217 : f32 to vector<2x256xf32>
    %694 = arith.addf %692, %693 : vector<2x256xf32>
    %695 = math.tanh %687 : vector<2x256xf32>
    %696 = vector.extract_strided_slice %694 {offsets = [0, 0], sizes = [2, 64], strides = [1, 1]} : vector<2x256xf32> to vector<2x64xf32>
    %697 = vector.extract_strided_slice %694 {offsets = [0, 64], sizes = [2, 64], strides = [1, 1]} : vector<2x256xf32> to vector<2x64xf32>
    %698 = vector.extract_strided_slice %695 {offsets = [0, 128], sizes = [2, 64], strides = [1, 1]} : vector<2x256xf32> to vector<2x64xf32>
    %699 = vector.extract_strided_slice %694 {offsets = [0, 192], sizes = [2, 64], strides = [1, 1]} : vector<2x256xf32> to vector<2x64xf32>
    %700 = arith.mulf %697, %675 : vector<2x64xf32>
    %701 = arith.mulf %696, %698 : vector<2x64xf32>
    %702 = arith.addf %700, %701 : vector<2x64xf32>
    %703 = math.tanh %702 : vector<2x64xf32>
    %704 = arith.mulf %699, %703 : vector<2x64xf32>
    %705 = vector.extract_strided_slice %704 {offsets = [0, 0], sizes = [2, 32], strides = [1, 1]} : vector<2x64xf32> to vector<2x32xf32>
    %c14_218 = arith.constant 14 : index
    %c0_219 = arith.constant 0 : index
    %706 = vector.load %arg17[%c14_218, %c0_219] : memref<16x64xf32, #tpu.memory_space<vmem>>, vector<2x32xf32>
    tpu.vector_store %arg17[%c14_218, %c0_219], %705 {strides = array<i32>} : memref<16x64xf32, #tpu.memory_space<vmem>>, vector<2x32xf32>,
    %707 = vector.extract_strided_slice %704 {offsets = [0, 32], sizes = [2, 32], strides = [1, 1]} : vector<2x64xf32> to vector<2x32xf32>
    %c0_220 = arith.constant 0 : index
    %c32_221 = arith.constant 32 : index
    %708 = vector.load %arg17[%c0_220, %c32_221] : memref<16x64xf32, #tpu.memory_space<vmem>>, vector<2x32xf32>
    tpu.vector_store %arg17[%c0_220, %c32_221], %707 {strides = array<i32>} : memref<16x64xf32, #tpu.memory_space<vmem>>, vector<2x32xf32>,
    %c0_222 = arith.constant 0 : index
    %c0_223 = arith.constant 0 : index
    %709 = vector.load %arg17[%c0_222, %c0_223] : memref<16x64xf32, #tpu.memory_space<vmem>>, vector<16x64xf32>
    %cst_224 = arith.constant 0.000000e+00 : f32
    %710 = vector.broadcast %cst_224 : f32 to vector<8x64xf32>
    %711 = tpu.concatenate %710, %709, %710 in 0 : vector<8x64xf32>, vector<16x64xf32>, vector<8x64xf32> -> vector<32x64xf32>
    %712 = vector.extract_strided_slice %711 {offsets = [0, 0], sizes = [16, 64], strides = [1, 1]} : vector<32x64xf32> to vector<16x64xf32>
    %713 = vector.extract_strided_slice %711 {offsets = [2, 0], sizes = [16, 64], strides = [1, 1]} : vector<32x64xf32> to vector<16x64xf32>
    %714 = vector.extract_strided_slice %711 {offsets = [4, 0], sizes = [16, 64], strides = [1, 1]} : vector<32x64xf32> to vector<16x64xf32>
    %715 = vector.extract_strided_slice %711 {offsets = [6, 0], sizes = [16, 64], strides = [1, 1]} : vector<32x64xf32> to vector<16x64xf32>
    %716 = vector.extract_strided_slice %711 {offsets = [8, 0], sizes = [16, 64], strides = [1, 1]} : vector<32x64xf32> to vector<16x64xf32>
    %717 = vector.extract_strided_slice %711 {offsets = [10, 0], sizes = [16, 64], strides = [1, 1]} : vector<32x64xf32> to vector<16x64xf32>
    %718 = vector.extract_strided_slice %711 {offsets = [12, 0], sizes = [16, 64], strides = [1, 1]} : vector<32x64xf32> to vector<16x64xf32>
    %719 = vector.extract_strided_slice %711 {offsets = [14, 0], sizes = [16, 64], strides = [1, 1]} : vector<32x64xf32> to vector<16x64xf32>
    %720 = vector.extract_strided_slice %711 {offsets = [16, 0], sizes = [16, 64], strides = [1, 1]} : vector<32x64xf32> to vector<16x64xf32>
    %721 = tpu.concatenate %712, %713, %714, %715, %716, %717, %718, %719, %720 in 1 : vector<16x64xf32>, vector<16x64xf32>, vector<16x64xf32>, vector<16x64xf32>, vector<16x64xf32>, vector<16x64xf32>, vector<16x64xf32>, vector<16x64xf32>, vector<16x64xf32> -> vector<16x576xf32>
    %722 = arith.truncf %721 : vector<16x576xf32> to vector<16x576xbf16>
    %c0_225 = arith.constant 0 : index
    %c0_226 = arith.constant 0 : index
    %723 = vector.load %arg12[%c0_225, %c0_226] : memref<576x192xbf16, #tpu.memory_space<vmem>>, vector<576x192xbf16>
    %cst_227 = arith.constant dense<0.000000e+00> : vector<16x192xf32>
    %724 = tpu.matmul %722, %723, %cst_227 {dimension_numbers = #tpu.dot_dimension_numbers<[1], [0], [0], [1], [0, 0, 1, 1], [], []>} : vector<16x576xbf16>, vector<576x192xbf16>, vector<16x192xf32> -> vector<16x192xf32>
    %c0_228 = arith.constant 0 : index
    %c0_229 = arith.constant 0 : index
    %725 = vector.load %arg13[%c0_228, %c0_229] : memref<1x192xf32, #tpu.memory_space<vmem>>, vector<1x192xf32>
    %726 = vector.broadcast %725 : vector<1x192xf32> to vector<16x192xf32>
    %727 = arith.addf %724, %726 : vector<16x192xf32>
    %728 = vector.extract_strided_slice %727 {offsets = [0, 0], sizes = [16, 64], strides = [1, 1]} : vector<16x192xf32> to vector<16x64xf32>
    %729 = vector.extract_strided_slice %727 {offsets = [0, 64], sizes = [16, 64], strides = [1, 1]} : vector<16x192xf32> to vector<16x64xf32>
    %730 = arith.maximumf %728, %729 : vector<16x64xf32>
    %731 = vector.extract_strided_slice %727 {offsets = [0, 128], sizes = [16, 64], strides = [1, 1]} : vector<16x192xf32> to vector<16x64xf32>
    %732 = arith.maximumf %730, %731 : vector<16x64xf32>
    %733 = arith.truncf %732 : vector<16x64xf32> to vector<16x64xbf16>
    %c0_230 = arith.constant 0 : index
    %c0_231 = arith.constant 0 : index
    %734 = vector.load %arg14[%c0_230, %c0_231] : memref<64x2xbf16, #tpu.memory_space<vmem>>, vector<64x2xbf16>
    %cst_232 = arith.constant dense<0.000000e+00> : vector<16x2xf32>
    %735 = tpu.matmul %733, %734, %cst_232 {dimension_numbers = #tpu.dot_dimension_numbers<[1], [0], [0], [1], [0, 0, 1, 1], [], []>} : vector<16x64xbf16>, vector<64x2xbf16>, vector<16x2xf32> -> vector<16x2xf32>
    %c0_233 = arith.constant 0 : index
    %c0_234 = arith.constant 0 : index
    %736 = vector.load %arg15[%c0_233, %c0_234] : memref<1x2xf32, #tpu.memory_space<vmem>>, vector<1x2xf32>
    %737 = vector.broadcast %736 : vector<1x2xf32> to vector<16x2xf32>
    %738 = arith.addf %735, %737 : vector<16x2xf32>
    %739 = vector.extract_strided_slice %738 {offsets = [0, 0], sizes = [16, 1], strides = [1, 1]} : vector<16x2xf32> to vector<16x1xf32>
    %740 = vector.extract_strided_slice %738 {offsets = [0, 1], sizes = [16, 1], strides = [1, 1]} : vector<16x2xf32> to vector<16x1xf32>
    %cst_235 = arith.constant 0.000000e+00 : f32
    %741 = vector.broadcast %cst_235 : f32 to vector<16x1xf32>
    %742 = arith.subf %741, %739 : vector<16x1xf32>
    %cst_236 = arith.constant 0.000000e+00 : f32
    %743 = vector.broadcast %cst_236 : f32 to vector<16x1xf32>
    %744 = arith.minimumf %742, %743 : vector<16x1xf32>
    %745 = math.absf %742 : vector<16x1xf32>
    %cst_237 = arith.constant 0.000000e+00 : f32
    %746 = vector.broadcast %cst_237 : f32 to vector<16x1xf32>
    %747 = arith.subf %746, %745 : vector<16x1xf32>
    %748 = math.exp %747 : vector<16x1xf32>
    %749 = math.log1p %748 : vector<16x1xf32>
    %750 = arith.subf %744, %749 : vector<16x1xf32>
    %cst_238 = arith.constant 0.000000e+00 : f32
    %751 = vector.broadcast %cst_238 : f32 to vector<16x1xf32>
    %752 = arith.minimumf %739, %751 : vector<16x1xf32>
    %753 = math.absf %739 : vector<16x1xf32>
    %cst_239 = arith.constant 0.000000e+00 : f32
    %754 = vector.broadcast %cst_239 : f32 to vector<16x1xf32>
    %755 = arith.subf %754, %753 : vector<16x1xf32>
    %756 = math.exp %755 : vector<16x1xf32>
    %757 = math.log1p %756 : vector<16x1xf32>
    %758 = arith.subf %752, %757 : vector<16x1xf32>
    %cst_240 = arith.constant 0.000000e+00 : f32
    %759 = vector.broadcast %cst_240 : f32 to vector<16x1xf32>
    %760 = arith.subf %759, %740 : vector<16x1xf32>
    %cst_241 = arith.constant 0.000000e+00 : f32
    %761 = vector.broadcast %cst_241 : f32 to vector<16x1xf32>
    %762 = arith.minimumf %760, %761 : vector<16x1xf32>
    %763 = math.absf %760 : vector<16x1xf32>
    %cst_242 = arith.constant 0.000000e+00 : f32
    %764 = vector.broadcast %cst_242 : f32 to vector<16x1xf32>
    %765 = arith.subf %764, %763 : vector<16x1xf32>
    %766 = math.exp %765 : vector<16x1xf32>
    %767 = math.log1p %766 : vector<16x1xf32>
    %768 = arith.subf %762, %767 : vector<16x1xf32>
    %769 = arith.addf %758, %768 : vector<16x1xf32>
    %cst_243 = arith.constant 0.000000e+00 : f32
    %770 = vector.broadcast %cst_243 : f32 to vector<16x1xf32>
    %771 = arith.minimumf %739, %770 : vector<16x1xf32>
    %772 = math.absf %739 : vector<16x1xf32>
    %cst_244 = arith.constant 0.000000e+00 : f32
    %773 = vector.broadcast %cst_244 : f32 to vector<16x1xf32>
    %774 = arith.subf %773, %772 : vector<16x1xf32>
    %775 = math.exp %774 : vector<16x1xf32>
    %776 = math.log1p %775 : vector<16x1xf32>
    %777 = arith.subf %771, %776 : vector<16x1xf32>
    %cst_245 = arith.constant 0.000000e+00 : f32
    %778 = vector.broadcast %cst_245 : f32 to vector<16x1xf32>
    %779 = arith.minimumf %740, %778 : vector<16x1xf32>
    %780 = math.absf %740 : vector<16x1xf32>
    %cst_246 = arith.constant 0.000000e+00 : f32
    %781 = vector.broadcast %cst_246 : f32 to vector<16x1xf32>
    %782 = arith.subf %781, %780 : vector<16x1xf32>
    %783 = math.exp %782 : vector<16x1xf32>
    %784 = math.log1p %783 : vector<16x1xf32>
    %785 = arith.subf %779, %784 : vector<16x1xf32>
    %786 = arith.addf %777, %785 : vector<16x1xf32>
    %787 = tpu.concatenate %750, %769, %786 in 1 : vector<16x1xf32>, vector<16x1xf32>, vector<16x1xf32> -> vector<16x3xf32>
    %c0_247 = arith.constant 0 : index
    %c0_248 = arith.constant 0 : index
    %788 = vector.load %arg16[%c0_247, %c0_248] : memref<16x3xf32, #tpu.memory_space<vmem>>, vector<16x3xf32>
    tpu.vector_store %arg16[%c0_247, %c0_248], %787 {strides = array<i32>} : memref<16x3xf32, #tpu.memory_space<vmem>>, vector<16x3xf32>,
    return
  }
}

</mosaic_0001>

<llo_original>
// kernel: tokenizer_forward.1
$region0: #{tokenizer_forward.1}
  #allocation0 [shape = 'u32[]', space=smem, size = 0x4, offset = 0x4, fixed_abs, tag = 'smem constant byte address 0x4 - core index']
  #allocation1 [shape = 'u32[72,128]{1,0:T(1,128)}', space=vmem, size = 0x9000, scoped, tag = 'internal scratch']
  #allocation2 [shape = 'f32[16,64]{1,0:T(8,128)}', space=vmem, size = 0x2000, scoped, tag = 'scratch operand']
  %s0 = inlined_call_operand.vmem [shape: f32[16,32], index: 0, kind: input, shape index: {}]
  %s1 = inlined_call_operand.vmem [shape: f32[2,32], index: 1, kind: input, shape index: {}]
  %s2 = inlined_call_operand.vmem [shape: f32[16,32], index: 2, kind: input, shape index: {}]
  %s3 = inlined_call_operand.vmem [shape: bf16[68,256], index: 3, kind: input, shape index: {}]
  %s4 = inlined_call_operand.vmem [shape: bf16[64,256], index: 4, kind: input, shape index: {}]
  %s5 = inlined_call_operand.vmem [shape: bf16[64,256], index: 5, kind: input, shape index: {}]
  %s6 = inlined_call_operand.vmem [shape: bf16[64,256], index: 6, kind: input, shape index: {}]
  %s7 = inlined_call_operand.vmem [shape: bf16[64,256], index: 7, kind: input, shape index: {}]
  %s8 = inlined_call_operand.vmem [shape: bf16[64,256], index: 8, kind: input, shape index: {}]
  %s9 = inlined_call_operand.vmem [shape: f32[1,256], index: 9, kind: input, shape index: {}]
  %s10 = inlined_call_operand.vmem [shape: f32[1,256], index: 10, kind: input, shape index: {}]
  %s11 = inlined_call_operand.vmem [shape: f32[1,256], index: 11, kind: input, shape index: {}]
  %s12 = inlined_call_operand.vmem [shape: bf16[576,192], index: 12, kind: input, shape index: {}]
  %s13 = inlined_call_operand.vmem [shape: f32[1,192], index: 13, kind: input, shape index: {}]
  %s14 = inlined_call_operand.vmem [shape: bf16[64,2], index: 14, kind: input, shape index: {}]
  %s15 = inlined_call_operand.vmem [shape: f32[1,2], index: 15, kind: input, shape index: {}]
  %s16 = inlined_call_operand.vmem [shape: f32[16,3], index: 16, kind: output, shape index: {}]
  %s17 = sld [smem:[#allocation0]]
  $region74: #{tokenizer_forward.1} parent=0
    _
  %s19 = ssub.s32 1, %s17
  %s20 = scalar_select 0, %s19, %s17
  // Predicated region
  $region2: #{tokenizer_forward.1} parent=0 // pred_check
    _
  $region3: #{tokenizer_forward.1} parent=0 // pred_check_branch
    %22 = sbr.rel (0) target = $region5
  $region4: #{tokenizer_forward.1} parent=0 // pred_region
    _
  $region5: #{tokenizer_forward.1} parent=0 // pred_fallthru
    _
  // Predicated region
  $region6: #{tokenizer_forward.1} parent=0 // pred_check
    _
  $region7: #{tokenizer_forward.1} parent=0 // pred_check_branch
    %24 = sbr.rel (0) target = $region9
  $region8: #{tokenizer_forward.1} parent=0 // pred_region
    _
  $region9: #{tokenizer_forward.1} parent=0 // pred_fallthru
    _
  // Predicated region
  $region10: #{tokenizer_forward.1} parent=0 // pred_check
    _
  $region11: #{tokenizer_forward.1} parent=0 // pred_check_branch
    %26 = sbr.rel (0) target = $region13
  $region12: #{tokenizer_forward.1} parent=0 // pred_region
    _
  $region13: #{tokenizer_forward.1} parent=0 // pred_fallthru
    _
  // Predicated region
  $region14: #{tokenizer_forward.1} parent=0 // pred_check
    _
  $region15: #{tokenizer_forward.1} parent=0 // pred_check_branch
    %28 = sbr.rel (0) target = $region17
  $region16: #{tokenizer_forward.1} parent=0 // pred_region
    _
  $region17: #{tokenizer_forward.1} parent=0 // pred_fallthru
    _
  // Predicated region
  $region18: #{tokenizer_forward.1} parent=0 // pred_check
    _
  $region19: #{tokenizer_forward.1} parent=0 // pred_check_branch
    %30 = sbr.rel (0) target = $region21
  $region20: #{tokenizer_forward.1} parent=0 // pred_region
    _
  $region21: #{tokenizer_forward.1} parent=0 // pred_fallthru
    _
  // Predicated region
  $region22: #{tokenizer_forward.1} parent=0 // pred_check
    _
  $region23: #{tokenizer_forward.1} parent=0 // pred_check_branch
    %32 = sbr.rel (0) target = $region25
  $region24: #{tokenizer_forward.1} parent=0 // pred_region
    _
  $region25: #{tokenizer_forward.1} parent=0 // pred_fallthru
    _
  // Predicated region
  $region26: #{tokenizer_forward.1} parent=0 // pred_check
    _
  $region27: #{tokenizer_forward.1} parent=0 // pred_check_branch
    %34 = sbr.rel (0) target = $region29
  $region28: #{tokenizer_forward.1} parent=0 // pred_region
    _
  $region29: #{tokenizer_forward.1} parent=0 // pred_fallthru
    _
  // Predicated region
  $region30: #{tokenizer_forward.1} parent=0 // pred_check
    _
  $region31: #{tokenizer_forward.1} parent=0 // pred_check_branch
    %36 = sbr.rel (0) target = $region33
  $region32: #{tokenizer_forward.1} parent=0 // pred_region
    _
  $region33: #{tokenizer_forward.1} parent=0 // pred_fallthru
    _
  // Predicated region
  $region34: #{tokenizer_forward.1} parent=0 // pred_check
    _
  $region35: #{tokenizer_forward.1} parent=0 // pred_check_branch
    %38 = sbr.rel (0) target = $region37
  $region36: #{tokenizer_forward.1} parent=0 // pred_region
    _
  $region37: #{tokenizer_forward.1} parent=0 // pred_fallthru
    _
  // Predicated region
  $region38: #{tokenizer_forward.1} parent=0 // pred_check
    _
  $region39: #{tokenizer_forward.1} parent=0 // pred_check_branch
    %40 = sbr.rel (0) target = $region41
  $region40: #{tokenizer_forward.1} parent=0 // pred_region
    _
  $region41: #{tokenizer_forward.1} parent=0 // pred_fallthru
    _
  // Predicated region
  $region42: #{tokenizer_forward.1} parent=0 // pred_check
    _
  $region43: #{tokenizer_forward.1} parent=0 // pred_check_branch
    %42 = sbr.rel (0) target = $region45
  $region44: #{tokenizer_forward.1} parent=0 // pred_region
    _
  $region45: #{tokenizer_forward.1} parent=0 // pred_fallthru
    _
  // Predicated region
  $region46: #{tokenizer_forward.1} parent=0 // pred_check
    _
  $region47: #{tokenizer_forward.1} parent=0 // pred_check_branch
    %44 = sbr.rel (0) target = $region49
  $region48: #{tokenizer_forward.1} parent=0 // pred_region
    _
  $region49: #{tokenizer_forward.1} parent=0 // pred_fallthru
    _
  // Predicated region
  $region50: #{tokenizer_forward.1} parent=0 // pred_check
    _
  $region51: #{tokenizer_forward.1} parent=0 // pred_check_branch
    %46 = sbr.rel (0) target = $region53
  $region52: #{tokenizer_forward.1} parent=0 // pred_region
    _
  $region53: #{tokenizer_forward.1} parent=0 // pred_fallthru
    _
  // Predicated region
  $region54: #{tokenizer_forward.1} parent=0 // pred_check
    _
  $region55: #{tokenizer_forward.1} parent=0 // pred_check_branch
    %48 = sbr.rel (0) target = $region57
  $region56: #{tokenizer_forward.1} parent=0 // pred_region
    _
  $region57: #{tokenizer_forward.1} parent=0 // pred_fallthru
    _
  // Predicated region
  $region58: #{tokenizer_forward.1} parent=0 // pred_check
    _
  $region59: #{tokenizer_forward.1} parent=0 // pred_check_branch
    %50 = sbr.rel (0) target = $region61
  $region60: #{tokenizer_forward.1} parent=0 // pred_region
    _
  $region61: #{tokenizer_forward.1} parent=0 // pred_fallthru
    _
  // Predicated region
  $region62: #{tokenizer_forward.1} parent=0 // pred_check
    _
  $region63: #{tokenizer_forward.1} parent=0 // pred_check_branch
    %52 = sbr.rel (0) target = $region65
  $region64: #{tokenizer_forward.1} parent=0 // pred_region
    _
  $region65: #{tokenizer_forward.1} parent=0 // pred_fallthru
    _
  %v54 = vlaneseq
  %v55 = vand.u32 %v54, 127
  %v56 = vadd.s32 %v55, 128
  %vm57 = vcmp.lt.s32.totalorder %v55, 0
  %v58 = vsub.s32 0, %v55
  %v59 = vsel %vm57, %v58, %v55
  %v60 = vshrl.u32 %v59, 6
  %v61 = vand.u32 %v59, 63
  %v62 = vsub.s32 0, %v61
  %v63 = vsel %vm57, %v62, %v61
  %vm64 = vcmp.lt.s32.totalorder %v56, 0
  %v65 = vsub.s32 0, %v56
  %v66 = vsel %vm64, %v65, %v56
  %v67 = vshrl.u32 %v66, 6
  %v68 = vand.u32 %v66, 63
  %v69 = vsub.s32 0, %v68
  %v70 = vsel %vm64, %v69, %v68
  %vm71 = vcmp.ne.s32.totalorder %v63, 0
  %vm72 = vcmp.ne.s32.totalorder %v70, 0
  %vm73 = vcmp.lt.s32.totalorder %v63, 0
  %vm74 = vcmp.lt.s32.totalorder %v70, 0
  %vm75 = vmand %vm73, %vm71
  %vm76 = vmand %vm74, %vm72
  %v77 = vadd.s32 %v63, 64
  %v78 = vadd.s32 %v70, 64
  %v79 = vsel %vm75, %v77, %v63
  %v80 = vsel %vm76, %v78, %v70
  %vm81 = vcmp.lt.s32.totalorder %v79, 32
  %vm82 = vcmp.lt.s32.totalorder %v80, 32
  %v83 = vld [vmem:[%s1] sm:$0x3]
  %v85 = vrot.slane %v83, 6
  %86 = vrot.lane.b32.xlu0 %v85, 124
  %v87 = vpop.permute.xlu0 %86
  %v89 = vrot.slane %v83, 4
  %90 = vrot.lane.b32.xlu0 %v89, 120
  %v91 = vpop.permute.xlu0 %90
  %v93 = vrot.slane %v83, 2
  %94 = vrot.lane.b32.xlu0 %v93, 116
  %v95 = vpop.permute.xlu0 %94
  %97 = vrot.lane.b32.xlu0 %v83, 112
  %v98 = vpop.permute.xlu0 %97
  %100 = vrot.lane.b32.xlu0 %v85, 108
  %v101 = vpop.permute.xlu0 %100
  %103 = vrot.lane.b32.xlu0 %v89, 104
  %v104 = vpop.permute.xlu0 %103
  %106 = vrot.lane.b32.xlu0 %v93, 100
  %v107 = vpop.permute.xlu0 %106
  %vm109 = vcmask 1041408
  %v110 = vsel %vm109, %v83, %v87
  %vm111 = vcmask 1043456
  %v112 = vsel %vm111, %v110, %v91
  %vm113 = vcmask 1045504
  %v114 = vsel %vm113, %v112, %v95
  %v115 = vsel %vm109, %v98, %v101
  %v116 = vsel %vm111, %v115, %v104
  %v117 = vsel %vm113, %v116, %v107
  %v118 = vld [vmem:[%s0] sm:$0xff]
  %v119 = vld [vmem:[%s0 + $0x8] sm:$0xff]
  %v120 = vld [vmem:[%s2] sm:$0xff]
  %v121 = vld [vmem:[%s2 + $0x8] sm:$0xff]
  %124 = vrot.lane.b32.xlu0 %v114, 32
  %v125 = vpop.permute.xlu0 %124
  %126 = vrot.lane.b32.xlu0 %v117, 32
  %v127 = vpop.permute.xlu0 %126
  %132 = vrot.lane.b32.xlu0 %v120, 36
  %v133 = vpop.permute.xlu0 %132
  %134 = vrot.lane.b32.xlu0 %v121, 36
  %v135 = vpop.permute.xlu0 %134
  %vm138 = vcmask 261120
  %v139 = vsel %vm138, %v118, %v125
  %v140 = vsel %vm138, %v119, %v127
  %vm141 = vcmask 293888
  %v142 = vsel %vm141, %v139, %v133
  %v143 = vsel %vm141, %v140, %v135
  %v144 = vpack.c.bf16 %v143, %v142
  %v145 = vld [vmem:[%s3] sm:$0xff]
  %v146 = vld [vmem:[%s3 + $0x8] sm:$0xff]
  %v147 = vld [vmem:[%s3 + $0x10] sm:$0xff]
  %v148 = vld [vmem:[%s3 + $0x18] sm:$0xff]
  %v149 = vld [vmem:[%s3 + $0x20] sm:$0xff]
  %v150 = vld [vmem:[%s3 + $0x28] sm:$0xff]
  %v151 = vld [vmem:[%s3 + $0x30] sm:$0xff]
  %v152 = vld [vmem:[%s3 + $0x38] sm:$0xff]
  %v153 = vld [vmem:[%s3 + $0x40] sm:$0x33]
  %v154 = vld [vmem:[%s9] sm:$0x3]
  %v156 = vperm.slane %v154, 0
  %v157 = vperm.slane %v154, 1
  %v169 = vunpack.c.l.b16 %v145
  %v170 = vunpack.c.h.b16 %v145
  %v171 = vunpack.c.l.b16 %v146
  %v172 = vunpack.c.h.b16 %v146
  %v173 = vunpack.c.l.b16 %v147
  %v174 = vunpack.c.h.b16 %v147
  %v175 = vunpack.c.l.b16 %v148
  %v176 = vunpack.c.h.b16 %v148
  %v177 = vunpack.c.l.b16 %v149
  %v178 = vunpack.c.h.b16 %v149
  %v179 = vunpack.c.l.b16 %v150
  %v180 = vunpack.c.h.b16 %v150
  %v181 = vunpack.c.l.b16 %v151
  %v182 = vunpack.c.h.b16 %v151
  %v183 = vunpack.c.l.b16 %v152
  %v184 = vunpack.c.h.b16 %v152
  %v185 = vunpack.c.l.b16 %v153
  %v186 = vunpack.c.h.b16 %v153
  %v187 = vpack.c.b16 %v171, %v169
  %v188 = vpack.c.b16 %v172, %v170
  %v189 = vpack.c.b16 %v175, %v173
  %v190 = vpack.c.b16 %v176, %v174
  %v191 = vpack.c.b16 %v179, %v177
  %v192 = vpack.c.b16 %v180, %v178
  %v193 = vpack.c.b16 %v183, %v181
  %v194 = vpack.c.b16 %v184, %v182
  %v195 = vpack.c.b16 %v185, %v185
  %v196 = vpack.c.b16 %v186, %v186
  %vm205 = vcmask 556032
  %v207 = vsel %vm205, %v144, 0
  %v210 = vsel %vm109, %v195, 0
  %v213 = vsel %vm109, %v196, 0
  %215 = vmatpush.bf16.msra.mxu0 0
  %216 = vmatpush.bf16.msra.mxu0 0
  %217 = vmatpush.bf16.msra.mxu0 0
  %218 = vmatpush.bf16.msra.mxu0 %v210
  %219 = vmatpush.bf16.msra.mxu0 %v193
  %220 = vmatpush.bf16.msra.mxu0 %v191
  %221 = vmatpush.bf16.msra.mxu0 %v189
  %222 = vmatpush.bf16.msra.mxu0 %v187
  %223 = vmatmul.bf16.gmra.mxu0 %v207
  %v224 = vpop.f32.mrf.mxu0
  %v225 = vadd.f32 %v156, %v224
  %v226 = vpop.f32.mrf.mxu0
  %v227 = vadd.f32 %v156, %v226
  %228 = vdwg.mxu0
  %229 = vmatpush.bf16.msra.mxu0 0
  %230 = vmatpush.bf16.msra.mxu0 0
  %231 = vmatpush.bf16.msra.mxu0 0
  %232 = vmatpush.bf16.msra.mxu0 %v213
  %233 = vmatpush.bf16.msra.mxu0 %v194
  %234 = vmatpush.bf16.msra.mxu0 %v192
  %235 = vmatpush.bf16.msra.mxu0 %v190
  %236 = vmatpush.bf16.msra.mxu0 %v188
  %237 = vmatmul.bf16.gmra.mxu0 %v207
  %v238 = vpop.f32.mrf.mxu0
  %v239 = vadd.f32 %v157, %v238
  %v240 = vpop.f32.mrf.mxu0
  %v241 = vadd.f32 %v157, %v240
  %242 = vdwg.mxu0
  %v243 = vld [vmem:[%s6] sm:$0xff]
  %v244 = vld [vmem:[%s6 + $0x8] sm:$0xff]
  %v245 = vld [vmem:[%s6 + $0x10] sm:$0xff]
  %v246 = vld [vmem:[%s6 + $0x18] sm:$0xff]
  %v247 = vld [vmem:[%s6 + $0x20] sm:$0xff]
  %v248 = vld [vmem:[%s6 + $0x28] sm:$0xff]
  %v249 = vld [vmem:[%s6 + $0x30] sm:$0xff]
  %v250 = vld [vmem:[%s6 + $0x38] sm:$0xff]
  %v253 = vrot.slane %v227, 6
  %v254 = vrot.slane %v241, 6
  %v257 = vsel %vm81, %v225, %v253
  %v258 = vsel %vm82, %v239, %v254
  %v267 = vunpack.c.l.b16 %v243
  %v268 = vunpack.c.h.b16 %v243
  %v269 = vunpack.c.l.b16 %v244
  %v270 = vunpack.c.h.b16 %v244
  %v271 = vunpack.c.l.b16 %v245
  %v272 = vunpack.c.h.b16 %v245
  %v273 = vunpack.c.l.b16 %v246
  %v274 = vunpack.c.h.b16 %v246
  %v275 = vunpack.c.l.b16 %v247
  %v276 = vunpack.c.h.b16 %v247
  %v277 = vunpack.c.l.b16 %v248
  %v278 = vunpack.c.h.b16 %v248
  %v279 = vunpack.c.l.b16 %v249
  %v280 = vunpack.c.h.b16 %v249
  %v281 = vunpack.c.l.b16 %v250
  %v282 = vunpack.c.h.b16 %v250
  %v283 = vpack.c.b16 %v269, %v267
  %v284 = vpack.c.b16 %v270, %v268
  %v285 = vpack.c.b16 %v273, %v271
  %v286 = vpack.c.b16 %v274, %v272
  %v287 = vpack.c.b16 %v277, %v275
  %v288 = vpack.c.b16 %v278, %v276
  %v289 = vpack.c.b16 %v281, %v279
  %v290 = vpack.c.b16 %v282, %v280
  %vm299 = vcmask 523264
  %v301 = vsel %vm299, 0, 0
  %303 = vmatpush.bf16.msra.mxu0 0
  %304 = vmatpush.bf16.msra.mxu0 0
  %305 = vmatpush.bf16.msra.mxu0 0
  %306 = vmatpush.bf16.msra.mxu0 0
  %307 = vmatpush.bf16.msra.mxu0 %v289
  %308 = vmatpush.bf16.msra.mxu0 %v287
  %309 = vmatpush.bf16.msra.mxu0 %v285
  %310 = vmatpush.bf16.msra.mxu0 %v283
  %311 = vmatmul.bf16.gmra.mxu0 %v301
  %v312 = vpop.f32.mrf.mxu0
  %v313 = vadd.f32 0.0, %v312
  %v314 = vpop.f32.mrf.mxu0
  %315 = vdwg.mxu0
  %316 = vmatpush.bf16.msra.mxu0 0
  %317 = vmatpush.bf16.msra.mxu0 0
  %318 = vmatpush.bf16.msra.mxu0 0
  %319 = vmatpush.bf16.msra.mxu0 0
  %320 = vmatpush.bf16.msra.mxu0 %v290
  %321 = vmatpush.bf16.msra.mxu0 %v288
  %322 = vmatpush.bf16.msra.mxu0 %v286
  %323 = vmatpush.bf16.msra.mxu0 %v284
  %324 = vmatmul.bf16.gmra.mxu0 %v301
  %v325 = vpop.f32.mrf.mxu0
  %v326 = vadd.f32 0.0, %v325
  %v327 = vpop.f32.mrf.mxu0
  %328 = vdwg.mxu0
  %v329 = vadd.f32 %v257, %v313
  %v330 = vadd.f32 %v258, %v326
  %v331 = vmul.f32 %v329, 0.5
  %v332 = vmul.f32 %v330, 0.5
  %v333 = vtanh.pop %v331
  %v334 = vtanh.pop %v332
  %v335 = vmul.f32 %v333, 0.5
  %v336 = vmul.f32 %v334, 0.5
  %v337 = vadd.f32 %v335, 0.5
  %v338 = vadd.f32 %v336, 0.5
  %v339 = vtanh.pop %v330
  %v340 = vmul.f32 %v337, 0.0
  %v341 = vmul.f32 %v337, %v339
  %343 = vrot.lane.b32.xlu0 %v341, 64
  %v344 = vpop.permute.xlu0 %343
  %v346 = vadd.f32 %v340, %v344
  %v347 = vtanh.pop %v346
  %v348 = vmul.f32 %v338, %v347
  %350 = vrot.lane.b32.xlu0 %v348, 64
  %v351 = vpop.permute.xlu0 %350
  %vm353 = vcmask 254976
  %354 = vst.msk [vmem:[#allocation2] sm:$0x3] %vm353, %v351
  %vm355 = vcmask 517376
  %356 = vst.msk [vmem:[#allocation2 + $0xe] sm:$0x3] %vm355, %v351
  %v357 = vrot.slane %v227, 2
  %v358 = vrot.slane %v241, 2
  %v361 = vsel %vm81, %v225, %v357
  %v362 = vsel %vm82, %v239, %v358
  %v363 = vpack.c.bf16 %v348, %v348
  %365 = vrot.lane.b32.xlu0 %v363, 64
  %v366 = vpop.permute.xlu0 %365
  %v368 = vsel %vm299, %v366, 0
  %370 = vmatpush.bf16.msra.mxu0 0
  %371 = vmatpush.bf16.msra.mxu0 0
  %372 = vmatpush.bf16.msra.mxu0 0
  %373 = vmatpush.bf16.msra.mxu0 0
  %374 = vmatpush.bf16.msra.mxu0 %v289
  %375 = vmatpush.bf16.msra.mxu0 %v287
  %376 = vmatpush.bf16.msra.mxu0 %v285
  %377 = vmatpush.bf16.msra.mxu0 %v283
  %378 = vmatmul.bf16.gmra.mxu0 %v368
  %v379 = vpop.f32.mrf.mxu0
  %v380 = vadd.f32 0.0, %v379
  %v381 = vpop.f32.mrf.mxu0
  %382 = vdwg.mxu0
  %383 = vmatpush.bf16.msra.mxu0 0
  %384 = vmatpush.bf16.msra.mxu0 0
  %385 = vmatpush.bf16.msra.mxu0 0
  %386 = vmatpush.bf16.msra.mxu0 0
  %387 = vmatpush.bf16.msra.mxu0 %v290
  %388 = vmatpush.bf16.msra.mxu0 %v288
  %389 = vmatpush.bf16.msra.mxu0 %v286
  %390 = vmatpush.bf16.msra.mxu0 %v284
  %391 = vmatmul.bf16.gmra.mxu0 %v368
  %v392 = vpop.f32.mrf.mxu0
  %v393 = vadd.f32 0.0, %v392
  %v394 = vpop.f32.mrf.mxu0
  %395 = vdwg.mxu0
  %v398 = vrot.slane %v380, 6
  %v399 = vrot.slane %v393, 6
  %v402 = vadd.f32 %v361, %v398
  %v403 = vadd.f32 %v362, %v399
  %v404 = vmul.f32 %v402, 0.5
  %v405 = vmul.f32 %v403, 0.5
  %v406 = vtanh.pop %v404
  %v407 = vtanh.pop %v405
  %v408 = vmul.f32 %v406, 0.5
  %v409 = vmul.f32 %v407, 0.5
  %v410 = vadd.f32 %v408, 0.5
  %v411 = vadd.f32 %v409, 0.5
  %v412 = vtanh.pop %v403
  %v414 = vrot.slane %v346, 6
  %v416 = vmul.f32 %v410, %v414
  %v417 = vmul.f32 %v410, %v412
  %419 = vrot.lane.b32.xlu0 %v417, 64
  %v420 = vpop.permute.xlu0 %419
  %v422 = vadd.f32 %v416, %v420
  %v423 = vtanh.pop %v422
  %v424 = vmul.f32 %v411, %v423
  %426 = vrot.lane.b32.xlu0 %v424, 64
  %v427 = vpop.permute.xlu0 %426
  %vm429 = vcmask 257026
  %430 = vst.msk [vmem:[#allocation2] sm:$0xc] %vm429, %v427
  %vm431 = vcmask 519426
  %432 = vst.msk [vmem:[#allocation2 + $0xa] sm:$0xc] %vm431, %v427
  %v433 = vpack.c.bf16 %v424, %v424
  %v435 = vrot.slane %v433, 1
  %436 = vrot.lane.b32.xlu0 %v435, 64
  %v437 = vpop.permute.xlu0 %436
  %v439 = vsel %vm299, %v437, 0
  %441 = vmatpush.bf16.msra.mxu0 0
  %442 = vmatpush.bf16.msra.mxu0 0
  %443 = vmatpush.bf16.msra.mxu0 0
  %444 = vmatpush.bf16.msra.mxu0 0
  %445 = vmatpush.bf16.msra.mxu0 %v289
  %446 = vmatpush.bf16.msra.mxu0 %v287
  %447 = vmatpush.bf16.msra.mxu0 %v285
  %448 = vmatpush.bf16.msra.mxu0 %v283
  %449 = vmatmul.bf16.gmra.mxu0 %v439
  %v450 = vpop.f32.mrf.mxu0
  %v451 = vadd.f32 0.0, %v450
  %v452 = vpop.f32.mrf.mxu0
  %453 = vdwg.mxu0
  %454 = vmatpush.bf16.msra.mxu0 0
  %455 = vmatpush.bf16.msra.mxu0 0
  %456 = vmatpush.bf16.msra.mxu0 0
  %457 = vmatpush.bf16.msra.mxu0 0
  %458 = vmatpush.bf16.msra.mxu0 %v290
  %459 = vmatpush.bf16.msra.mxu0 %v288
  %460 = vmatpush.bf16.msra.mxu0 %v286
  %461 = vmatpush.bf16.msra.mxu0 %v284
  %462 = vmatmul.bf16.gmra.mxu0 %v439
  %v463 = vpop.f32.mrf.mxu0
  %v464 = vadd.f32 0.0, %v463
  %v465 = vpop.f32.mrf.mxu0
  %466 = vdwg.mxu0
  %v469 = vrot.slane %v451, 4
  %v470 = vrot.slane %v464, 4
  %v473 = vadd.f32 %v257, %v469
  %v474 = vadd.f32 %v258, %v470
  %v475 = vmul.f32 %v473, 0.5
  %v476 = vmul.f32 %v474, 0.5
  %v477 = vtanh.pop %v475
  %v478 = vtanh.pop %v476
  %v479 = vmul.f32 %v477, 0.5
  %v480 = vmul.f32 %v478, 0.5
  %v481 = vadd.f32 %v479, 0.5
  %v482 = vadd.f32 %v480, 0.5
  %v483 = vtanh.pop %v474
  %v485 = vrot.slane %v422, 6
  %v487 = vmul.f32 %v481, %v485
  %v488 = vmul.f32 %v481, %v483
  %490 = vrot.lane.b32.xlu0 %v488, 64
  %v491 = vpop.permute.xlu0 %490
  %v493 = vadd.f32 %v487, %v491
  %v494 = vtanh.pop %v493
  %v495 = vmul.f32 %v482, %v494
  %497 = vrot.lane.b32.xlu0 %v495, 64
  %v498 = vpop.permute.xlu0 %497
  %vm500 = vcmask 259076
  %501 = vst.msk [vmem:[#allocation2] sm:$0x30] %vm500, %v498
  %vm502 = vcmask 521476
  %503 = vst.msk [vmem:[#allocation2 + $0x6] sm:$0x30] %vm502, %v498
  %v504 = vpack.c.bf16 %v495, %v495
  %v506 = vrot.slane %v504, 2
  %507 = vrot.lane.b32.xlu0 %v506, 64
  %v508 = vpop.permute.xlu0 %507
  %v510 = vsel %vm299, %v508, 0
  %512 = vmatpush.bf16.msra.mxu0 0
  %513 = vmatpush.bf16.msra.mxu0 0
  %514 = vmatpush.bf16.msra.mxu0 0
  %515 = vmatpush.bf16.msra.mxu0 0
  %516 = vmatpush.bf16.msra.mxu0 %v289
  %517 = vmatpush.bf16.msra.mxu0 %v287
  %518 = vmatpush.bf16.msra.mxu0 %v285
  %519 = vmatpush.bf16.msra.mxu0 %v283
  %520 = vmatmul.bf16.gmra.mxu0 %v510
  %v521 = vpop.f32.mrf.mxu0
  %v522 = vadd.f32 0.0, %v521
  %v523 = vpop.f32.mrf.mxu0
  %524 = vdwg.mxu0
  %525 = vmatpush.bf16.msra.mxu0 0
  %526 = vmatpush.bf16.msra.mxu0 0
  %527 = vmatpush.bf16.msra.mxu0 0
  %528 = vmatpush.bf16.msra.mxu0 0
  %529 = vmatpush.bf16.msra.mxu0 %v290
  %530 = vmatpush.bf16.msra.mxu0 %v288
  %531 = vmatpush.bf16.msra.mxu0 %v286
  %532 = vmatpush.bf16.msra.mxu0 %v284
  %533 = vmatmul.bf16.gmra.mxu0 %v510
  %v534 = vpop.f32.mrf.mxu0
  %v535 = vadd.f32 0.0, %v534
  %v536 = vpop.f32.mrf.mxu0
  %537 = vdwg.mxu0
  %v540 = vrot.slane %v522, 2
  %v541 = vrot.slane %v535, 2
  %v544 = vadd.f32 %v361, %v540
  %v545 = vadd.f32 %v362, %v541
  %v546 = vmul.f32 %v544, 0.5
  %v547 = vmul.f32 %v545, 0.5
  %v548 = vtanh.pop %v546
  %v549 = vtanh.pop %v547
  %v550 = vmul.f32 %v548, 0.5
  %v551 = vmul.f32 %v549, 0.5
  %v552 = vadd.f32 %v550, 0.5
  %v553 = vadd.f32 %v551, 0.5
  %v554 = vtanh.pop %v545
  %v556 = vrot.slane %v493, 6
  %v558 = vmul.f32 %v552, %v556
  %v559 = vmul.f32 %v552, %v554
  %561 = vrot.lane.b32.xlu0 %v559, 64
  %v562 = vpop.permute.xlu0 %561
  %v564 = vadd.f32 %v558, %v562
  %v565 = vtanh.pop %v564
  %v566 = vmul.f32 %v553, %v565
  %568 = vrot.lane.b32.xlu0 %v566, 64
  %v569 = vpop.permute.xlu0 %568
  %vm571 = vcmask 261126
  %572 = vst.msk [vmem:[#allocation2] sm:$0xc0] %vm571, %v569
  %vm573 = vcmask 523526
  %574 = vst.msk [vmem:[#allocation2 + $0x2] sm:$0xc0] %vm573, %v569
  %v577 = vrot.slane %v225, 6
  %v578 = vrot.slane %v239, 6
  %v581 = vsel %vm81, %v227, %v577
  %v582 = vsel %vm82, %v241, %v578
  %v583 = vpack.c.bf16 %v566, %v566
  %v585 = vrot.slane %v583, 3
  %586 = vrot.lane.b32.xlu0 %v585, 64
  %v587 = vpop.permute.xlu0 %586
  %v589 = vsel %vm299, %v587, 0
  %591 = vmatpush.bf16.msra.mxu0 0
  %592 = vmatpush.bf16.msra.mxu0 0
  %593 = vmatpush.bf16.msra.mxu0 0
  %594 = vmatpush.bf16.msra.mxu0 0
  %595 = vmatpush.bf16.msra.mxu0 %v289
  %596 = vmatpush.bf16.msra.mxu0 %v287
  %597 = vmatpush.bf16.msra.mxu0 %v285
  %598 = vmatpush.bf16.msra.mxu0 %v283
  %599 = vmatmul.bf16.gmra.mxu0 %v589
  %v600 = vpop.f32.mrf.mxu0
  %v601 = vadd.f32 0.0, %v600
  %v602 = vpop.f32.mrf.mxu0
  %603 = vdwg.mxu0
  %604 = vmatpush.bf16.msra.mxu0 0
  %605 = vmatpush.bf16.msra.mxu0 0
  %606 = vmatpush.bf16.msra.mxu0 0
  %607 = vmatpush.bf16.msra.mxu0 0
  %608 = vmatpush.bf16.msra.mxu0 %v290
  %609 = vmatpush.bf16.msra.mxu0 %v288
  %610 = vmatpush.bf16.msra.mxu0 %v286
  %611 = vmatpush.bf16.msra.mxu0 %v284
  %612 = vmatmul.bf16.gmra.mxu0 %v589
  %v613 = vpop.f32.mrf.mxu0
  %v614 = vadd.f32 0.0, %v613
  %v615 = vpop.f32.mrf.mxu0
  %616 = vdwg.mxu0
  %v617 = vadd.f32 %v581, %v601
  %v618 = vadd.f32 %v582, %v614
  %v619 = vmul.f32 %v617, 0.5
  %v620 = vmul.f32 %v618, 0.5
  %v621 = vtanh.pop %v619
  %v622 = vtanh.pop %v620
  %v623 = vmul.f32 %v621, 0.5
  %v624 = vmul.f32 %v622, 0.5
  %v625 = vadd.f32 %v623, 0.5
  %v626 = vadd.f32 %v624, 0.5
  %v627 = vtanh.pop %v618
  %v629 = vrot.slane %v564, 6
  %v631 = vmul.f32 %v625, %v629
  %v632 = vmul.f32 %v625, %v627
  %634 = vrot.lane.b32.xlu0 %v632, 64
  %v635 = vpop.permute.xlu0 %634
  %v637 = vadd.f32 %v631, %v635
  %v638 = vtanh.pop %v637
  %v639 = vmul.f32 %v626, %v638
  %641 = vrot.lane.b32.xlu0 %v639, 64
  %v642 = vpop.permute.xlu0 %641
  %644 = vst.msk [vmem:[#allocation2 + $0x8] sm:$0x3] %vm353, %v642
  %645 = vst.msk [vmem:[#allocation2 + $0x6] sm:$0x3] %vm355, %v642
  %v646 = vrot.slane %v225, 2
  %v647 = vrot.slane %v239, 2
  %v650 = vsel %vm81, %v227, %v646
  %v651 = vsel %vm82, %v241, %v647
  %v652 = vpack.c.bf16 %v639, %v639
  %654 = vrot.lane.b32.xlu0 %v652, 64
  %v655 = vpop.permute.xlu0 %654
  %v657 = vsel %vm299, %v655, 0
  %659 = vmatpush.bf16.msra.mxu0 0
  %660 = vmatpush.bf16.msra.mxu0 0
  %661 = vmatpush.bf16.msra.mxu0 0
  %662 = vmatpush.bf16.msra.mxu0 0
  %663 = vmatpush.bf16.msra.mxu0 %v289
  %664 = vmatpush.bf16.msra.mxu0 %v287
  %665 = vmatpush.bf16.msra.mxu0 %v285
  %666 = vmatpush.bf16.msra.mxu0 %v283
  %667 = vmatmul.bf16.gmra.mxu0 %v657
  %v668 = vpop.f32.mrf.mxu0
  %v669 = vadd.f32 0.0, %v668
  %v670 = vpop.f32.mrf.mxu0
  %671 = vdwg.mxu0
  %672 = vmatpush.bf16.msra.mxu0 0
  %673 = vmatpush.bf16.msra.mxu0 0
  %674 = vmatpush.bf16.msra.mxu0 0
  %675 = vmatpush.bf16.msra.mxu0 0
  %676 = vmatpush.bf16.msra.mxu0 %v290
  %677 = vmatpush.bf16.msra.mxu0 %v288
  %678 = vmatpush.bf16.msra.mxu0 %v286
  %679 = vmatpush.bf16.msra.mxu0 %v284
  %680 = vmatmul.bf16.gmra.mxu0 %v657
  %v681 = vpop.f32.mrf.mxu0
  %v682 = vadd.f32 0.0, %v681
  %v683 = vpop.f32.mrf.mxu0
  %684 = vdwg.mxu0
  %v687 = vrot.slane %v669, 6
  %v688 = vrot.slane %v682, 6
  %v691 = vadd.f32 %v650, %v687
  %v692 = vadd.f32 %v651, %v688
  %v693 = vmul.f32 %v691, 0.5
  %v694 = vmul.f32 %v692, 0.5
  %v695 = vtanh.pop %v693
  %v696 = vtanh.pop %v694
  %v697 = vmul.f32 %v695, 0.5
  %v698 = vmul.f32 %v696, 0.5
  %v699 = vadd.f32 %v697, 0.5
  %v700 = vadd.f32 %v698, 0.5
  %v701 = vtanh.pop %v692
  %v703 = vrot.slane %v637, 6
  %v705 = vmul.f32 %v699, %v703
  %v706 = vmul.f32 %v699, %v701
  %708 = vrot.lane.b32.xlu0 %v706, 64
  %v709 = vpop.permute.xlu0 %708
  %v711 = vadd.f32 %v705, %v709
  %v712 = vtanh.pop %v711
  %v713 = vmul.f32 %v700, %v712
  %715 = vrot.lane.b32.xlu0 %v713, 64
  %v716 = vpop.permute.xlu0 %715
  %718 = vst.msk [vmem:[#allocation2 + $0x8] sm:$0xc] %vm429, %v716
  %719 = vst.msk [vmem:[#allocation2 + $0x2] sm:$0xc] %vm431, %v716
  %v720 = vpack.c.bf16 %v713, %v713
  %v722 = vrot.slane %v720, 1
  %723 = vrot.lane.b32.xlu0 %v722, 64
  %v724 = vpop.permute.xlu0 %723
  %v726 = vsel %vm299, %v724, 0
  %728 = vmatpush.bf16.msra.mxu0 0
  %729 = vmatpush.bf16.msra.mxu0 0
  %730 = vmatpush.bf16.msra.mxu0 0
  %731 = vmatpush.bf16.msra.mxu0 0
  %732 = vmatpush.bf16.msra.mxu0 %v289
  %733 = vmatpush.bf16.msra.mxu0 %v287
  %734 = vmatpush.bf16.msra.mxu0 %v285
  %735 = vmatpush.bf16.msra.mxu0 %v283
  %736 = vmatmul.bf16.gmra.mxu0 %v726
  %v737 = vpop.f32.mrf.mxu0
  %v738 = vadd.f32 0.0, %v737
  %v739 = vpop.f32.mrf.mxu0
  %740 = vdwg.mxu0
  %741 = vmatpush.bf16.msra.mxu0 0
  %742 = vmatpush.bf16.msra.mxu0 0
  %743 = vmatpush.bf16.msra.mxu0 0
  %744 = vmatpush.bf16.msra.mxu0 0
  %745 = vmatpush.bf16.msra.mxu0 %v290
  %746 = vmatpush.bf16.msra.mxu0 %v288
  %747 = vmatpush.bf16.msra.mxu0 %v286
  %748 = vmatpush.bf16.msra.mxu0 %v284
  %749 = vmatmul.bf16.gmra.mxu0 %v726
  %v750 = vpop.f32.mrf.mxu0
  %v751 = vadd.f32 0.0, %v750
  %v752 = vpop.f32.mrf.mxu0
  %753 = vdwg.mxu0
  %v756 = vrot.slane %v738, 4
  %v757 = vrot.slane %v751, 4
  %v760 = vadd.f32 %v581, %v756
  %v761 = vadd.f32 %v582, %v757
  %v762 = vmul.f32 %v760, 0.5
  %v763 = vmul.f32 %v761, 0.5
  %v764 = vtanh.pop %v762
  %v765 = vtanh.pop %v763
  %v766 = vmul.f32 %v764, 0.5
  %v767 = vmul.f32 %v765, 0.5
  %v768 = vadd.f32 %v766, 0.5
  %v769 = vadd.f32 %v767, 0.5
  %v770 = vtanh.pop %v761
  %v772 = vrot.slane %v711, 6
  %v774 = vmul.f32 %v768, %v772
  %v775 = vmul.f32 %v768, %v770
  %777 = vrot.lane.b32.xlu0 %v775, 64
  %v778 = vpop.permute.xlu0 %777
  %v780 = vadd.f32 %v774, %v778
  %v781 = vtanh.pop %v780
  %v782 = vmul.f32 %v769, %v781
  %784 = vrot.lane.b32.xlu0 %v782, 64
  %v785 = vpop.permute.xlu0 %784
  %787 = vst.msk [vmem:[#allocation2 + $0x8] sm:$0x30] %vm500, %v785
  %788 = vst.msk [vmem:[#allocation2 - $0x2] sm:$0x30] %vm502, %v785
  %v789 = vpack.c.bf16 %v782, %v782
  %v791 = vrot.slane %v789, 2
  %792 = vrot.lane.b32.xlu0 %v791, 64
  %v793 = vpop.permute.xlu0 %792
  %v795 = vsel %vm299, %v793, 0
  %797 = vmatpush.bf16.msra.mxu0 0
  %798 = vmatpush.bf16.msra.mxu0 0
  %799 = vmatpush.bf16.msra.mxu0 0
  %800 = vmatpush.bf16.msra.mxu0 0
  %801 = vmatpush.bf16.msra.mxu0 %v289
  %802 = vmatpush.bf16.msra.mxu0 %v287
  %803 = vmatpush.bf16.msra.mxu0 %v285
  %804 = vmatpush.bf16.msra.mxu0 %v283
  %805 = vmatmul.bf16.gmra.mxu0 %v795
  %v806 = vpop.f32.mrf.mxu0
  %v807 = vadd.f32 0.0, %v806
  %v808 = vpop.f32.mrf.mxu0
  %809 = vdwg.mxu0
  %810 = vmatpush.bf16.msra.mxu0 0
  %811 = vmatpush.bf16.msra.mxu0 0
  %812 = vmatpush.bf16.msra.mxu0 0
  %813 = vmatpush.bf16.msra.mxu0 0
  %814 = vmatpush.bf16.msra.mxu0 %v290
  %815 = vmatpush.bf16.msra.mxu0 %v288
  %816 = vmatpush.bf16.msra.mxu0 %v286
  %817 = vmatpush.bf16.msra.mxu0 %v284
  %818 = vmatmul.bf16.gmra.mxu0 %v795
  %v819 = vpop.f32.mrf.mxu0
  %v820 = vadd.f32 0.0, %v819
  %v821 = vpop.f32.mrf.mxu0
  %822 = vdwg.mxu0
  %v825 = vrot.slane %v807, 2
  %v826 = vrot.slane %v820, 2
  %v829 = vadd.f32 %v650, %v825
  %v830 = vadd.f32 %v651, %v826
  %v831 = vmul.f32 %v829, 0.5
  %v832 = vmul.f32 %v830, 0.5
  %v833 = vtanh.pop %v831
  %v834 = vtanh.pop %v832
  %v835 = vmul.f32 %v833, 0.5
  %v836 = vmul.f32 %v834, 0.5
  %v837 = vadd.f32 %v835, 0.5
  %v838 = vadd.f32 %v836, 0.5
  %v839 = vtanh.pop %v830
  %v841 = vrot.slane %v780, 6
  %v843 = vmul.f32 %v837, %v841
  %v844 = vmul.f32 %v837, %v839
  %846 = vrot.lane.b32.xlu0 %v844, 64
  %v847 = vpop.permute.xlu0 %846
  %v849 = vadd.f32 %v843, %v847
  %v850 = vtanh.pop %v849
  %v851 = vmul.f32 %v838, %v850
  %853 = vrot.lane.b32.xlu0 %v851, 64
  %v854 = vpop.permute.xlu0 %853
  %856 = vst.msk [vmem:[#allocation2 + $0x8] sm:$0xc0] %vm571, %v854
  %857 = vst.msk [vmem:[#allocation2 - $0x6] sm:$0xc0] %vm573, %v854
  %v858 = vld [vmem:[#allocation2] sm:$0xff]
  %v859 = vld [vmem:[#allocation2 + $0x8] sm:$0xff]
  %v860 = vpack.c.bf16 %v859, %v858
  %v861 = vld [vmem:[%s4] sm:$0xff]
  %v862 = vld [vmem:[%s4 + $0x8] sm:$0xff]
  %v863 = vld [vmem:[%s4 + $0x10] sm:$0xff]
  %v864 = vld [vmem:[%s4 + $0x18] sm:$0xff]
  %v865 = vld [vmem:[%s4 + $0x20] sm:$0xff]
  %v866 = vld [vmem:[%s4 + $0x28] sm:$0xff]
  %v867 = vld [vmem:[%s4 + $0x30] sm:$0xff]
  %v868 = vld [vmem:[%s4 + $0x38] sm:$0xff]
  %v869 = vld [vmem:[%s10] sm:$0x3]
  %v871 = vperm.slane %v869, 0
  %v872 = vperm.slane %v869, 1
  %v883 = vunpack.c.l.b16 %v861
  %v884 = vunpack.c.h.b16 %v861
  %v885 = vunpack.c.l.b16 %v862
  %v886 = vunpack.c.h.b16 %v862
  %v887 = vunpack.c.l.b16 %v863
  %v888 = vunpack.c.h.b16 %v863
  %v889 = vunpack.c.l.b16 %v864
  %v890 = vunpack.c.h.b16 %v864
  %v891 = vunpack.c.l.b16 %v865
  %v892 = vunpack.c.h.b16 %v865
  %v893 = vunpack.c.l.b16 %v866
  %v894 = vunpack.c.h.b16 %v866
  %v895 = vunpack.c.l.b16 %v867
  %v896 = vunpack.c.h.b16 %v867
  %v897 = vunpack.c.l.b16 %v868
  %v898 = vunpack.c.h.b16 %v868
  %v899 = vpack.c.b16 %v885, %v883
  %v900 = vpack.c.b16 %v886, %v884
  %v901 = vpack.c.b16 %v889, %v887
  %v902 = vpack.c.b16 %v890, %v888
  %v903 = vpack.c.b16 %v893, %v891
  %v904 = vpack.c.b16 %v894, %v892
  %v905 = vpack.c.b16 %v897, %v895
  %v906 = vpack.c.b16 %v898, %v896
  %v916 = vsel %vm299, %v860, 0
  %918 = vmatpush.bf16.msra.mxu0 0
  %919 = vmatpush.bf16.msra.mxu0 0
  %920 = vmatpush.bf16.msra.mxu0 0
  %921 = vmatpush.bf16.msra.mxu0 0
  %922 = vmatpush.bf16.msra.mxu0 %v905
  %923 = vmatpush.bf16.msra.mxu0 %v903
  %924 = vmatpush.bf16.msra.mxu0 %v901
  %925 = vmatpush.bf16.msra.mxu0 %v899
  %926 = vmatmul.bf16.gmra.mxu0 %v916
  %v927 = vpop.f32.mrf.mxu0
  %v928 = vadd.f32 %v871, %v927
  %v929 = vpop.f32.mrf.mxu0
  %v930 = vadd.f32 %v871, %v929
  %931 = vdwg.mxu0
  %932 = vmatpush.bf16.msra.mxu0 0
  %933 = vmatpush.bf16.msra.mxu0 0
  %934 = vmatpush.bf16.msra.mxu0 0
  %935 = vmatpush.bf16.msra.mxu0 0
  %936 = vmatpush.bf16.msra.mxu0 %v906
  %937 = vmatpush.bf16.msra.mxu0 %v904
  %938 = vmatpush.bf16.msra.mxu0 %v902
  %939 = vmatpush.bf16.msra.mxu0 %v900
  %940 = vmatmul.bf16.gmra.mxu0 %v916
  %v941 = vpop.f32.mrf.mxu0
  %v942 = vadd.f32 %v872, %v941
  %v943 = vpop.f32.mrf.mxu0
  %v944 = vadd.f32 %v872, %v943
  %945 = vdwg.mxu0
  %v946 = vld [vmem:[%s7] sm:$0xff]
  %v947 = vld [vmem:[%s7 + $0x8] sm:$0xff]
  %v948 = vld [vmem:[%s7 + $0x10] sm:$0xff]
  %v949 = vld [vmem:[%s7 + $0x18] sm:$0xff]
  %v950 = vld [vmem:[%s7 + $0x20] sm:$0xff]
  %v951 = vld [vmem:[%s7 + $0x28] sm:$0xff]
  %v952 = vld [vmem:[%s7 + $0x30] sm:$0xff]
  %v953 = vld [vmem:[%s7 + $0x38] sm:$0xff]
  %v956 = vrot.slane %v930, 6
  %v957 = vrot.slane %v944, 6
  %v960 = vsel %vm81, %v928, %v956
  %v961 = vsel %vm82, %v942, %v957
  %v970 = vunpack.c.l.b16 %v946
  %v971 = vunpack.c.h.b16 %v946
  %v972 = vunpack.c.l.b16 %v947
  %v973 = vunpack.c.h.b16 %v947
  %v974 = vunpack.c.l.b16 %v948
  %v975 = vunpack.c.h.b16 %v948
  %v976 = vunpack.c.l.b16 %v949
  %v977 = vunpack.c.h.b16 %v949
  %v978 = vunpack.c.l.b16 %v950
  %v979 = vunpack.c.h.b16 %v950
  %v980 = vunpack.c.l.b16 %v951
  %v981 = vunpack.c.h.b16 %v951
  %v982 = vunpack.c.l.b16 %v952
  %v983 = vunpack.c.h.b16 %v952
  %v984 = vunpack.c.l.b16 %v953
  %v985 = vunpack.c.h.b16 %v953
  %v986 = vpack.c.b16 %v972, %v970
  %v987 = vpack.c.b16 %v973, %v971
  %v988 = vpack.c.b16 %v976, %v974
  %v989 = vpack.c.b16 %v977, %v975
  %v990 = vpack.c.b16 %v980, %v978
  %v991 = vpack.c.b16 %v981, %v979
  %v992 = vpack.c.b16 %v984, %v982
  %v993 = vpack.c.b16 %v985, %v983
  %1002 = vmatpush.bf16.msra.mxu0 0
  %1003 = vmatpush.bf16.msra.mxu0 0
  %1004 = vmatpush.bf16.msra.mxu0 0
  %1005 = vmatpush.bf16.msra.mxu0 0
  %1006 = vmatpush.bf16.msra.mxu0 %v992
  %1007 = vmatpush.bf16.msra.mxu0 %v990
  %1008 = vmatpush.bf16.msra.mxu0 %v988
  %1009 = vmatpush.bf16.msra.mxu0 %v986
  %1010 = vmatmul.bf16.gmra.mxu0 %v301
  %v1011 = vpop.f32.mrf.mxu0
  %v1012 = vadd.f32 0.0, %v1011
  %v1013 = vpop.f32.mrf.mxu0
  %1014 = vdwg.mxu0
  %1015 = vmatpush.bf16.msra.mxu0 0
  %1016 = vmatpush.bf16.msra.mxu0 0
  %1017 = vmatpush.bf16.msra.mxu0 0
  %1018 = vmatpush.bf16.msra.mxu0 0
  %1019 = vmatpush.bf16.msra.mxu0 %v993
  %1020 = vmatpush.bf16.msra.mxu0 %v991
  %1021 = vmatpush.bf16.msra.mxu0 %v989
  %1022 = vmatpush.bf16.msra.mxu0 %v987
  %1023 = vmatmul.bf16.gmra.mxu0 %v301
  %v1024 = vpop.f32.mrf.mxu0
  %v1025 = vadd.f32 0.0, %v1024
  %v1026 = vpop.f32.mrf.mxu0
  %1027 = vdwg.mxu0
  %v1028 = vadd.f32 %v960, %v1012
  %v1029 = vadd.f32 %v961, %v1025
  %v1030 = vmul.f32 %v1028, 0.5
  %v1031 = vmul.f32 %v1029, 0.5
  %v1032 = vtanh.pop %v1030
  %v1033 = vtanh.pop %v1031
  %v1034 = vmul.f32 %v1032, 0.5
  %v1035 = vmul.f32 %v1033, 0.5
  %v1036 = vadd.f32 %v1034, 0.5
  %v1037 = vadd.f32 %v1035, 0.5
  %v1038 = vtanh.pop %v1029
  %v1039 = vmul.f32 %v1036, 0.0
  %v1040 = vmul.f32 %v1036, %v1038
  %1042 = vrot.lane.b32.xlu0 %v1040, 64
  %v1043 = vpop.permute.xlu0 %1042
  %v1045 = vadd.f32 %v1039, %v1043
  %v1046 = vtanh.pop %v1045
  %v1047 = vmul.f32 %v1037, %v1046
  %1049 = vrot.lane.b32.xlu0 %v1047, 64
  %v1050 = vpop.permute.xlu0 %1049
  %1052 = vst.msk [vmem:[#allocation2] sm:$0x3] %vm353, %v1050
  %1053 = vst.msk [vmem:[#allocation2 + $0xe] sm:$0x3] %vm355, %v1050
  %v1054 = vrot.slane %v930, 2
  %v1055 = vrot.slane %v944, 2
  %v1058 = vsel %vm81, %v928, %v1054
  %v1059 = vsel %vm82, %v942, %v1055
  %v1060 = vpack.c.bf16 %v1047, %v1047
  %1062 = vrot.lane.b32.xlu0 %v1060, 64
  %v1063 = vpop.permute.xlu0 %1062
  %v1065 = vsel %vm299, %v1063, 0
  %1067 = vmatpush.bf16.msra.mxu0 0
  %1068 = vmatpush.bf16.msra.mxu0 0
  %1069 = vmatpush.bf16.msra.mxu0 0
  %1070 = vmatpush.bf16.msra.mxu0 0
  %1071 = vmatpush.bf16.msra.mxu0 %v992
  %1072 = vmatpush.bf16.msra.mxu0 %v990
  %1073 = vmatpush.bf16.msra.mxu0 %v988
  %1074 = vmatpush.bf16.msra.mxu0 %v986
  %1075 = vmatmul.bf16.gmra.mxu0 %v1065
  %v1076 = vpop.f32.mrf.mxu0
  %v1077 = vadd.f32 0.0, %v1076
  %v1078 = vpop.f32.mrf.mxu0
  %1079 = vdwg.mxu0
  %1080 = vmatpush.bf16.msra.mxu0 0
  %1081 = vmatpush.bf16.msra.mxu0 0
  %1082 = vmatpush.bf16.msra.mxu0 0
  %1083 = vmatpush.bf16.msra.mxu0 0
  %1084 = vmatpush.bf16.msra.mxu0 %v993
  %1085 = vmatpush.bf16.msra.mxu0 %v991
  %1086 = vmatpush.bf16.msra.mxu0 %v989
  %1087 = vmatpush.bf16.msra.mxu0 %v987
  %1088 = vmatmul.bf16.gmra.mxu0 %v1065
  %v1089 = vpop.f32.mrf.mxu0
  %v1090 = vadd.f32 0.0, %v1089
  %v1091 = vpop.f32.mrf.mxu0
  %1092 = vdwg.mxu0
  %v1095 = vrot.slane %v1077, 6
  %v1096 = vrot.slane %v1090, 6
  %v1099 = vadd.f32 %v1058, %v1095
  %v1100 = vadd.f32 %v1059, %v1096
  %v1101 = vmul.f32 %v1099, 0.5
  %v1102 = vmul.f32 %v1100, 0.5
  %v1103 = vtanh.pop %v1101
  %v1104 = vtanh.pop %v1102
  %v1105 = vmul.f32 %v1103, 0.5
  %v1106 = vmul.f32 %v1104, 0.5
  %v1107 = vadd.f32 %v1105, 0.5
  %v1108 = vadd.f32 %v1106, 0.5
  %v1109 = vtanh.pop %v1100
  %v1111 = vrot.slane %v1045, 6
  %v1113 = vmul.f32 %v1107, %v1111
  %v1114 = vmul.f32 %v1107, %v1109
  %1116 = vrot.lane.b32.xlu0 %v1114, 64
  %v1117 = vpop.permute.xlu0 %1116
  %v1119 = vadd.f32 %v1113, %v1117
  %v1120 = vtanh.pop %v1119
  %v1121 = vmul.f32 %v1108, %v1120
  %1123 = vrot.lane.b32.xlu0 %v1121, 64
  %v1124 = vpop.permute.xlu0 %1123
  %1126 = vst.msk [vmem:[#allocation2] sm:$0xc] %vm429, %v1124
  %1127 = vst.msk [vmem:[#allocation2 + $0xa] sm:$0xc] %vm431, %v1124
  %v1128 = vpack.c.bf16 %v1121, %v1121
  %v1130 = vrot.slane %v1128, 1
  %1131 = vrot.lane.b32.xlu0 %v1130, 64
  %v1132 = vpop.permute.xlu0 %1131
  %v1134 = vsel %vm299, %v1132, 0
  %1136 = vmatpush.bf16.msra.mxu0 0
  %1137 = vmatpush.bf16.msra.mxu0 0
  %1138 = vmatpush.bf16.msra.mxu0 0
  %1139 = vmatpush.bf16.msra.mxu0 0
  %1140 = vmatpush.bf16.msra.mxu0 %v992
  %1141 = vmatpush.bf16.msra.mxu0 %v990
  %1142 = vmatpush.bf16.msra.mxu0 %v988
  %1143 = vmatpush.bf16.msra.mxu0 %v986
  %1144 = vmatmul.bf16.gmra.mxu0 %v1134
  %v1145 = vpop.f32.mrf.mxu0
  %v1146 = vadd.f32 0.0, %v1145
  %v1147 = vpop.f32.mrf.mxu0
  %1148 = vdwg.mxu0
  %1149 = vmatpush.bf16.msra.mxu0 0
  %1150 = vmatpush.bf16.msra.mxu0 0
  %1151 = vmatpush.bf16.msra.mxu0 0
  %1152 = vmatpush.bf16.msra.mxu0 0
  %1153 = vmatpush.bf16.msra.mxu0 %v993
  %1154 = vmatpush.bf16.msra.mxu0 %v991
  %1155 = vmatpush.bf16.msra.mxu0 %v989
  %1156 = vmatpush.bf16.msra.mxu0 %v987
  %1157 = vmatmul.bf16.gmra.mxu0 %v1134
  %v1158 = vpop.f32.mrf.mxu0
  %v1159 = vadd.f32 0.0, %v1158
  %v1160 = vpop.f32.mrf.mxu0
  %1161 = vdwg.mxu0
  %v1164 = vrot.slane %v1146, 4
  %v1165 = vrot.slane %v1159, 4
  %v1168 = vadd.f32 %v960, %v1164
  %v1169 = vadd.f32 %v961, %v1165
  %v1170 = vmul.f32 %v1168, 0.5
  %v1171 = vmul.f32 %v1169, 0.5
  %v1172 = vtanh.pop %v1170
  %v1173 = vtanh.pop %v1171
  %v1174 = vmul.f32 %v1172, 0.5
  %v1175 = vmul.f32 %v1173, 0.5
  %v1176 = vadd.f32 %v1174, 0.5
  %v1177 = vadd.f32 %v1175, 0.5
  %v1178 = vtanh.pop %v1169
  %v1180 = vrot.slane %v1119, 6
  %v1182 = vmul.f32 %v1176, %v1180
  %v1183 = vmul.f32 %v1176, %v1178
  %1185 = vrot.lane.b32.xlu0 %v1183, 64
  %v1186 = vpop.permute.xlu0 %1185
  %v1188 = vadd.f32 %v1182, %v1186
  %v1189 = vtanh.pop %v1188
  %v1190 = vmul.f32 %v1177, %v1189
  %1192 = vrot.lane.b32.xlu0 %v1190, 64
  %v1193 = vpop.permute.xlu0 %1192
  %1195 = vst.msk [vmem:[#allocation2] sm:$0x30] %vm500, %v1193
  %1196 = vst.msk [vmem:[#allocation2 + $0x6] sm:$0x30] %vm502, %v1193
  %v1197 = vpack.c.bf16 %v1190, %v1190
  %v1199 = vrot.slane %v1197, 2
  %1200 = vrot.lane.b32.xlu0 %v1199, 64
  %v1201 = vpop.permute.xlu0 %1200
  %v1203 = vsel %vm299, %v1201, 0
  %1205 = vmatpush.bf16.msra.mxu0 0
  %1206 = vmatpush.bf16.msra.mxu0 0
  %1207 = vmatpush.bf16.msra.mxu0 0
  %1208 = vmatpush.bf16.msra.mxu0 0
  %1209 = vmatpush.bf16.msra.mxu0 %v992
  %1210 = vmatpush.bf16.msra.mxu0 %v990
  %1211 = vmatpush.bf16.msra.mxu0 %v988
  %1212 = vmatpush.bf16.msra.mxu0 %v986
  %1213 = vmatmul.bf16.gmra.mxu0 %v1203
  %v1214 = vpop.f32.mrf.mxu0
  %v1215 = vadd.f32 0.0, %v1214
  %v1216 = vpop.f32.mrf.mxu0
  %1217 = vdwg.mxu0
  %1218 = vmatpush.bf16.msra.mxu0 0
  %1219 = vmatpush.bf16.msra.mxu0 0
  %1220 = vmatpush.bf16.msra.mxu0 0
  %1221 = vmatpush.bf16.msra.mxu0 0
  %1222 = vmatpush.bf16.msra.mxu0 %v993
  %1223 = vmatpush.bf16.msra.mxu0 %v991
  %1224 = vmatpush.bf16.msra.mxu0 %v989
  %1225 = vmatpush.bf16.msra.mxu0 %v987
  %1226 = vmatmul.bf16.gmra.mxu0 %v1203
  %v1227 = vpop.f32.mrf.mxu0
  %v1228 = vadd.f32 0.0, %v1227
  %v1229 = vpop.f32.mrf.mxu0
  %1230 = vdwg.mxu0
  %v1233 = vrot.slane %v1215, 2
  %v1234 = vrot.slane %v1228, 2
  %v1237 = vadd.f32 %v1058, %v1233
  %v1238 = vadd.f32 %v1059, %v1234
  %v1239 = vmul.f32 %v1237, 0.5
  %v1240 = vmul.f32 %v1238, 0.5
  %v1241 = vtanh.pop %v1239
  %v1242 = vtanh.pop %v1240
  %v1243 = vmul.f32 %v1241, 0.5
  %v1244 = vmul.f32 %v1242, 0.5
  %v1245 = vadd.f32 %v1243, 0.5
  %v1246 = vadd.f32 %v1244, 0.5
  %v1247 = vtanh.pop %v1238
  %v1249 = vrot.slane %v1188, 6
  %v1251 = vmul.f32 %v1245, %v1249
  %v1252 = vmul.f32 %v1245, %v1247
  %1254 = vrot.lane.b32.xlu0 %v1252, 64
  %v1255 = vpop.permute.xlu0 %1254
  %v1257 = vadd.f32 %v1251, %v1255
  %v1258 = vtanh.pop %v1257
  %v1259 = vmul.f32 %v1246, %v1258
  %1261 = vrot.lane.b32.xlu0 %v1259, 64
  %v1262 = vpop.permute.xlu0 %1261
  %1264 = vst.msk [vmem:[#allocation2] sm:$0xc0] %vm571, %v1262
  %1265 = vst.msk [vmem:[#allocation2 + $0x2] sm:$0xc0] %vm573, %v1262
  %v1268 = vrot.slane %v928, 6
  %v1269 = vrot.slane %v942, 6
  %v1272 = vsel %vm81, %v930, %v1268
  %v1273 = vsel %vm82, %v944, %v1269
  %v1274 = vpack.c.bf16 %v1259, %v1259
  %v1276 = vrot.slane %v1274, 3
  %1277 = vrot.lane.b32.xlu0 %v1276, 64
  %v1278 = vpop.permute.xlu0 %1277
  %v1280 = vsel %vm299, %v1278, 0
  %1282 = vmatpush.bf16.msra.mxu0 0
  %1283 = vmatpush.bf16.msra.mxu0 0
  %1284 = vmatpush.bf16.msra.mxu0 0
  %1285 = vmatpush.bf16.msra.mxu0 0
  %1286 = vmatpush.bf16.msra.mxu0 %v992
  %1287 = vmatpush.bf16.msra.mxu0 %v990
  %1288 = vmatpush.bf16.msra.mxu0 %v988
  %1289 = vmatpush.bf16.msra.mxu0 %v986
  %1290 = vmatmul.bf16.gmra.mxu0 %v1280
  %v1291 = vpop.f32.mrf.mxu0
  %v1292 = vadd.f32 0.0, %v1291
  %v1293 = vpop.f32.mrf.mxu0
  %1294 = vdwg.mxu0
  %1295 = vmatpush.bf16.msra.mxu0 0
  %1296 = vmatpush.bf16.msra.mxu0 0
  %1297 = vmatpush.bf16.msra.mxu0 0
  %1298 = vmatpush.bf16.msra.mxu0 0
  %1299 = vmatpush.bf16.msra.mxu0 %v993
  %1300 = vmatpush.bf16.msra.mxu0 %v991
  %1301 = vmatpush.bf16.msra.mxu0 %v989
  %1302 = vmatpush.bf16.msra.mxu0 %v987
  %1303 = vmatmul.bf16.gmra.mxu0 %v1280
  %v1304 = vpop.f32.mrf.mxu0
  %v1305 = vadd.f32 0.0, %v1304
  %v1306 = vpop.f32.mrf.mxu0
  %1307 = vdwg.mxu0
  %v1308 = vadd.f32 %v1272, %v1292
  %v1309 = vadd.f32 %v1273, %v1305
  %v1310 = vmul.f32 %v1308, 0.5
  %v1311 = vmul.f32 %v1309, 0.5
  %v1312 = vtanh.pop %v1310
  %v1313 = vtanh.pop %v1311
  %v1314 = vmul.f32 %v1312, 0.5
  %v1315 = vmul.f32 %v1313, 0.5
  %v1316 = vadd.f32 %v1314, 0.5
  %v1317 = vadd.f32 %v1315, 0.5
  %v1318 = vtanh.pop %v1309
  %v1320 = vrot.slane %v1257, 6
  %v1322 = vmul.f32 %v1316, %v1320
  %v1323 = vmul.f32 %v1316, %v1318
  %1325 = vrot.lane.b32.xlu0 %v1323, 64
  %v1326 = vpop.permute.xlu0 %1325
  %v1328 = vadd.f32 %v1322, %v1326
  %v1329 = vtanh.pop %v1328
  %v1330 = vmul.f32 %v1317, %v1329
  %1332 = vrot.lane.b32.xlu0 %v1330, 64
  %v1333 = vpop.permute.xlu0 %1332
  %1335 = vst.msk [vmem:[#allocation2 + $0x8] sm:$0x3] %vm353, %v1333
  %1336 = vst.msk [vmem:[#allocation2 + $0x6] sm:$0x3] %vm355, %v1333
  %v1337 = vrot.slane %v928, 2
  %v1338 = vrot.slane %v942, 2
  %v1341 = vsel %vm81, %v930, %v1337
  %v1342 = vsel %vm82, %v944, %v1338
  %v1343 = vpack.c.bf16 %v1330, %v1330
  %1345 = vrot.lane.b32.xlu0 %v1343, 64
  %v1346 = vpop.permute.xlu0 %1345
  %v1348 = vsel %vm299, %v1346, 0
  %1350 = vmatpush.bf16.msra.mxu0 0
  %1351 = vmatpush.bf16.msra.mxu0 0
  %1352 = vmatpush.bf16.msra.mxu0 0
  %1353 = vmatpush.bf16.msra.mxu0 0
  %1354 = vmatpush.bf16.msra.mxu0 %v992
  %1355 = vmatpush.bf16.msra.mxu0 %v990
  %1356 = vmatpush.bf16.msra.mxu0 %v988
  %1357 = vmatpush.bf16.msra.mxu0 %v986
  %1358 = vmatmul.bf16.gmra.mxu0 %v1348
  %v1359 = vpop.f32.mrf.mxu0
  %v1360 = vadd.f32 0.0, %v1359
  %v1361 = vpop.f32.mrf.mxu0
  %1362 = vdwg.mxu0
  %1363 = vmatpush.bf16.msra.mxu0 0
  %1364 = vmatpush.bf16.msra.mxu0 0
  %1365 = vmatpush.bf16.msra.mxu0 0
  %1366 = vmatpush.bf16.msra.mxu0 0
  %1367 = vmatpush.bf16.msra.mxu0 %v993
  %1368 = vmatpush.bf16.msra.mxu0 %v991
  %1369 = vmatpush.bf16.msra.mxu0 %v989
  %1370 = vmatpush.bf16.msra.mxu0 %v987
  %1371 = vmatmul.bf16.gmra.mxu0 %v1348
  %v1372 = vpop.f32.mrf.mxu0
  %v1373 = vadd.f32 0.0, %v1372
  %v1374 = vpop.f32.mrf.mxu0
  %1375 = vdwg.mxu0
  %v1378 = vrot.slane %v1360, 6
  %v1379 = vrot.slane %v1373, 6
  %v1382 = vadd.f32 %v1341, %v1378
  %v1383 = vadd.f32 %v1342, %v1379
  %v1384 = vmul.f32 %v1382, 0.5
  %v1385 = vmul.f32 %v1383, 0.5
  %v1386 = vtanh.pop %v1384
  %v1387 = vtanh.pop %v1385
  %v1388 = vmul.f32 %v1386, 0.5
  %v1389 = vmul.f32 %v1387, 0.5
  %v1390 = vadd.f32 %v1388, 0.5
  %v1391 = vadd.f32 %v1389, 0.5
  %v1392 = vtanh.pop %v1383
  %v1394 = vrot.slane %v1328, 6
  %v1396 = vmul.f32 %v1390, %v1394
  %v1397 = vmul.f32 %v1390, %v1392
  %1399 = vrot.lane.b32.xlu0 %v1397, 64
  %v1400 = vpop.permute.xlu0 %1399
  %v1402 = vadd.f32 %v1396, %v1400
  %v1403 = vtanh.pop %v1402
  %v1404 = vmul.f32 %v1391, %v1403
  %1406 = vrot.lane.b32.xlu0 %v1404, 64
  %v1407 = vpop.permute.xlu0 %1406
  %1409 = vst.msk [vmem:[#allocation2 + $0x8] sm:$0xc] %vm429, %v1407
  %1410 = vst.msk [vmem:[#allocation2 + $0x2] sm:$0xc] %vm431, %v1407
  %v1411 = vpack.c.bf16 %v1404, %v1404
  %v1413 = vrot.slane %v1411, 1
  %1414 = vrot.lane.b32.xlu0 %v1413, 64
  %v1415 = vpop.permute.xlu0 %1414
  %v1417 = vsel %vm299, %v1415, 0
  %1419 = vmatpush.bf16.msra.mxu0 0
  %1420 = vmatpush.bf16.msra.mxu0 0
  %1421 = vmatpush.bf16.msra.mxu0 0
  %1422 = vmatpush.bf16.msra.mxu0 0
  %1423 = vmatpush.bf16.msra.mxu0 %v992
  %1424 = vmatpush.bf16.msra.mxu0 %v990
  %1425 = vmatpush.bf16.msra.mxu0 %v988
  %1426 = vmatpush.bf16.msra.mxu0 %v986
  %1427 = vmatmul.bf16.gmra.mxu0 %v1417
  %v1428 = vpop.f32.mrf.mxu0
  %v1429 = vadd.f32 0.0, %v1428
  %v1430 = vpop.f32.mrf.mxu0
  %1431 = vdwg.mxu0
  %1432 = vmatpush.bf16.msra.mxu0 0
  %1433 = vmatpush.bf16.msra.mxu0 0
  %1434 = vmatpush.bf16.msra.mxu0 0
  %1435 = vmatpush.bf16.msra.mxu0 0
  %1436 = vmatpush.bf16.msra.mxu0 %v993
  %1437 = vmatpush.bf16.msra.mxu0 %v991
  %1438 = vmatpush.bf16.msra.mxu0 %v989
  %1439 = vmatpush.bf16.msra.mxu0 %v987
  %1440 = vmatmul.bf16.gmra.mxu0 %v1417
  %v1441 = vpop.f32.mrf.mxu0
  %v1442 = vadd.f32 0.0, %v1441
  %v1443 = vpop.f32.mrf.mxu0
  %1444 = vdwg.mxu0
  %v1447 = vrot.slane %v1429, 4
  %v1448 = vrot.slane %v1442, 4
  %v1451 = vadd.f32 %v1272, %v1447
  %v1452 = vadd.f32 %v1273, %v1448
  %v1453 = vmul.f32 %v1451, 0.5
  %v1454 = vmul.f32 %v1452, 0.5
  %v1455 = vtanh.pop %v1453
  %v1456 = vtanh.pop %v1454
  %v1457 = vmul.f32 %v1455, 0.5
  %v1458 = vmul.f32 %v1456, 0.5
  %v1459 = vadd.f32 %v1457, 0.5
  %v1460 = vadd.f32 %v1458, 0.5
  %v1461 = vtanh.pop %v1452
  %v1463 = vrot.slane %v1402, 6
  %v1465 = vmul.f32 %v1459, %v1463
  %v1466 = vmul.f32 %v1459, %v1461
  %1468 = vrot.lane.b32.xlu0 %v1466, 64
  %v1469 = vpop.permute.xlu0 %1468
  %v1471 = vadd.f32 %v1465, %v1469
  %v1472 = vtanh.pop %v1471
  %v1473 = vmul.f32 %v1460, %v1472
  %1475 = vrot.lane.b32.xlu0 %v1473, 64
  %v1476 = vpop.permute.xlu0 %1475
  %1478 = vst.msk [vmem:[#allocation2 + $0x8] sm:$0x30] %vm500, %v1476
  %1479 = vst.msk [vmem:[#allocation2 - $0x2] sm:$0x30] %vm502, %v1476
  %v1480 = vpack.c.bf16 %v1473, %v1473
  %v1482 = vrot.slane %v1480, 2
  %1483 = vrot.lane.b32.xlu0 %v1482, 64
  %v1484 = vpop.permute.xlu0 %1483
  %v1486 = vsel %vm299, %v1484, 0
  %1488 = vmatpush.bf16.msra.mxu0 0
  %1489 = vmatpush.bf16.msra.mxu0 0
  %1490 = vmatpush.bf16.msra.mxu0 0
  %1491 = vmatpush.bf16.msra.mxu0 0
  %1492 = vmatpush.bf16.msra.mxu0 %v992
  %1493 = vmatpush.bf16.msra.mxu0 %v990
  %1494 = vmatpush.bf16.msra.mxu0 %v988
  %1495 = vmatpush.bf16.msra.mxu0 %v986
  %1496 = vmatmul.bf16.gmra.mxu0 %v1486
  %v1497 = vpop.f32.mrf.mxu0
  %v1498 = vadd.f32 0.0, %v1497
  %v1499 = vpop.f32.mrf.mxu0
  %1500 = vdwg.mxu0
  %1501 = vmatpush.bf16.msra.mxu0 0
  %1502 = vmatpush.bf16.msra.mxu0 0
  %1503 = vmatpush.bf16.msra.mxu0 0
  %1504 = vmatpush.bf16.msra.mxu0 0
  %1505 = vmatpush.bf16.msra.mxu0 %v993
  %1506 = vmatpush.bf16.msra.mxu0 %v991
  %1507 = vmatpush.bf16.msra.mxu0 %v989
  %1508 = vmatpush.bf16.msra.mxu0 %v987
  %1509 = vmatmul.bf16.gmra.mxu0 %v1486
  %v1510 = vpop.f32.mrf.mxu0
  %v1511 = vadd.f32 0.0, %v1510
  %v1512 = vpop.f32.mrf.mxu0
  %1513 = vdwg.mxu0
  %v1516 = vrot.slane %v1498, 2
  %v1517 = vrot.slane %v1511, 2
  %v1520 = vadd.f32 %v1341, %v1516
  %v1521 = vadd.f32 %v1342, %v1517
  %v1522 = vmul.f32 %v1520, 0.5
  %v1523 = vmul.f32 %v1521, 0.5
  %v1524 = vtanh.pop %v1522
  %v1525 = vtanh.pop %v1523
  %v1526 = vmul.f32 %v1524, 0.5
  %v1527 = vmul.f32 %v1525, 0.5
  %v1528 = vadd.f32 %v1526, 0.5
  %v1529 = vadd.f32 %v1527, 0.5
  %v1530 = vtanh.pop %v1521
  %v1532 = vrot.slane %v1471, 6
  %v1534 = vmul.f32 %v1528, %v1532
  %v1535 = vmul.f32 %v1528, %v1530
  %1537 = vrot.lane.b32.xlu0 %v1535, 64
  %v1538 = vpop.permute.xlu0 %1537
  %v1540 = vadd.f32 %v1534, %v1538
  %v1541 = vtanh.pop %v1540
  %v1542 = vmul.f32 %v1529, %v1541
  %1544 = vrot.lane.b32.xlu0 %v1542, 64
  %v1545 = vpop.permute.xlu0 %1544
  %1547 = vst.msk [vmem:[#allocation2 + $0x8] sm:$0xc0] %vm571, %v1545
  %1548 = vst.msk [vmem:[#allocation2 - $0x6] sm:$0xc0] %vm573, %v1545
  %v1549 = vld [vmem:[#allocation2] sm:$0xff]
  %v1550 = vld [vmem:[#allocation2 + $0x8] sm:$0xff]
  %v1551 = vpack.c.bf16 %v1550, %v1549
  %v1552 = vld [vmem:[%s5] sm:$0xff]
  %v1553 = vld [vmem:[%s5 + $0x8] sm:$0xff]
  %v1554 = vld [vmem:[%s5 + $0x10] sm:$0xff]
  %v1555 = vld [vmem:[%s5 + $0x18] sm:$0xff]
  %v1556 = vld [vmem:[%s5 + $0x20] sm:$0xff]
  %v1557 = vld [vmem:[%s5 + $0x28] sm:$0xff]
  %v1558 = vld [vmem:[%s5 + $0x30] sm:$0xff]
  %v1559 = vld [vmem:[%s5 + $0x38] sm:$0xff]
  %v1560 = vld [vmem:[%s11] sm:$0x3]
  %v1562 = vperm.slane %v1560, 0
  %v1563 = vperm.slane %v1560, 1
  %v1574 = vunpack.c.l.b16 %v1552
  %v1575 = vunpack.c.h.b16 %v1552
  %v1576 = vunpack.c.l.b16 %v1553
  %v1577 = vunpack.c.h.b16 %v1553
  %v1578 = vunpack.c.l.b16 %v1554
  %v1579 = vunpack.c.h.b16 %v1554
  %v1580 = vunpack.c.l.b16 %v1555
  %v1581 = vunpack.c.h.b16 %v1555
  %v1582 = vunpack.c.l.b16 %v1556
  %v1583 = vunpack.c.h.b16 %v1556
  %v1584 = vunpack.c.l.b16 %v1557
  %v1585 = vunpack.c.h.b16 %v1557
  %v1586 = vunpack.c.l.b16 %v1558
  %v1587 = vunpack.c.h.b16 %v1558
  %v1588 = vunpack.c.l.b16 %v1559
  %v1589 = vunpack.c.h.b16 %v1559
  %v1590 = vpack.c.b16 %v1576, %v1574
  %v1591 = vpack.c.b16 %v1577, %v1575
  %v1592 = vpack.c.b16 %v1580, %v1578
  %v1593 = vpack.c.b16 %v1581, %v1579
  %v1594 = vpack.c.b16 %v1584, %v1582
  %v1595 = vpack.c.b16 %v1585, %v1583
  %v1596 = vpack.c.b16 %v1588, %v1586
  %v1597 = vpack.c.b16 %v1589, %v1587
  %v1607 = vsel %vm299, %v1551, 0
  %1609 = vmatpush.bf16.msra.mxu0 0
  %1610 = vmatpush.bf16.msra.mxu0 0
  %1611 = vmatpush.bf16.msra.mxu0 0
  %1612 = vmatpush.bf16.msra.mxu0 0
  %1613 = vmatpush.bf16.msra.mxu0 %v1596
  %1614 = vmatpush.bf16.msra.mxu0 %v1594
  %1615 = vmatpush.bf16.msra.mxu0 %v1592
  %1616 = vmatpush.bf16.msra.mxu0 %v1590
  %1617 = vmatmul.bf16.gmra.mxu0 %v1607
  %v1618 = vpop.f32.mrf.mxu0
  %v1619 = vadd.f32 %v1562, %v1618
  %v1620 = vpop.f32.mrf.mxu0
  %v1621 = vadd.f32 %v1562, %v1620
  %1622 = vdwg.mxu0
  %1623 = vmatpush.bf16.msra.mxu0 0
  %1624 = vmatpush.bf16.msra.mxu0 0
  %1625 = vmatpush.bf16.msra.mxu0 0
  %1626 = vmatpush.bf16.msra.mxu0 0
  %1627 = vmatpush.bf16.msra.mxu0 %v1597
  %1628 = vmatpush.bf16.msra.mxu0 %v1595
  %1629 = vmatpush.bf16.msra.mxu0 %v1593
  %1630 = vmatpush.bf16.msra.mxu0 %v1591
  %1631 = vmatmul.bf16.gmra.mxu0 %v1607
  %v1632 = vpop.f32.mrf.mxu0
  %v1633 = vadd.f32 %v1563, %v1632
  %v1634 = vpop.f32.mrf.mxu0
  %v1635 = vadd.f32 %v1563, %v1634
  %1636 = vdwg.mxu0
  %v1637 = vld [vmem:[%s8] sm:$0xff]
  %v1638 = vld [vmem:[%s8 + $0x8] sm:$0xff]
  %v1639 = vld [vmem:[%s8 + $0x10] sm:$0xff]
  %v1640 = vld [vmem:[%s8 + $0x18] sm:$0xff]
  %v1641 = vld [vmem:[%s8 + $0x20] sm:$0xff]
  %v1642 = vld [vmem:[%s8 + $0x28] sm:$0xff]
  %v1643 = vld [vmem:[%s8 + $0x30] sm:$0xff]
  %v1644 = vld [vmem:[%s8 + $0x38] sm:$0xff]
  %v1647 = vrot.slane %v1621, 6
  %v1648 = vrot.slane %v1635, 6
  %v1651 = vsel %vm81, %v1619, %v1647
  %v1652 = vsel %vm82, %v1633, %v1648
  %v1661 = vunpack.c.l.b16 %v1637
  %v1662 = vunpack.c.h.b16 %v1637
  %v1663 = vunpack.c.l.b16 %v1638
  %v1664 = vunpack.c.h.b16 %v1638
  %v1665 = vunpack.c.l.b16 %v1639
  %v1666 = vunpack.c.h.b16 %v1639
  %v1667 = vunpack.c.l.b16 %v1640
  %v1668 = vunpack.c.h.b16 %v1640
  %v1669 = vunpack.c.l.b16 %v1641
  %v1670 = vunpack.c.h.b16 %v1641
  %v1671 = vunpack.c.l.b16 %v1642
  %v1672 = vunpack.c.h.b16 %v1642
  %v1673 = vunpack.c.l.b16 %v1643
  %v1674 = vunpack.c.h.b16 %v1643
  %v1675 = vunpack.c.l.b16 %v1644
  %v1676 = vunpack.c.h.b16 %v1644
  %v1677 = vpack.c.b16 %v1663, %v1661
  %v1678 = vpack.c.b16 %v1664, %v1662
  %v1679 = vpack.c.b16 %v1667, %v1665
  %v1680 = vpack.c.b16 %v1668, %v1666
  %v1681 = vpack.c.b16 %v1671, %v1669
  %v1682 = vpack.c.b16 %v1672, %v1670
  %v1683 = vpack.c.b16 %v1675, %v1673
  %v1684 = vpack.c.b16 %v1676, %v1674
  %1693 = vmatpush.bf16.msra.mxu0 0
  %1694 = vmatpush.bf16.msra.mxu0 0
  %1695 = vmatpush.bf16.msra.mxu0 0
  %1696 = vmatpush.bf16.msra.mxu0 0
  %1697 = vmatpush.bf16.msra.mxu0 %v1683
  %1698 = vmatpush.bf16.msra.mxu0 %v1681
  %1699 = vmatpush.bf16.msra.mxu0 %v1679
  %1700 = vmatpush.bf16.msra.mxu0 %v1677
  %1701 = vmatmul.bf16.gmra.mxu0 %v301
  %v1702 = vpop.f32.mrf.mxu0
  %v1703 = vadd.f32 0.0, %v1702
  %v1704 = vpop.f32.mrf.mxu0
  %1705 = vdwg.mxu0
  %1706 = vmatpush.bf16.msra.mxu0 0
  %1707 = vmatpush.bf16.msra.mxu0 0
  %1708 = vmatpush.bf16.msra.mxu0 0
  %1709 = vmatpush.bf16.msra.mxu0 0
  %1710 = vmatpush.bf16.msra.mxu0 %v1684
  %1711 = vmatpush.bf16.msra.mxu0 %v1682
  %1712 = vmatpush.bf16.msra.mxu0 %v1680
  %1713 = vmatpush.bf16.msra.mxu0 %v1678
  %1714 = vmatmul.bf16.gmra.mxu0 %v301
  %v1715 = vpop.f32.mrf.mxu0
  %v1716 = vadd.f32 0.0, %v1715
  %v1717 = vpop.f32.mrf.mxu0
  %1718 = vdwg.mxu0
  %v1719 = vadd.f32 %v1651, %v1703
  %v1720 = vadd.f32 %v1652, %v1716
  %v1721 = vmul.f32 %v1719, 0.5
  %v1722 = vmul.f32 %v1720, 0.5
  %v1723 = vtanh.pop %v1721
  %v1724 = vtanh.pop %v1722
  %v1725 = vmul.f32 %v1723, 0.5
  %v1726 = vmul.f32 %v1724, 0.5
  %v1727 = vadd.f32 %v1725, 0.5
  %v1728 = vadd.f32 %v1726, 0.5
  %v1729 = vtanh.pop %v1720
  %v1730 = vmul.f32 %v1727, 0.0
  %v1731 = vmul.f32 %v1727, %v1729
  %1733 = vrot.lane.b32.xlu0 %v1731, 64
  %v1734 = vpop.permute.xlu0 %1733
  %v1736 = vadd.f32 %v1730, %v1734
  %v1737 = vtanh.pop %v1736
  %v1738 = vmul.f32 %v1728, %v1737
  %1740 = vrot.lane.b32.xlu0 %v1738, 64
  %v1741 = vpop.permute.xlu0 %1740
  %1743 = vst.msk [vmem:[#allocation2] sm:$0x3] %vm353, %v1741
  %1744 = vst.msk [vmem:[#allocation2 + $0xe] sm:$0x3] %vm355, %v1741
  %v1745 = vrot.slane %v1621, 2
  %v1746 = vrot.slane %v1635, 2
  %v1749 = vsel %vm81, %v1619, %v1745
  %v1750 = vsel %vm82, %v1633, %v1746
  %v1751 = vpack.c.bf16 %v1738, %v1738
  %1753 = vrot.lane.b32.xlu0 %v1751, 64
  %v1754 = vpop.permute.xlu0 %1753
  %v1756 = vsel %vm299, %v1754, 0
  %1758 = vmatpush.bf16.msra.mxu0 0
  %1759 = vmatpush.bf16.msra.mxu0 0
  %1760 = vmatpush.bf16.msra.mxu0 0
  %1761 = vmatpush.bf16.msra.mxu0 0
  %1762 = vmatpush.bf16.msra.mxu0 %v1683
  %1763 = vmatpush.bf16.msra.mxu0 %v1681
  %1764 = vmatpush.bf16.msra.mxu0 %v1679
  %1765 = vmatpush.bf16.msra.mxu0 %v1677
  %1766 = vmatmul.bf16.gmra.mxu0 %v1756
  %v1767 = vpop.f32.mrf.mxu0
  %v1768 = vadd.f32 0.0, %v1767
  %v1769 = vpop.f32.mrf.mxu0
  %1770 = vdwg.mxu0
  %1771 = vmatpush.bf16.msra.mxu0 0
  %1772 = vmatpush.bf16.msra.mxu0 0
  %1773 = vmatpush.bf16.msra.mxu0 0
  %1774 = vmatpush.bf16.msra.mxu0 0
  %1775 = vmatpush.bf16.msra.mxu0 %v1684
  %1776 = vmatpush.bf16.msra.mxu0 %v1682
  %1777 = vmatpush.bf16.msra.mxu0 %v1680
  %1778 = vmatpush.bf16.msra.mxu0 %v1678
  %1779 = vmatmul.bf16.gmra.mxu0 %v1756
  %v1780 = vpop.f32.mrf.mxu0
  %v1781 = vadd.f32 0.0, %v1780
  %v1782 = vpop.f32.mrf.mxu0
  %1783 = vdwg.mxu0
  %v1786 = vrot.slane %v1768, 6
  %v1787 = vrot.slane %v1781, 6
  %v1790 = vadd.f32 %v1749, %v1786
  %v1791 = vadd.f32 %v1750, %v1787
  %v1792 = vmul.f32 %v1790, 0.5
  %v1793 = vmul.f32 %v1791, 0.5
  %v1794 = vtanh.pop %v1792
  %v1795 = vtanh.pop %v1793
  %v1796 = vmul.f32 %v1794, 0.5
  %v1797 = vmul.f32 %v1795, 0.5
  %v1798 = vadd.f32 %v1796, 0.5
  %v1799 = vadd.f32 %v1797, 0.5
  %v1800 = vtanh.pop %v1791
  %v1802 = vrot.slane %v1736, 6
  %v1804 = vmul.f32 %v1798, %v1802
  %v1805 = vmul.f32 %v1798, %v1800
  %1807 = vrot.lane.b32.xlu0 %v1805, 64
  %v1808 = vpop.permute.xlu0 %1807
  %v1810 = vadd.f32 %v1804, %v1808
  %v1811 = vtanh.pop %v1810
  %v1812 = vmul.f32 %v1799, %v1811
  %1814 = vrot.lane.b32.xlu0 %v1812, 64
  %v1815 = vpop.permute.xlu0 %1814
  %1817 = vst.msk [vmem:[#allocation2] sm:$0xc] %vm429, %v1815
  %1818 = vst.msk [vmem:[#allocation2 + $0xa] sm:$0xc] %vm431, %v1815
  %v1819 = vpack.c.bf16 %v1812, %v1812
  %v1821 = vrot.slane %v1819, 1
  %1822 = vrot.lane.b32.xlu0 %v1821, 64
  %v1823 = vpop.permute.xlu0 %1822
  %v1825 = vsel %vm299, %v1823, 0
  %1827 = vmatpush.bf16.msra.mxu0 0
  %1828 = vmatpush.bf16.msra.mxu0 0
  %1829 = vmatpush.bf16.msra.mxu0 0
  %1830 = vmatpush.bf16.msra.mxu0 0
  %1831 = vmatpush.bf16.msra.mxu0 %v1683
  %1832 = vmatpush.bf16.msra.mxu0 %v1681
  %1833 = vmatpush.bf16.msra.mxu0 %v1679
  %1834 = vmatpush.bf16.msra.mxu0 %v1677
  %1835 = vmatmul.bf16.gmra.mxu0 %v1825
  %v1836 = vpop.f32.mrf.mxu0
  %v1837 = vadd.f32 0.0, %v1836
  %v1838 = vpop.f32.mrf.mxu0
  %1839 = vdwg.mxu0
  %1840 = vmatpush.bf16.msra.mxu0 0
  %1841 = vmatpush.bf16.msra.mxu0 0
  %1842 = vmatpush.bf16.msra.mxu0 0
  %1843 = vmatpush.bf16.msra.mxu0 0
  %1844 = vmatpush.bf16.msra.mxu0 %v1684
  %1845 = vmatpush.bf16.msra.mxu0 %v1682
  %1846 = vmatpush.bf16.msra.mxu0 %v1680
  %1847 = vmatpush.bf16.msra.mxu0 %v1678
  %1848 = vmatmul.bf16.gmra.mxu0 %v1825
  %v1849 = vpop.f32.mrf.mxu0
  %v1850 = vadd.f32 0.0, %v1849
  %v1851 = vpop.f32.mrf.mxu0
  %1852 = vdwg.mxu0
  %v1855 = vrot.slane %v1837, 4
  %v1856 = vrot.slane %v1850, 4
  %v1859 = vadd.f32 %v1651, %v1855
  %v1860 = vadd.f32 %v1652, %v1856
  %v1861 = vmul.f32 %v1859, 0.5
  %v1862 = vmul.f32 %v1860, 0.5
  %v1863 = vtanh.pop %v1861
  %v1864 = vtanh.pop %v1862
  %v1865 = vmul.f32 %v1863, 0.5
  %v1866 = vmul.f32 %v1864, 0.5
  %v1867 = vadd.f32 %v1865, 0.5
  %v1868 = vadd.f32 %v1866, 0.5
  %v1869 = vtanh.pop %v1860
  %v1871 = vrot.slane %v1810, 6
  %v1873 = vmul.f32 %v1867, %v1871
  %v1874 = vmul.f32 %v1867, %v1869
  %1876 = vrot.lane.b32.xlu0 %v1874, 64
  %v1877 = vpop.permute.xlu0 %1876
  %v1879 = vadd.f32 %v1873, %v1877
  %v1880 = vtanh.pop %v1879
  %v1881 = vmul.f32 %v1868, %v1880
  %1883 = vrot.lane.b32.xlu0 %v1881, 64
  %v1884 = vpop.permute.xlu0 %1883
  %1886 = vst.msk [vmem:[#allocation2] sm:$0x30] %vm500, %v1884
  %1887 = vst.msk [vmem:[#allocation2 + $0x6] sm:$0x30] %vm502, %v1884
  %v1888 = vpack.c.bf16 %v1881, %v1881
  %v1890 = vrot.slane %v1888, 2
  %1891 = vrot.lane.b32.xlu0 %v1890, 64
  %v1892 = vpop.permute.xlu0 %1891
  %v1894 = vsel %vm299, %v1892, 0
  %1896 = vmatpush.bf16.msra.mxu0 0
  %1897 = vmatpush.bf16.msra.mxu0 0
  %1898 = vmatpush.bf16.msra.mxu0 0
  %1899 = vmatpush.bf16.msra.mxu0 0
  %1900 = vmatpush.bf16.msra.mxu0 %v1683
  %1901 = vmatpush.bf16.msra.mxu0 %v1681
  %1902 = vmatpush.bf16.msra.mxu0 %v1679
  %1903 = vmatpush.bf16.msra.mxu0 %v1677
  %1904 = vmatmul.bf16.gmra.mxu0 %v1894
  %v1905 = vpop.f32.mrf.mxu0
  %v1906 = vadd.f32 0.0, %v1905
  %v1907 = vpop.f32.mrf.mxu0
  %1908 = vdwg.mxu0
  %1909 = vmatpush.bf16.msra.mxu0 0
  %1910 = vmatpush.bf16.msra.mxu0 0
  %1911 = vmatpush.bf16.msra.mxu0 0
  %1912 = vmatpush.bf16.msra.mxu0 0
  %1913 = vmatpush.bf16.msra.mxu0 %v1684
  %1914 = vmatpush.bf16.msra.mxu0 %v1682
  %1915 = vmatpush.bf16.msra.mxu0 %v1680
  %1916 = vmatpush.bf16.msra.mxu0 %v1678
  %1917 = vmatmul.bf16.gmra.mxu0 %v1894
  %v1918 = vpop.f32.mrf.mxu0
  %v1919 = vadd.f32 0.0, %v1918
  %v1920 = vpop.f32.mrf.mxu0
  %1921 = vdwg.mxu0
  %v1924 = vrot.slane %v1906, 2
  %v1925 = vrot.slane %v1919, 2
  %v1928 = vadd.f32 %v1749, %v1924
  %v1929 = vadd.f32 %v1750, %v1925
  %v1930 = vmul.f32 %v1928, 0.5
  %v1931 = vmul.f32 %v1929, 0.5
  %v1932 = vtanh.pop %v1930
  %v1933 = vtanh.pop %v1931
  %v1934 = vmul.f32 %v1932, 0.5
  %v1935 = vmul.f32 %v1933, 0.5
  %v1936 = vadd.f32 %v1934, 0.5
  %v1937 = vadd.f32 %v1935, 0.5
  %v1938 = vtanh.pop %v1929
  %v1940 = vrot.slane %v1879, 6
  %v1942 = vmul.f32 %v1936, %v1940
  %v1943 = vmul.f32 %v1936, %v1938
  %1945 = vrot.lane.b32.xlu0 %v1943, 64
  %v1946 = vpop.permute.xlu0 %1945
  %v1948 = vadd.f32 %v1942, %v1946
  %v1949 = vtanh.pop %v1948
  %v1950 = vmul.f32 %v1937, %v1949
  %1952 = vrot.lane.b32.xlu0 %v1950, 64
  %v1953 = vpop.permute.xlu0 %1952
  %1955 = vst.msk [vmem:[#allocation2] sm:$0xc0] %vm571, %v1953
  %1956 = vst.msk [vmem:[#allocation2 + $0x2] sm:$0xc0] %vm573, %v1953
  %v1959 = vrot.slane %v1619, 6
  %v1960 = vrot.slane %v1633, 6
  %v1963 = vsel %vm81, %v1621, %v1959
  %v1964 = vsel %vm82, %v1635, %v1960
  %v1965 = vpack.c.bf16 %v1950, %v1950
  %v1967 = vrot.slane %v1965, 3
  %1968 = vrot.lane.b32.xlu0 %v1967, 64
  %v1969 = vpop.permute.xlu0 %1968
  %v1971 = vsel %vm299, %v1969, 0
  %1973 = vmatpush.bf16.msra.mxu0 0
  %1974 = vmatpush.bf16.msra.mxu0 0
  %1975 = vmatpush.bf16.msra.mxu0 0
  %1976 = vmatpush.bf16.msra.mxu0 0
  %1977 = vmatpush.bf16.msra.mxu0 %v1683
  %1978 = vmatpush.bf16.msra.mxu0 %v1681
  %1979 = vmatpush.bf16.msra.mxu0 %v1679
  %1980 = vmatpush.bf16.msra.mxu0 %v1677
  %1981 = vmatmul.bf16.gmra.mxu0 %v1971
  %v1982 = vpop.f32.mrf.mxu0
  %v1983 = vadd.f32 0.0, %v1982
  %v1984 = vpop.f32.mrf.mxu0
  %1985 = vdwg.mxu0
  %1986 = vmatpush.bf16.msra.mxu0 0
  %1987 = vmatpush.bf16.msra.mxu0 0
  %1988 = vmatpush.bf16.msra.mxu0 0
  %1989 = vmatpush.bf16.msra.mxu0 0
  %1990 = vmatpush.bf16.msra.mxu0 %v1684
  %1991 = vmatpush.bf16.msra.mxu0 %v1682
  %1992 = vmatpush.bf16.msra.mxu0 %v1680
  %1993 = vmatpush.bf16.msra.mxu0 %v1678
  %1994 = vmatmul.bf16.gmra.mxu0 %v1971
  %v1995 = vpop.f32.mrf.mxu0
  %v1996 = vadd.f32 0.0, %v1995
  %v1997 = vpop.f32.mrf.mxu0
  %1998 = vdwg.mxu0
  %v1999 = vadd.f32 %v1963, %v1983
  %v2000 = vadd.f32 %v1964, %v1996
  %v2001 = vmul.f32 %v1999, 0.5
  %v2002 = vmul.f32 %v2000, 0.5
  %v2003 = vtanh.pop %v2001
  %v2004 = vtanh.pop %v2002
  %v2005 = vmul.f32 %v2003, 0.5
  %v2006 = vmul.f32 %v2004, 0.5
  %v2007 = vadd.f32 %v2005, 0.5
  %v2008 = vadd.f32 %v2006, 0.5
  %v2009 = vtanh.pop %v2000
  %v2011 = vrot.slane %v1948, 6
  %v2013 = vmul.f32 %v2007, %v2011
  %v2014 = vmul.f32 %v2007, %v2009
  %2016 = vrot.lane.b32.xlu0 %v2014, 64
  %v2017 = vpop.permute.xlu0 %2016
  %v2019 = vadd.f32 %v2013, %v2017
  %v2020 = vtanh.pop %v2019
  %v2021 = vmul.f32 %v2008, %v2020
  %2023 = vrot.lane.b32.xlu0 %v2021, 64
  %v2024 = vpop.permute.xlu0 %2023
  %2026 = vst.msk [vmem:[#allocation2 + $0x8] sm:$0x3] %vm353, %v2024
  %2027 = vst.msk [vmem:[#allocation2 + $0x6] sm:$0x3] %vm355, %v2024
  %v2028 = vrot.slane %v1619, 2
  %v2029 = vrot.slane %v1633, 2
  %v2032 = vsel %vm81, %v1621, %v2028
  %v2033 = vsel %vm82, %v1635, %v2029
  %v2034 = vpack.c.bf16 %v2021, %v2021
  %2036 = vrot.lane.b32.xlu0 %v2034, 64
  %v2037 = vpop.permute.xlu0 %2036
  %v2039 = vsel %vm299, %v2037, 0
  %2041 = vmatpush.bf16.msra.mxu0 0
  %2042 = vmatpush.bf16.msra.mxu0 0
  %2043 = vmatpush.bf16.msra.mxu0 0
  %2044 = vmatpush.bf16.msra.mxu0 0
  %2045 = vmatpush.bf16.msra.mxu0 %v1683
  %2046 = vmatpush.bf16.msra.mxu0 %v1681
  %2047 = vmatpush.bf16.msra.mxu0 %v1679
  %2048 = vmatpush.bf16.msra.mxu0 %v1677
  %2049 = vmatmul.bf16.gmra.mxu0 %v2039
  %v2050 = vpop.f32.mrf.mxu0
  %v2051 = vadd.f32 0.0, %v2050
  %v2052 = vpop.f32.mrf.mxu0
  %2053 = vdwg.mxu0
  %2054 = vmatpush.bf16.msra.mxu0 0
  %2055 = vmatpush.bf16.msra.mxu0 0
  %2056 = vmatpush.bf16.msra.mxu0 0
  %2057 = vmatpush.bf16.msra.mxu0 0
  %2058 = vmatpush.bf16.msra.mxu0 %v1684
  %2059 = vmatpush.bf16.msra.mxu0 %v1682
  %2060 = vmatpush.bf16.msra.mxu0 %v1680
  %2061 = vmatpush.bf16.msra.mxu0 %v1678
  %2062 = vmatmul.bf16.gmra.mxu0 %v2039
  %v2063 = vpop.f32.mrf.mxu0
  %v2064 = vadd.f32 0.0, %v2063
  %v2065 = vpop.f32.mrf.mxu0
  %2066 = vdwg.mxu0
  %v2069 = vrot.slane %v2051, 6
  %v2070 = vrot.slane %v2064, 6
  %v2073 = vadd.f32 %v2032, %v2069
  %v2074 = vadd.f32 %v2033, %v2070
  %v2075 = vmul.f32 %v2073, 0.5
  %v2076 = vmul.f32 %v2074, 0.5
  %v2077 = vtanh.pop %v2075
  %v2078 = vtanh.pop %v2076
  %v2079 = vmul.f32 %v2077, 0.5
  %v2080 = vmul.f32 %v2078, 0.5
  %v2081 = vadd.f32 %v2079, 0.5
  %v2082 = vadd.f32 %v2080, 0.5
  %v2083 = vtanh.pop %v2074
  %v2085 = vrot.slane %v2019, 6
  %v2087 = vmul.f32 %v2081, %v2085
  %v2088 = vmul.f32 %v2081, %v2083
  %2090 = vrot.lane.b32.xlu0 %v2088, 64
  %v2091 = vpop.permute.xlu0 %2090
  %v2093 = vadd.f32 %v2087, %v2091
  %v2094 = vtanh.pop %v2093
  %v2095 = vmul.f32 %v2082, %v2094
  %2097 = vrot.lane.b32.xlu0 %v2095, 64
  %v2098 = vpop.permute.xlu0 %2097
  %2100 = vst.msk [vmem:[#allocation2 + $0x8] sm:$0xc] %vm429, %v2098
  %2101 = vst.msk [vmem:[#allocation2 + $0x2] sm:$0xc] %vm431, %v2098
  %v2102 = vpack.c.bf16 %v2095, %v2095
  %v2104 = vrot.slane %v2102, 1
  %2105 = vrot.lane.b32.xlu0 %v2104, 64
  %v2106 = vpop.permute.xlu0 %2105
  %v2108 = vsel %vm299, %v2106, 0
  %2110 = vmatpush.bf16.msra.mxu0 0
  %2111 = vmatpush.bf16.msra.mxu0 0
  %2112 = vmatpush.bf16.msra.mxu0 0
  %2113 = vmatpush.bf16.msra.mxu0 0
  %2114 = vmatpush.bf16.msra.mxu0 %v1683
  %2115 = vmatpush.bf16.msra.mxu0 %v1681
  %2116 = vmatpush.bf16.msra.mxu0 %v1679
  %2117 = vmatpush.bf16.msra.mxu0 %v1677
  %2118 = vmatmul.bf16.gmra.mxu0 %v2108
  %v2119 = vpop.f32.mrf.mxu0
  %v2120 = vadd.f32 0.0, %v2119
  %v2121 = vpop.f32.mrf.mxu0
  %2122 = vdwg.mxu0
  %2123 = vmatpush.bf16.msra.mxu0 0
  %2124 = vmatpush.bf16.msra.mxu0 0
  %2125 = vmatpush.bf16.msra.mxu0 0
  %2126 = vmatpush.bf16.msra.mxu0 0
  %2127 = vmatpush.bf16.msra.mxu0 %v1684
  %2128 = vmatpush.bf16.msra.mxu0 %v1682
  %2129 = vmatpush.bf16.msra.mxu0 %v1680
  %2130 = vmatpush.bf16.msra.mxu0 %v1678
  %2131 = vmatmul.bf16.gmra.mxu0 %v2108
  %v2132 = vpop.f32.mrf.mxu0
  %v2133 = vadd.f32 0.0, %v2132
  %v2134 = vpop.f32.mrf.mxu0
  %2135 = vdwg.mxu0
  %v2138 = vrot.slane %v2120, 4
  %v2139 = vrot.slane %v2133, 4
  %v2142 = vadd.f32 %v1963, %v2138
  %v2143 = vadd.f32 %v1964, %v2139
  %v2144 = vmul.f32 %v2142, 0.5
  %v2145 = vmul.f32 %v2143, 0.5
  %v2146 = vtanh.pop %v2144
  %v2147 = vtanh.pop %v2145
  %v2148 = vmul.f32 %v2146, 0.5
  %v2149 = vmul.f32 %v2147, 0.5
  %v2150 = vadd.f32 %v2148, 0.5
  %v2151 = vadd.f32 %v2149, 0.5
  %v2152 = vtanh.pop %v2143
  %v2154 = vrot.slane %v2093, 6
  %v2156 = vmul.f32 %v2150, %v2154
  %v2157 = vmul.f32 %v2150, %v2152
  %2159 = vrot.lane.b32.xlu0 %v2157, 64
  %v2160 = vpop.permute.xlu0 %2159
  %v2162 = vadd.f32 %v2156, %v2160
  %v2163 = vtanh.pop %v2162
  %v2164 = vmul.f32 %v2151, %v2163
  %2166 = vrot.lane.b32.xlu0 %v2164, 64
  %v2167 = vpop.permute.xlu0 %2166
  %2169 = vst.msk [vmem:[#allocation2 + $0x8] sm:$0x30] %vm500, %v2167
  %2170 = vst.msk [vmem:[#allocation2 - $0x2] sm:$0x30] %vm502, %v2167
  %v2171 = vpack.c.bf16 %v2164, %v2164
  %v2173 = vrot.slane %v2171, 2
  %2174 = vrot.lane.b32.xlu0 %v2173, 64
  %v2175 = vpop.permute.xlu0 %2174
  %v2177 = vsel %vm299, %v2175, 0
  %2179 = vmatpush.bf16.msra.mxu0 0
  %2180 = vmatpush.bf16.msra.mxu0 0
  %2181 = vmatpush.bf16.msra.mxu0 0
  %2182 = vmatpush.bf16.msra.mxu0 0
  %2183 = vmatpush.bf16.msra.mxu0 %v1683
  %2184 = vmatpush.bf16.msra.mxu0 %v1681
  %2185 = vmatpush.bf16.msra.mxu0 %v1679
  %2186 = vmatpush.bf16.msra.mxu0 %v1677
  %2187 = vmatmul.bf16.gmra.mxu0 %v2177
  %v2188 = vpop.f32.mrf.mxu0
  %v2189 = vadd.f32 0.0, %v2188
  %v2190 = vpop.f32.mrf.mxu0
  %2191 = vdwg.mxu0
  %2192 = vmatpush.bf16.msra.mxu0 0
  %2193 = vmatpush.bf16.msra.mxu0 0
  %2194 = vmatpush.bf16.msra.mxu0 0
  %2195 = vmatpush.bf16.msra.mxu0 0
  %2196 = vmatpush.bf16.msra.mxu0 %v1684
  %2197 = vmatpush.bf16.msra.mxu0 %v1682
  %2198 = vmatpush.bf16.msra.mxu0 %v1680
  %2199 = vmatpush.bf16.msra.mxu0 %v1678
  %2200 = vmatmul.bf16.gmra.mxu0 %v2177
  %v2201 = vpop.f32.mrf.mxu0
  %v2202 = vadd.f32 0.0, %v2201
  %v2203 = vpop.f32.mrf.mxu0
  %2204 = vdwg.mxu0
  %v2207 = vrot.slane %v2189, 2
  %v2208 = vrot.slane %v2202, 2
  %v2211 = vadd.f32 %v2032, %v2207
  %v2212 = vadd.f32 %v2033, %v2208
  %v2213 = vmul.f32 %v2211, 0.5
  %v2214 = vmul.f32 %v2212, 0.5
  %v2215 = vtanh.pop %v2213
  %v2216 = vtanh.pop %v2214
  %v2217 = vmul.f32 %v2215, 0.5
  %v2218 = vmul.f32 %v2216, 0.5
  %v2219 = vadd.f32 %v2217, 0.5
  %v2220 = vadd.f32 %v2218, 0.5
  %v2221 = vtanh.pop %v2212
  %v2223 = vrot.slane %v2162, 6
  %v2225 = vmul.f32 %v2219, %v2223
  %v2226 = vmul.f32 %v2219, %v2221
  %2228 = vrot.lane.b32.xlu0 %v2226, 64
  %v2229 = vpop.permute.xlu0 %2228
  %v2231 = vadd.f32 %v2225, %v2229
  %v2232 = vtanh.pop %v2231
  %v2233 = vmul.f32 %v2220, %v2232
  %2235 = vrot.lane.b32.xlu0 %v2233, 64
  %v2236 = vpop.permute.xlu0 %2235
  %2238 = vst.msk [vmem:[#allocation2 + $0x8] sm:$0xc0] %vm571, %v2236
  %2239 = vst.msk [vmem:[#allocation2 - $0x6] sm:$0xc0] %vm573, %v2236
  %v2240 = vld [vmem:[#allocation2] sm:$0xff]
  %v2241 = vld [vmem:[#allocation2 + $0x8] sm:$0xff]
  %v2245 = vrot.slane 0.0, 2
  %v2246 = vrot.slane %v2240, 2
  %v2247 = vsel %vm113, %v2245, %v2246
  %v2248 = vrot.slane %v2241, 2
  %v2249 = vsel %vm113, %v2246, %v2248
  %2250 = vrot.lane.b32.xlu0 %v2247, 64
  %v2251 = vpop.permute.xlu0 %2250
  %2252 = vrot.lane.b32.xlu0 %v2249, 64
  %v2253 = vpop.permute.xlu0 %2252
  %v2256 = vrot.slane 0.0, 4
  %v2257 = vrot.slane %v2240, 4
  %v2258 = vsel %vm111, %v2256, %v2257
  %v2259 = vrot.slane %v2241, 4
  %v2260 = vsel %vm111, %v2257, %v2259
  %v2263 = vrot.slane 0.0, 6
  %v2264 = vrot.slane %v2240, 6
  %v2265 = vsel %vm109, %v2263, %v2264
  %v2266 = vrot.slane %v2241, 6
  %v2267 = vsel %vm109, %v2264, %v2266
  %2268 = vrot.lane.b32.xlu0 %v2265, 64
  %v2269 = vpop.permute.xlu0 %2268
  %2270 = vrot.lane.b32.xlu0 %v2267, 64
  %v2271 = vpop.permute.xlu0 %2270
  %v2274 = vsel %vm113, %v2248, %v2245
  %2275 = vrot.lane.b32.xlu0 %v2274, 64
  %v2276 = vpop.permute.xlu0 %2275
  %v2278 = vsel %vm111, %v2259, %v2256
  %v2280 = vsel %vm109, %v2266, %v2263
  %2281 = vrot.lane.b32.xlu0 %v2280, 64
  %v2282 = vpop.permute.xlu0 %2281
  %v2284 = vsel %vm299, 0.0, %v2251
  %v2285 = vsel %vm299, %v2240, %v2253
  %v2286 = vsel %vm299, %v2258, %v2269
  %v2287 = vsel %vm299, %v2260, %v2271
  %v2288 = vsel %vm299, %v2241, %v2276
  %v2289 = vsel %vm299, %v2278, %v2282
  %v2290 = vpack.c.bf16 %v2285, %v2284
  %v2291 = vpack.c.bf16 %v2287, %v2286
  %v2292 = vpack.c.bf16 %v2288, %v2285
  %v2293 = vpack.c.bf16 %v2289, %v2287
  %v2294 = vpack.c.bf16 0.0, %v2241
  %v2295 = vld [vmem:[%s12] sm:$0xff]
  %v2296 = vld [vmem:[%s12 + $0x8] sm:$0xff]
  %v2297 = vld [vmem:[%s12 + $0x10] sm:$0xff]
  %v2298 = vld [vmem:[%s12 + $0x18] sm:$0xff]
  %v2299 = vld [vmem:[%s12 + $0x20] sm:$0xff]
  %v2300 = vld [vmem:[%s12 + $0x28] sm:$0xff]
  %v2301 = vld [vmem:[%s12 + $0x30] sm:$0xff]
  %v2302 = vld [vmem:[%s12 + $0x38] sm:$0xff]
  %v2303 = vld [vmem:[%s12 + $0x40] sm:$0xff]
  %v2304 = vld [vmem:[%s12 + $0x48] sm:$0xff]
  %v2305 = vld [vmem:[%s12 + $0x50] sm:$0xff]
  %v2306 = vld [vmem:[%s12 + $0x58] sm:$0xff]
  %v2307 = vld [vmem:[%s12 + $0x60] sm:$0xff]
  %v2308 = vld [vmem:[%s12 + $0x68] sm:$0xff]
  %v2309 = vld [vmem:[%s12 + $0x70] sm:$0xff]
  %v2310 = vld [vmem:[%s12 + $0x78] sm:$0xff]
  %v2311 = vld [vmem:[%s12 + $0x80] sm:$0xff]
  %v2312 = vld [vmem:[%s12 + $0x88] sm:$0xff]
  %v2313 = vld [vmem:[%s12 + $0x90] sm:$0xff]
  %v2314 = vld [vmem:[%s12 + $0x98] sm:$0xff]
  %v2315 = vld [vmem:[%s12 + $0xa0] sm:$0xff]
  %v2316 = vld [vmem:[%s12 + $0xa8] sm:$0xff]
  %v2317 = vld [vmem:[%s12 + $0xb0] sm:$0xff]
  %v2318 = vld [vmem:[%s12 + $0xb8] sm:$0xff]
  %v2319 = vld [vmem:[%s12 + $0xc0] sm:$0xff]
  %v2320 = vld [vmem:[%s12 + $0xc8] sm:$0xff]
  %v2321 = vld [vmem:[%s12 + $0xd0] sm:$0xff]
  %v2322 = vld [vmem:[%s12 + $0xd8] sm:$0xff]
  %v2323 = vld [vmem:[%s12 + $0xe0] sm:$0xff]
  %v2324 = vld [vmem:[%s12 + $0xe8] sm:$0xff]
  %v2325 = vld [vmem:[%s12 + $0xf0] sm:$0xff]
  %v2326 = vld [vmem:[%s12 + $0xf8] sm:$0xff]
  %v2327 = vld [vmem:[%s12 + $0x100] sm:$0xff]
  %v2328 = vld [vmem:[%s12 + $0x108] sm:$0xff]
  %v2329 = vld [vmem:[%s12 + $0x110] sm:$0xff]
  %v2330 = vld [vmem:[%s12 + $0x118] sm:$0xff]
  %v2331 = vld [vmem:[%s12 + $0x120] sm:$0xff]
  %v2332 = vld [vmem:[%s12 + $0x128] sm:$0xff]
  %v2333 = vld [vmem:[%s12 + $0x130] sm:$0xff]
  %v2334 = vld [vmem:[%s12 + $0x138] sm:$0xff]
  %v2335 = vld [vmem:[%s12 + $0x140] sm:$0xff]
  %v2336 = vld [vmem:[%s12 + $0x148] sm:$0xff]
  %v2337 = vld [vmem:[%s12 + $0x150] sm:$0xff]
  %v2338 = vld [vmem:[%s12 + $0x158] sm:$0xff]
  %v2339 = vld [vmem:[%s12 + $0x160] sm:$0xff]
  %v2340 = vld [vmem:[%s12 + $0x168] sm:$0xff]
  %v2341 = vld [vmem:[%s12 + $0x170] sm:$0xff]
  %v2342 = vld [vmem:[%s12 + $0x178] sm:$0xff]
  %v2343 = vld [vmem:[%s12 + $0x180] sm:$0xff]
  %v2344 = vld [vmem:[%s12 + $0x188] sm:$0xff]
  %v2345 = vld [vmem:[%s12 + $0x190] sm:$0xff]
  %v2346 = vld [vmem:[%s12 + $0x198] sm:$0xff]
  %v2347 = vld [vmem:[%s12 + $0x1a0] sm:$0xff]
  %v2348 = vld [vmem:[%s12 + $0x1a8] sm:$0xff]
  %v2349 = vld [vmem:[%s12 + $0x1b0] sm:$0xff]
  %v2350 = vld [vmem:[%s12 + $0x1b8] sm:$0xff]
  %v2351 = vld [vmem:[%s12 + $0x1c0] sm:$0xff]
  %v2352 = vld [vmem:[%s12 + $0x1c8] sm:$0xff]
  %v2353 = vld [vmem:[%s12 + $0x1d0] sm:$0xff]
  %v2354 = vld [vmem:[%s12 + $0x1d8] sm:$0xff]
  %v2355 = vld [vmem:[%s12 + $0x1e0] sm:$0xff]
  %v2356 = vld [vmem:[%s12 + $0x1e8] sm:$0xff]
  %v2357 = vld [vmem:[%s12 + $0x1f0] sm:$0xff]
  %v2358 = vld [vmem:[%s12 + $0x1f8] sm:$0xff]
  %v2359 = vld [vmem:[%s12 + $0x200] sm:$0xff]
  %v2360 = vld [vmem:[%s12 + $0x208] sm:$0xff]
  %v2361 = vld [vmem:[%s12 + $0x210] sm:$0xff]
  %v2362 = vld [vmem:[%s12 + $0x218] sm:$0xff]
  %v2363 = vld [vmem:[%s12 + $0x220] sm:$0xff]
  %v2364 = vld [vmem:[%s12 + $0x228] sm:$0xff]
  %v2365 = vld [vmem:[%s12 + $0x230] sm:$0xff]
  %v2366 = vld [vmem:[%s12 + $0x238] sm:$0xff]
  %v2367 = vld [vmem:[%s13] sm:$0x3]
  %v2369 = vperm.slane %v2367, 0
  %v2370 = vperm.slane %v2367, 1
  %v2445 = vunpack.c.l.b16 %v2295
  %v2446 = vunpack.c.h.b16 %v2295
  %v2447 = vunpack.c.l.b16 %v2296
  %v2448 = vunpack.c.h.b16 %v2296
  %v2449 = vunpack.c.l.b16 %v2297
  %v2450 = vunpack.c.h.b16 %v2297
  %v2451 = vunpack.c.l.b16 %v2298
  %v2452 = vunpack.c.h.b16 %v2298
  %v2453 = vunpack.c.l.b16 %v2299
  %v2454 = vunpack.c.h.b16 %v2299
  %v2455 = vunpack.c.l.b16 %v2300
  %v2456 = vunpack.c.h.b16 %v2300
  %v2457 = vunpack.c.l.b16 %v2301
  %v2458 = vunpack.c.h.b16 %v2301
  %v2459 = vunpack.c.l.b16 %v2302
  %v2460 = vunpack.c.h.b16 %v2302
  %v2461 = vunpack.c.l.b16 %v2303
  %v2462 = vunpack.c.h.b16 %v2303
  %v2463 = vunpack.c.l.b16 %v2304
  %v2464 = vunpack.c.h.b16 %v2304
  %v2465 = vunpack.c.l.b16 %v2305
  %v2466 = vunpack.c.h.b16 %v2305
  %v2467 = vunpack.c.l.b16 %v2306
  %v2468 = vunpack.c.h.b16 %v2306
  %v2469 = vunpack.c.l.b16 %v2307
  %v2470 = vunpack.c.h.b16 %v2307
  %v2471 = vunpack.c.l.b16 %v2308
  %v2472 = vunpack.c.h.b16 %v2308
  %v2473 = vunpack.c.l.b16 %v2309
  %v2474 = vunpack.c.h.b16 %v2309
  %v2475 = vunpack.c.l.b16 %v2310
  %v2476 = vunpack.c.h.b16 %v2310
  %v2477 = vunpack.c.l.b16 %v2311
  %v2478 = vunpack.c.h.b16 %v2311
  %v2479 = vunpack.c.l.b16 %v2312
  %v2480 = vunpack.c.h.b16 %v2312
  %v2481 = vunpack.c.l.b16 %v2313
  %v2482 = vunpack.c.h.b16 %v2313
  %v2483 = vunpack.c.l.b16 %v2314
  %v2484 = vunpack.c.h.b16 %v2314
  %v2485 = vunpack.c.l.b16 %v2315
  %v2486 = vunpack.c.h.b16 %v2315
  %v2487 = vunpack.c.l.b16 %v2316
  %v2488 = vunpack.c.h.b16 %v2316
  %v2489 = vunpack.c.l.b16 %v2317
  %v2490 = vunpack.c.h.b16 %v2317
  %v2491 = vunpack.c.l.b16 %v2318
  %v2492 = vunpack.c.h.b16 %v2318
  %v2493 = vunpack.c.l.b16 %v2319
  %v2494 = vunpack.c.h.b16 %v2319
  %v2495 = vunpack.c.l.b16 %v2320
  %v2496 = vunpack.c.h.b16 %v2320
  %v2497 = vunpack.c.l.b16 %v2321
  %v2498 = vunpack.c.h.b16 %v2321
  %v2499 = vunpack.c.l.b16 %v2322
  %v2500 = vunpack.c.h.b16 %v2322
  %v2501 = vunpack.c.l.b16 %v2323
  %v2502 = vunpack.c.h.b16 %v2323
  %v2503 = vunpack.c.l.b16 %v2324
  %v2504 = vunpack.c.h.b16 %v2324
  %v2505 = vunpack.c.l.b16 %v2325
  %v2506 = vunpack.c.h.b16 %v2325
  %v2507 = vunpack.c.l.b16 %v2326
  %v2508 = vunpack.c.h.b16 %v2326
  %v2509 = vunpack.c.l.b16 %v2327
  %v2510 = vunpack.c.h.b16 %v2327
  %v2511 = vunpack.c.l.b16 %v2328
  %v2512 = vunpack.c.h.b16 %v2328
  %v2513 = vunpack.c.l.b16 %v2329
  %v2514 = vunpack.c.h.b16 %v2329
  %v2515 = vunpack.c.l.b16 %v2330
  %v2516 = vunpack.c.h.b16 %v2330
  %v2517 = vunpack.c.l.b16 %v2331
  %v2518 = vunpack.c.h.b16 %v2331
  %v2519 = vunpack.c.l.b16 %v2332
  %v2520 = vunpack.c.h.b16 %v2332
  %v2521 = vunpack.c.l.b16 %v2333
  %v2522 = vunpack.c.h.b16 %v2333
  %v2523 = vunpack.c.l.b16 %v2334
  %v2524 = vunpack.c.h.b16 %v2334
  %v2525 = vunpack.c.l.b16 %v2335
  %v2526 = vunpack.c.h.b16 %v2335
  %v2527 = vunpack.c.l.b16 %v2336
  %v2528 = vunpack.c.h.b16 %v2336
  %v2529 = vunpack.c.l.b16 %v2337
  %v2530 = vunpack.c.h.b16 %v2337
  %v2531 = vunpack.c.l.b16 %v2338
  %v2532 = vunpack.c.h.b16 %v2338
  %v2533 = vunpack.c.l.b16 %v2339
  %v2534 = vunpack.c.h.b16 %v2339
  %v2535 = vunpack.c.l.b16 %v2340
  %v2536 = vunpack.c.h.b16 %v2340
  %v2537 = vunpack.c.l.b16 %v2341
  %v2538 = vunpack.c.h.b16 %v2341
  %v2539 = vunpack.c.l.b16 %v2342
  %v2540 = vunpack.c.h.b16 %v2342
  %v2541 = vunpack.c.l.b16 %v2343
  %v2542 = vunpack.c.h.b16 %v2343
  %v2543 = vunpack.c.l.b16 %v2344
  %v2544 = vunpack.c.h.b16 %v2344
  %v2545 = vunpack.c.l.b16 %v2345
  %v2546 = vunpack.c.h.b16 %v2345
  %v2547 = vunpack.c.l.b16 %v2346
  %v2548 = vunpack.c.h.b16 %v2346
  %v2549 = vunpack.c.l.b16 %v2347
  %v2550 = vunpack.c.h.b16 %v2347
  %v2551 = vunpack.c.l.b16 %v2348
  %v2552 = vunpack.c.h.b16 %v2348
  %v2553 = vunpack.c.l.b16 %v2349
  %v2554 = vunpack.c.h.b16 %v2349
  %v2555 = vunpack.c.l.b16 %v2350
  %v2556 = vunpack.c.h.b16 %v2350
  %v2557 = vunpack.c.l.b16 %v2351
  %v2558 = vunpack.c.h.b16 %v2351
  %v2559 = vunpack.c.l.b16 %v2352
  %v2560 = vunpack.c.h.b16 %v2352
  %v2561 = vunpack.c.l.b16 %v2353
  %v2562 = vunpack.c.h.b16 %v2353
  %v2563 = vunpack.c.l.b16 %v2354
  %v2564 = vunpack.c.h.b16 %v2354
  %v2565 = vunpack.c.l.b16 %v2355
  %v2566 = vunpack.c.h.b16 %v2355
  %v2567 = vunpack.c.l.b16 %v2356
  %v2568 = vunpack.c.h.b16 %v2356
  %v2569 = vunpack.c.l.b16 %v2357
  %v2570 = vunpack.c.h.b16 %v2357
  %v2571 = vunpack.c.l.b16 %v2358
  %v2572 = vunpack.c.h.b16 %v2358
  %v2573 = vunpack.c.l.b16 %v2359
  %v2574 = vunpack.c.h.b16 %v2359
  %v2575 = vunpack.c.l.b16 %v2360
  %v2576 = vunpack.c.h.b16 %v2360
  %v2577 = vunpack.c.l.b16 %v2361
  %v2578 = vunpack.c.h.b16 %v2361
  %v2579 = vunpack.c.l.b16 %v2362
  %v2580 = vunpack.c.h.b16 %v2362
  %v2581 = vunpack.c.l.b16 %v2363
  %v2582 = vunpack.c.h.b16 %v2363
  %v2583 = vunpack.c.l.b16 %v2364
  %v2584 = vunpack.c.h.b16 %v2364
  %v2585 = vunpack.c.l.b16 %v2365
  %v2586 = vunpack.c.h.b16 %v2365
  %v2587 = vunpack.c.l.b16 %v2366
  %v2588 = vunpack.c.h.b16 %v2366
  %v2589 = vpack.c.b16 %v2447, %v2445
  %v2590 = vpack.c.b16 %v2448, %v2446
  %v2591 = vpack.c.b16 %v2451, %v2449
  %v2592 = vpack.c.b16 %v2452, %v2450
  %v2593 = vpack.c.b16 %v2455, %v2453
  %v2594 = vpack.c.b16 %v2456, %v2454
  %v2595 = vpack.c.b16 %v2459, %v2457
  %v2596 = vpack.c.b16 %v2460, %v2458
  %v2597 = vpack.c.b16 %v2463, %v2461
  %v2598 = vpack.c.b16 %v2464, %v2462
  %v2599 = vpack.c.b16 %v2467, %v2465
  %v2600 = vpack.c.b16 %v2468, %v2466
  %v2601 = vpack.c.b16 %v2471, %v2469
  %v2602 = vpack.c.b16 %v2472, %v2470
  %v2603 = vpack.c.b16 %v2475, %v2473
  %v2604 = vpack.c.b16 %v2476, %v2474
  %v2605 = vpack.c.b16 %v2479, %v2477
  %v2606 = vpack.c.b16 %v2480, %v2478
  %v2607 = vpack.c.b16 %v2483, %v2481
  %v2608 = vpack.c.b16 %v2484, %v2482
  %v2609 = vpack.c.b16 %v2487, %v2485
  %v2610 = vpack.c.b16 %v2488, %v2486
  %v2611 = vpack.c.b16 %v2491, %v2489
  %v2612 = vpack.c.b16 %v2492, %v2490
  %v2613 = vpack.c.b16 %v2495, %v2493
  %v2614 = vpack.c.b16 %v2496, %v2494
  %v2615 = vpack.c.b16 %v2499, %v2497
  %v2616 = vpack.c.b16 %v2500, %v2498
  %v2617 = vpack.c.b16 %v2503, %v2501
  %v2618 = vpack.c.b16 %v2504, %v2502
  %v2619 = vpack.c.b16 %v2507, %v2505
  %v2620 = vpack.c.b16 %v2508, %v2506
  %v2621 = vpack.c.b16 %v2511, %v2509
  %v2622 = vpack.c.b16 %v2512, %v2510
  %v2623 = vpack.c.b16 %v2515, %v2513
  %v2624 = vpack.c.b16 %v2516, %v2514
  %v2625 = vpack.c.b16 %v2519, %v2517
  %v2626 = vpack.c.b16 %v2520, %v2518
  %v2627 = vpack.c.b16 %v2523, %v2521
  %v2628 = vpack.c.b16 %v2524, %v2522
  %v2629 = vpack.c.b16 %v2527, %v2525
  %v2630 = vpack.c.b16 %v2528, %v2526
  %v2631 = vpack.c.b16 %v2531, %v2529
  %v2632 = vpack.c.b16 %v2532, %v2530
  %v2633 = vpack.c.b16 %v2535, %v2533
  %v2634 = vpack.c.b16 %v2536, %v2534
  %v2635 = vpack.c.b16 %v2539, %v2537
  %v2636 = vpack.c.b16 %v2540, %v2538
  %v2637 = vpack.c.b16 %v2543, %v2541
  %v2638 = vpack.c.b16 %v2544, %v2542
  %v2639 = vpack.c.b16 %v2547, %v2545
  %v2640 = vpack.c.b16 %v2548, %v2546
  %v2641 = vpack.c.b16 %v2551, %v2549
  %v2642 = vpack.c.b16 %v2552, %v2550
  %v2643 = vpack.c.b16 %v2555, %v2553
  %v2644 = vpack.c.b16 %v2556, %v2554
  %v2645 = vpack.c.b16 %v2559, %v2557
  %v2646 = vpack.c.b16 %v2560, %v2558
  %v2647 = vpack.c.b16 %v2563, %v2561
  %v2648 = vpack.c.b16 %v2564, %v2562
  %v2649 = vpack.c.b16 %v2567, %v2565
  %v2650 = vpack.c.b16 %v2568, %v2566
  %v2651 = vpack.c.b16 %v2571, %v2569
  %v2652 = vpack.c.b16 %v2572, %v2570
  %v2653 = vpack.c.b16 %v2575, %v2573
  %v2654 = vpack.c.b16 %v2576, %v2574
  %v2655 = vpack.c.b16 %v2579, %v2577
  %v2656 = vpack.c.b16 %v2580, %v2578
  %v2657 = vpack.c.b16 %v2583, %v2581
  %v2658 = vpack.c.b16 %v2584, %v2582
  %v2659 = vpack.c.b16 %v2587, %v2585
  %v2660 = vpack.c.b16 %v2588, %v2586
  %v2734 = vsel %vm299, %v2294, 0
  %2736 = vmatpush.bf16.msra.mxu0 %v2603
  %2737 = vmatpush.bf16.msra.mxu0 %v2601
  %2738 = vmatpush.bf16.msra.mxu0 %v2599
  %2739 = vmatpush.bf16.msra.mxu0 %v2597
  %2740 = vmatpush.bf16.msra.mxu0 %v2595
  %2741 = vmatpush.bf16.msra.mxu0 %v2593
  %2742 = vmatpush.bf16.msra.mxu0 %v2591
  %2743 = vmatpush.bf16.msra.mxu0 %v2589
  %2744 = vmatmul.bf16.gmra.mxu0 %v2290
  %v2745 = vpop.f32.mrf.mxu0
  %v2746 = vadd.f32 %v2369, %v2745
  %v2747 = vpop.f32.mrf.mxu0
  %v2748 = vadd.f32 %v2369, %v2747
  %2749 = vdwg.mxu0
  %2750 = vmatpush.bf16.msra.mxu0 %v2619
  %2751 = vmatpush.bf16.msra.mxu0 %v2617
  %2752 = vmatpush.bf16.msra.mxu0 %v2615
  %2753 = vmatpush.bf16.msra.mxu0 %v2613
  %2754 = vmatpush.bf16.msra.mxu0 %v2611
  %2755 = vmatpush.bf16.msra.mxu0 %v2609
  %2756 = vmatpush.bf16.msra.mxu0 %v2607
  %2757 = vmatpush.bf16.msra.mxu0 %v2605
  %2758 = vmatmul.bf16.gmra.mxu0 %v2291
  %v2759 = vpop.f32.mrf.mxu0
  %v2760 = vadd.f32 %v2746, %v2759
  %v2761 = vpop.f32.mrf.mxu0
  %v2762 = vadd.f32 %v2748, %v2761
  %2763 = vdwg.mxu0
  %2764 = vmatpush.bf16.msra.mxu0 %v2635
  %2765 = vmatpush.bf16.msra.mxu0 %v2633
  %2766 = vmatpush.bf16.msra.mxu0 %v2631
  %2767 = vmatpush.bf16.msra.mxu0 %v2629
  %2768 = vmatpush.bf16.msra.mxu0 %v2627
  %2769 = vmatpush.bf16.msra.mxu0 %v2625
  %2770 = vmatpush.bf16.msra.mxu0 %v2623
  %2771 = vmatpush.bf16.msra.mxu0 %v2621
  %2772 = vmatmul.bf16.gmra.mxu0 %v2292
  %v2773 = vpop.f32.mrf.mxu0
  %v2774 = vadd.f32 %v2760, %v2773
  %v2775 = vpop.f32.mrf.mxu0
  %v2776 = vadd.f32 %v2762, %v2775
  %2777 = vdwg.mxu0
  %2778 = vmatpush.bf16.msra.mxu0 %v2651
  %2779 = vmatpush.bf16.msra.mxu0 %v2649
  %2780 = vmatpush.bf16.msra.mxu0 %v2647
  %2781 = vmatpush.bf16.msra.mxu0 %v2645
  %2782 = vmatpush.bf16.msra.mxu0 %v2643
  %2783 = vmatpush.bf16.msra.mxu0 %v2641
  %2784 = vmatpush.bf16.msra.mxu0 %v2639
  %2785 = vmatpush.bf16.msra.mxu0 %v2637
  %2786 = vmatmul.bf16.gmra.mxu0 %v2293
  %v2787 = vpop.f32.mrf.mxu0
  %v2788 = vadd.f32 %v2774, %v2787
  %v2789 = vpop.f32.mrf.mxu0
  %v2790 = vadd.f32 %v2776, %v2789
  %2791 = vdwg.mxu0
  %2792 = vmatpush.bf16.msra.mxu0 0
  %2793 = vmatpush.bf16.msra.mxu0 0
  %2794 = vmatpush.bf16.msra.mxu0 0
  %2795 = vmatpush.bf16.msra.mxu0 0
  %2796 = vmatpush.bf16.msra.mxu0 %v2659
  %2797 = vmatpush.bf16.msra.mxu0 %v2657
  %2798 = vmatpush.bf16.msra.mxu0 %v2655
  %2799 = vmatpush.bf16.msra.mxu0 %v2653
  %2800 = vmatmul.bf16.gmra.mxu0 %v2734
  %v2801 = vpop.f32.mrf.mxu0
  %v2802 = vadd.f32 %v2788, %v2801
  %v2803 = vpop.f32.mrf.mxu0
  %v2804 = vadd.f32 %v2790, %v2803
  %2805 = vdwg.mxu0
  %2806 = vmatpush.bf16.msra.mxu0 %v2604
  %2807 = vmatpush.bf16.msra.mxu0 %v2602
  %2808 = vmatpush.bf16.msra.mxu0 %v2600
  %2809 = vmatpush.bf16.msra.mxu0 %v2598
  %2810 = vmatpush.bf16.msra.mxu0 %v2596
  %2811 = vmatpush.bf16.msra.mxu0 %v2594
  %2812 = vmatpush.bf16.msra.mxu0 %v2592
  %2813 = vmatpush.bf16.msra.mxu0 %v2590
  %2814 = vmatmul.bf16.gmra.mxu0 %v2290
  %v2815 = vpop.f32.mrf.mxu0
  %v2816 = vadd.f32 %v2370, %v2815
  %v2817 = vpop.f32.mrf.mxu0
  %v2818 = vadd.f32 %v2370, %v2817
  %2819 = vdwg.mxu0
  %2820 = vmatpush.bf16.msra.mxu0 %v2620
  %2821 = vmatpush.bf16.msra.mxu0 %v2618
  %2822 = vmatpush.bf16.msra.mxu0 %v2616
  %2823 = vmatpush.bf16.msra.mxu0 %v2614
  %2824 = vmatpush.bf16.msra.mxu0 %v2612
  %2825 = vmatpush.bf16.msra.mxu0 %v2610
  %2826 = vmatpush.bf16.msra.mxu0 %v2608
  %2827 = vmatpush.bf16.msra.mxu0 %v2606
  %2828 = vmatmul.bf16.gmra.mxu0 %v2291
  %v2829 = vpop.f32.mrf.mxu0
  %v2830 = vadd.f32 %v2816, %v2829
  %v2831 = vpop.f32.mrf.mxu0
  %v2832 = vadd.f32 %v2818, %v2831
  %2833 = vdwg.mxu0
  %2834 = vmatpush.bf16.msra.mxu0 %v2636
  %2835 = vmatpush.bf16.msra.mxu0 %v2634
  %2836 = vmatpush.bf16.msra.mxu0 %v2632
  %2837 = vmatpush.bf16.msra.mxu0 %v2630
  %2838 = vmatpush.bf16.msra.mxu0 %v2628
  %2839 = vmatpush.bf16.msra.mxu0 %v2626
  %2840 = vmatpush.bf16.msra.mxu0 %v2624
  %2841 = vmatpush.bf16.msra.mxu0 %v2622
  %2842 = vmatmul.bf16.gmra.mxu0 %v2292
  %v2843 = vpop.f32.mrf.mxu0
  %v2844 = vadd.f32 %v2830, %v2843
  %v2845 = vpop.f32.mrf.mxu0
  %v2846 = vadd.f32 %v2832, %v2845
  %2847 = vdwg.mxu0
  %2848 = vmatpush.bf16.msra.mxu0 %v2652
  %2849 = vmatpush.bf16.msra.mxu0 %v2650
  %2850 = vmatpush.bf16.msra.mxu0 %v2648
  %2851 = vmatpush.bf16.msra.mxu0 %v2646
  %2852 = vmatpush.bf16.msra.mxu0 %v2644
  %2853 = vmatpush.bf16.msra.mxu0 %v2642
  %2854 = vmatpush.bf16.msra.mxu0 %v2640
  %2855 = vmatpush.bf16.msra.mxu0 %v2638
  %2856 = vmatmul.bf16.gmra.mxu0 %v2293
  %v2857 = vpop.f32.mrf.mxu0
  %v2858 = vadd.f32 %v2844, %v2857
  %v2859 = vpop.f32.mrf.mxu0
  %v2860 = vadd.f32 %v2846, %v2859
  %2861 = vdwg.mxu0
  %2862 = vmatpush.bf16.msra.mxu0 0
  %2863 = vmatpush.bf16.msra.mxu0 0
  %2864 = vmatpush.bf16.msra.mxu0 0
  %2865 = vmatpush.bf16.msra.mxu0 0
  %2866 = vmatpush.bf16.msra.mxu0 %v2660
  %2867 = vmatpush.bf16.msra.mxu0 %v2658
  %2868 = vmatpush.bf16.msra.mxu0 %v2656
  %2869 = vmatpush.bf16.msra.mxu0 %v2654
  %2870 = vmatmul.bf16.gmra.mxu0 %v2734
  %v2871 = vpop.f32.mrf.mxu0
  %v2872 = vadd.f32 %v2858, %v2871
  %v2873 = vpop.f32.mrf.mxu0
  %v2874 = vadd.f32 %v2860, %v2873
  %2875 = vdwg.mxu0
  %2878 = vrot.lane.b32.xlu0 %v2802, 64
  %v2879 = vpop.permute.xlu0 %2878
  %2880 = vrot.lane.b32.xlu0 %v2804, 64
  %v2881 = vpop.permute.xlu0 %2880
  %v2884 = vmax.f32 %v2802, %v2879
  %v2885 = vmax.f32 %v2804, %v2881
  %v2886 = vmax.f32 %v2884, %v2872
  %v2887 = vmax.f32 %v2885, %v2874
  %v2888 = vpack.c.bf16 %v2887, %v2886
  %v2889 = vld [vmem:[%s14] sm:$0xf]
  %v2890 = vld [vmem:[%s14 + $0x4] sm:$0xf]
  %v2891 = vld [vmem:[%s14 + $0x8] sm:$0xf]
  %v2892 = vld [vmem:[%s14 + $0xc] sm:$0xf]
  %v2893 = vld [vmem:[%s14 + $0x10] sm:$0xf]
  %v2894 = vld [vmem:[%s14 + $0x14] sm:$0xf]
  %v2895 = vld [vmem:[%s14 + $0x18] sm:$0xf]
  %v2896 = vld [vmem:[%s14 + $0x1c] sm:$0xf]
  %v2897 = vld [vmem:[%s15] sm:$0x1]
  %v2899 = vperm.slane %v2897, 0
  %v2909 = vunpack.c.l.b16 %v2889
  %v2910 = vunpack.c.l.b16 %v2890
  %v2911 = vunpack.c.l.b16 %v2891
  %v2912 = vunpack.c.l.b16 %v2892
  %v2913 = vunpack.c.l.b16 %v2893
  %v2914 = vunpack.c.l.b16 %v2894
  %v2915 = vunpack.c.l.b16 %v2895
  %v2916 = vunpack.c.l.b16 %v2896
  %v2917 = vpack.c.b16 %v2910, %v2909
  %v2918 = vpack.c.b16 %v2912, %v2911
  %v2919 = vpack.c.b16 %v2914, %v2913
  %v2920 = vpack.c.b16 %v2916, %v2915
  %v2926 = vsel %vm299, %v2888, 0
  %2928 = vmatpush.bf16.msra.mxu0 0
  %2929 = vmatpush.bf16.msra.mxu0 0
  %2930 = vmatpush.bf16.msra.mxu0 0
  %2931 = vmatpush.bf16.msra.mxu0 0
  %2932 = vmatpush.bf16.msra.mxu0 %v2920
  %2933 = vmatpush.bf16.msra.mxu0 %v2919
  %2934 = vmatpush.bf16.msra.mxu0 %v2918
  %2935 = vmatpush.bf16.msra.mxu0 %v2917
  %2936 = vmatmul.bf16.gmra.mxu0 %v2926
  %v2937 = vpop.f32.mrf.mxu0
  %v2938 = vadd.f32 %v2899, %v2937
  %v2939 = vpop.f32.mrf.mxu0
  %v2940 = vadd.f32 %v2899, %v2939
  %2941 = vdwg.mxu0
  %v2942 = vsub.f32 0.0, %v2938
  %v2943 = vsub.f32 0.0, %v2940
  %v2944 = vmin.f32 %v2942, 0.0
  %v2945 = vmin.f32 %v2943, 0.0
  %v2946 = vand.u32 2147483647, %v2942
  %v2947 = vand.u32 2147483647, %v2943
  %v2948 = vsub.f32 0.0, %v2946
  %v2949 = vsub.f32 0.0, %v2947
  %v2950 = vmul.f32 %v2948, 1.442695
  %v2951 = vpow.pop %v2950
  %v2952 = vmul.f32 %v2949, 1.442695
  %v2953 = vpow.pop %v2952
  %v2954 = vadd.f32 %v2951, 1.0
  %v2955 = vlog2.pop %v2954
  %v2956 = vmul.f32 %v2955, 0.6931472
  %v2957 = vmul.f32 -0.5, %v2951
  %v2958 = vadd.f32 %v2957, 1.0
  %v2959 = vmul.f32 %v2958, %v2951
  %v2960 = vand.u32 2147483647, %v2951
  %vm2961 = vcmp.lt.f32.partialorder %v2960, 0.0004427343
  %v2962 = vsel %vm2961, %v2959, %v2956
  %v2963 = vadd.f32 %v2953, 1.0
  %v2964 = vlog2.pop %v2963
  %v2965 = vmul.f32 %v2964, 0.6931472
  %v2966 = vmul.f32 -0.5, %v2953
  %v2967 = vadd.f32 %v2966, 1.0
  %v2968 = vmul.f32 %v2967, %v2953
  %v2969 = vand.u32 2147483647, %v2953
  %vm2970 = vcmp.lt.f32.partialorder %v2969, 0.0004427343
  %v2971 = vsel %vm2970, %v2968, %v2965
  %v2972 = vsub.f32 %v2944, %v2962
  %v2973 = vsub.f32 %v2945, %v2971
  %v2974 = vmin.f32 %v2938, 0.0
  %v2975 = vmin.f32 %v2940, 0.0
  %v2976 = vand.u32 2147483647, %v2938
  %v2977 = vand.u32 2147483647, %v2940
  %v2978 = vsub.f32 0.0, %v2976
  %v2979 = vsub.f32 0.0, %v2977
  %v2980 = vmul.f32 %v2978, 1.442695
  %v2981 = vpow.pop %v2980
  %v2982 = vmul.f32 %v2979, 1.442695
  %v2983 = vpow.pop %v2982
  %v2984 = vadd.f32 %v2981, 1.0
  %v2985 = vlog2.pop %v2984
  %v2986 = vmul.f32 %v2985, 0.6931472
  %v2987 = vmul.f32 -0.5, %v2981
  %v2988 = vadd.f32 %v2987, 1.0
  %v2989 = vmul.f32 %v2988, %v2981
  %v2990 = vand.u32 2147483647, %v2981
  %vm2991 = vcmp.lt.f32.partialorder %v2990, 0.0004427343
  %v2992 = vsel %vm2991, %v2989, %v2986
  %v2993 = vadd.f32 %v2983, 1.0
  %v2994 = vlog2.pop %v2993
  %v2995 = vmul.f32 %v2994, 0.6931472
  %v2996 = vmul.f32 -0.5, %v2983
  %v2997 = vadd.f32 %v2996, 1.0
  %v2998 = vmul.f32 %v2997, %v2983
  %v2999 = vand.u32 2147483647, %v2983
  %vm3000 = vcmp.lt.f32.partialorder %v2999, 0.0004427343
  %v3001 = vsel %vm3000, %v2998, %v2995
  %v3002 = vsub.f32 %v2974, %v2992
  %v3003 = vsub.f32 %v2975, %v3001
  %3006 = vrot.lane.b32.xlu0 %v2972, 127
  %v3007 = vpop.permute.xlu0 %3006
  %3008 = vrot.lane.b32.xlu0 %v2973, 127
  %v3009 = vpop.permute.xlu0 %3008
  %v3012 = vadd.f32 %v3002, %v3007
  %v3013 = vadd.f32 %v3003, %v3009
  %3016 = vrot.lane.b32.xlu0 %v3002, 127
  %v3017 = vpop.permute.xlu0 %3016
  %3018 = vrot.lane.b32.xlu0 %v3003, 127
  %v3019 = vpop.permute.xlu0 %3018
  %v3022 = vadd.f32 %v3002, %v3017
  %v3023 = vadd.f32 %v3003, %v3019
  %3026 = vrot.lane.b32.xlu0 %v3012, 1
  %v3027 = vpop.permute.xlu0 %3026
  %3028 = vrot.lane.b32.xlu0 %v3013, 1
  %v3029 = vpop.permute.xlu0 %3028
  %3034 = vrot.lane.b32.xlu0 %v3022, 2
  %v3035 = vpop.permute.xlu0 %3034
  %3036 = vrot.lane.b32.xlu0 %v3023, 2
  %v3037 = vpop.permute.xlu0 %3036
  %vm3040 = vcmask 7168
  %v3041 = vsel %vm3040, %v2972, %v3027
  %v3042 = vsel %vm3040, %v2973, %v3029
  %vm3043 = vcmask 15360
  %v3044 = vsel %vm3043, %v3041, %v3035
  %v3045 = vsel %vm3043, %v3042, %v3037
  %vm3046 = vcmask 23552
  %3047 = vst.msk [vmem:[%s16] sm:$0xff] %vm3046, %v3044
  %3048 = vst.msk [vmem:[%s16 + $0x8] sm:$0xff] %vm3046, %v3045
  // Predicated region
  $region66: #{tokenizer_forward.1} parent=0 // pred_check
    _
  $region67: #{tokenizer_forward.1} parent=0 // pred_check_branch
    %3050 = sbr.rel (0) target = $region69
  $region68: #{tokenizer_forward.1} parent=0 // pred_region
    _
  $region69: #{tokenizer_forward.1} parent=0 // pred_fallthru
    _
  // Predicated region
  $region70: #{tokenizer_forward.1} parent=0 // pred_check
    _
  $region71: #{tokenizer_forward.1} parent=0 // pred_check_branch
    %3052 = sbr.rel (0) target = $region73
  $region72: #{tokenizer_forward.1} parent=0 // pred_region
    _
  $region73: #{tokenizer_forward.1} parent=0 // pred_fallthru
    _

</llo_original>
